<compile_context>
chip_gen: v5e
topology: v5e:2x2
jax: 0.10.0
libtpu: 0.0.40
codegen_flags: <defaults>
</compile_context>

<pallas_src>
import jax
import jax.numpy as jnp
from jax import lax
from jax.experimental import pallas as pl
from jax.experimental.pallas import tpu as pltpu

ROWS1 = 904  # conv1 im2col rows: 30*30 = 900 valid rows padded to a multiple of 8


# ----------------------------------------------------------------------------
# Fused kernel: one batch element per grid step, everything VMEM-resident.
# Activation layout: rows = flattened spatial (row = h*W + w), lanes = channels
# (padded to 128).  conv weights: (9*Cin_pad, 128), row = (kh*3+kw)*Cin_pad + c.
# ----------------------------------------------------------------------------
def _tfconvnet_kernel(x_ref, w1_ref, b1_ref, w2_ref, b2_ref, w3_ref, b3_ref,
                      wfc1_ref, bfc1_ref, wfc2_ref, bfc2_ref, out_ref,
                      c1_ref, p1_ref, c2_ref, p2_ref):
    bf16, f32 = jnp.bfloat16, jnp.float32

    # ---- conv1 + ReLU: single K=27 MXU dot over the host-built im2col tile ----
    y1 = jnp.dot(x_ref[0].astype(bf16), w1_ref[...], preferred_element_type=f32)
    y1 = jnp.maximum(y1 + b1_ref[...], 0.0)            # (904, 128), rows = h*30+w (900 valid)

    # ---- maxpool1 2x2 stride 2 (30x30 -> 15x15), all in VMEM ----
    m = jnp.maximum(y1[0:903], y1[1:904])              # max over (r, r+1)
    m = jnp.maximum(m[0:872], m[30:902])               # ... and (r+30, r+31)
    c1_ref[...] = m                                    # 2x2 window max anchored at row r
    for ph in range(15):                               # keep even-even anchors: r = 60*ph + 2*pw
        p1_ref[pl.ds(15 * ph, 15), :] = c1_ref[pl.ds(60 * ph, 15, 2), :]

    # ---- conv2 + ReLU: in-kernel im2col (9 lane-concatenated slices), K=1152 ----
    xc2 = jnp.concatenate(
        [p1_ref[pl.ds(kh * 15 + kw, 193), :].astype(bf16)
         for kh in range(3) for kw in range(3)], axis=1)            # (193, 1152)
    y2 = jnp.dot(xc2, w2_ref[...], preferred_element_type=f32)
    y2 = jnp.maximum(y2 + b2_ref[...], 0.0)            # (193, 128), rows = h*15+w (13x13 valid)

    # ---- maxpool2 2x2 stride 2 (13x13 -> 6x6, floor mode) ----
    m = jnp.maximum(y2[0:192], y2[1:193])
    m = jnp.maximum(m[0:176], m[15:191])
    c2_ref[...] = m
    for ph in range(6):                                # anchors r = 30*ph + 2*pw
        p2_ref[pl.ds(6 * ph, 6), :] = c2_ref[pl.ds(30 * ph, 6, 2), :]

    # ---- conv3 + ReLU: K=1152 ----
    xc3 = jnp.concatenate(
        [p2_ref[pl.ds(kh * 6 + kw, 22), :].astype(bf16)
         for kh in range(3) for kw in range(3)], axis=1)            # (22, 1152)
    y3 = jnp.dot(xc3, w3_ref[...], preferred_element_type=f32)
    y3 = jnp.maximum(y3 + b3_ref[...], 0.0)            # (22, 128), valid rows h*6+w, h,w<4

    # ---- flatten (NHWC position order; fc1 rows pre-permuted at init) + FC head ----
    feat = jnp.concatenate(
        [y3[h * 6 + w:h * 6 + w + 1, 0:64] for h in range(4) for w in range(4)],
        axis=1)                                                     # (1, 1024)
    h1 = jnp.dot(feat, wfc1_ref[...], preferred_element_type=f32) + bfc1_ref[...]
    h1 = jnp.maximum(h1, 0.0)                                       # (1, 64)
    logits = jnp.dot(h1, wfc2_ref[...], preferred_element_type=f32) + bfc2_ref[...]
    out_ref[0] = logits.astype(out_ref.dtype)                       # (1, 10)


# ----------------------------------------------------------------------------
# Host-side prep (runs once / per call on tiny tensors).
# ----------------------------------------------------------------------------
def _conv1_im2col(x_nchw):
    """(N,3,32,32) NCHW -> (N, ROWS1, 27): row = h*30+w, col = (kh*3+kw)*3 + c."""
    n = x_nchw.shape[0]
    x = jnp.transpose(x_nchw, (0, 2, 3, 1))                        # NHWC
    cols = [x[:, kh:kh + 30, kw:kw + 30, :] for kh in range(3) for kw in range(3)]
    xc = jnp.concatenate(cols, axis=-1).reshape(n, 900, 27)
    return jnp.pad(xc, ((0, 0), (0, ROWS1 - 900), (0, 0)))


def prepare_params(p):
    """Repack PyTorch-layout params into the fused-kernel layout (done once)."""
    def conv_pack(w, b, cin_pad):
        cout, cin = w.shape[0], w.shape[1]
        wk = jnp.transpose(w, (2, 3, 1, 0))                        # (3,3,Cin,Cout)
        wk = jnp.pad(wk, ((0, 0), (0, 0), (0, cin_pad - cin), (0, 128 - cout)))
        wk = wk.reshape(9 * cin_pad, 128).astype(jnp.bfloat16)     # row = (kh*3+kw)*cin_pad + c
        bk = jnp.pad(b, (0, 128 - cout)).reshape(1, 128).astype(jnp.float32)
        return wk, bk

    w1, b1 = conv_pack(p["conv1_w"], p["conv1_b"], 3)
    w2, b2 = conv_pack(p["conv2_w"], p["conv2_b"], 128)
    w3, b3 = conv_pack(p["conv3_w"], p["conv3_b"], 128)
    # PyTorch flatten order is (c, h, w); kernel feature order is (p=h*4+w, c).
    wfc1 = p["fc1_w"].reshape(64, 16, 64).transpose(1, 0, 2).reshape(1024, 64)
    wfc1 = wfc1.astype(jnp.float32)
    bfc1 = p["fc1_b"].reshape(1, 64).astype(jnp.float32)
    wfc2 = p["fc2_w"].astype(jnp.float32)                          # (64, 10)
    bfc2 = p["fc2_b"].reshape(1, 10).astype(jnp.float32)
    return (w1, b1, w2, b2, w3, b3, wfc1, bfc1, wfc2, bfc2)


# ----------------------------------------------------------------------------
# Forward pass: single fused pallas_call.
# ----------------------------------------------------------------------------
def tfconvnet_forward(x_nchw, kparams):
    n = x_nchw.shape[0]
    xcol = _conv1_im2col(x_nchw)
    const = lambda b: (0, 0)
    out = pl.pallas_call(
        _tfconvnet_kernel,
        out_shape=jax.ShapeDtypeStruct((n, 1, 10), jnp.float32),
        grid=(n,),
        in_specs=[
            pl.BlockSpec((1, ROWS1, 27), lambda b: (b, 0, 0)),     # conv1 im2col tile
            pl.BlockSpec((27, 128), const),                        # w1
            pl.BlockSpec((1, 128), const),                         # b1
            pl.BlockSpec((1152, 128), const),                      # w2
            pl.BlockSpec((1, 128), const),                         # b2
            pl.BlockSpec((1152, 128), const),                      # w3
            pl.BlockSpec((1, 128), const),                         # b3
            pl.BlockSpec((1024, 64), const),                       # fc1 w (row-permuted)
            pl.BlockSpec((1, 64), const),                          # fc1 b
            pl.BlockSpec((64, 10), const),                         # fc2 w
            pl.BlockSpec((1, 10), const),                          # fc2 b
        ],
        out_specs=pl.BlockSpec((1, 1, 10), lambda b: (b, 0, 0)),
        scratch_shapes=[
            pltpu.VMEM((872, 128), jnp.float32),   # pool1 window maxima
            pltpu.VMEM((232, 128), jnp.float32),   # pooled1: 15x15 flat (width 15)
            pltpu.VMEM((176, 128), jnp.float32),   # pool2 window maxima
            pltpu.VMEM((40, 128), jnp.float32),    # pooled2: 6x6 flat (width 6)
        ],
        compiler_params=pltpu.CompilerParams(
            dimension_semantics=("parallel",)),    # megacore-shard batch on v7x
    )(xcol, *kparams)
    return out[:, 0, :]


# ----------------------------------------------------------------------------
# Pure-JAX reference (PyTorch semantics) + deterministic synthetic params.
# ----------------------------------------------------------------------------
def tfconvnet_reference(x, p):
    def conv(x, w, b):
        y = lax.conv_general_dilated(x, w, (1, 1), "VALID",
                                     dimension_numbers=("NCHW", "OIHW", "NCHW"))
        return jnp.maximum(y + b[None, :, None, None], 0.0)

    def pool(x):
        n, c, h, w = x.shape
        hp, wp = h // 2, w // 2
        return x[:, :, :hp * 2, :wp * 2].reshape(n, c, hp, 2, wp, 2).max(axis=(3, 5))

    a = pool(conv(x, p["conv1_w"], p["conv1_b"]))
    a = pool(conv(a, p["conv2_w"], p["conv2_b"]))
    a = conv(a, p["conv3_w"], p["conv3_b"])
    feat = a.reshape(a.shape[0], -1)                               # NCHW flatten -> (N, 1024)
    h = jnp.maximum(feat @ p["fc1_w"] + p["fc1_b"], 0.0)
    return h @ p["fc2_w"] + p["fc2_b"]


def init_params(key):
    ks = jax.random.split(key, 10)

    def conv(k, cin, cout):
        return jax.random.normal(k, (cout, cin, 3, 3), jnp.float32) / (9.0 * cin) ** 0.5

    def lin(k, fin, fout):
        return jax.random.normal(k, (fin, fout), jnp.float32) / fin ** 0.5

    def bias(k, c):
        return jax.random.normal(k, (c,), jnp.float32) * 0.01

    return {
        "conv1_w": conv(ks[0], 3, 32),  "conv1_b": bias(ks[1], 32),
        "conv2_w": conv(ks[2], 32, 64), "conv2_b": bias(ks[3], 64),
        "conv3_w": conv(ks[4], 64, 64), "conv3_b": bias(ks[5], 64),
        "fc1_w": lin(ks[6], 1024, 64),  "fc1_b": bias(ks[7], 64),
        "fc2_w": lin(ks[8], 64, 10),    "fc2_b": bias(ks[9], 10),
    }


if __name__ == "__main__":
    key = jax.random.PRNGKey(0)
    pkey, xkey = jax.random.split(key)
    params = init_params(pkey)
    # Module geometry requires 3x32x32 inputs (Linear(1024, 64)); small batch.
    x = jax.random.normal(xkey, (2, 3, 32, 32), jnp.float32)

    kparams = prepare_params(params)                 # one-time weight repack
    fwd = jax.jit(tfconvnet_forward)
    out = jax.block_until_ready(fwd(x, kparams))

    assert out.shape == (2, 10), out.shape
    assert bool(jnp.all(jnp.isfinite(out)))
    ref = tfconvnet_reference(x, params)             # f32 reference; kernel uses bf16 MXU ops
    assert bool(jnp.allclose(out, ref, rtol=1e-1, atol=1e-1)), \
        float(jnp.max(jnp.abs(out - ref)))
    print("KERNEL_OK")
</pallas_src>

<mosaic_0001>
module attributes {stable_mosaic.version = 11 : i64} {
  func.func @_tfconvnet_kernel(%arg0: i32, %arg1: memref<1x904x27xf32, #tpu.memory_space<vmem>>, %arg2: memref<27x128xbf16, #tpu.memory_space<vmem>>, %arg3: memref<1x128xf32, #tpu.memory_space<vmem>>, %arg4: memref<1152x128xbf16, #tpu.memory_space<vmem>>, %arg5: memref<1x128xf32, #tpu.memory_space<vmem>>, %arg6: memref<1152x128xbf16, #tpu.memory_space<vmem>>, %arg7: memref<1x128xf32, #tpu.memory_space<vmem>>, %arg8: memref<1024x64xf32, #tpu.memory_space<vmem>>, %arg9: memref<1x64xf32, #tpu.memory_space<vmem>>, %arg10: memref<64x10xf32, #tpu.memory_space<vmem>>, %arg11: memref<1x10xf32, #tpu.memory_space<vmem>>, %arg12: memref<1x1x10xf32, #tpu.memory_space<vmem>>, %arg13: memref<872x128xf32, #tpu.memory_space<vmem>>, %arg14: memref<232x128xf32, #tpu.memory_space<vmem>>, %arg15: memref<176x128xf32, #tpu.memory_space<vmem>>, %arg16: memref<40x128xf32, #tpu.memory_space<vmem>>) attributes {dimension_semantics = [#tpu.dimension_semantics<parallel>], iteration_bounds = array<i64: 2>, scalar_prefetch = 0 : i64, scratch_operands = 4 : i64, tpu.core_type = #tpu.core_type<tc>, window_params = [{transform_indices = @transform_0, window_bounds = array<i64: 1, 904, 27>}, {pipeline_mode = #tpu.pipeline_mode<synchronous>, transform_indices = @transform_1, window_bounds = array<i64: 27, 128>}, {pipeline_mode = #tpu.pipeline_mode<synchronous>, transform_indices = @transform_2, window_bounds = array<i64: 1, 128>}, {pipeline_mode = #tpu.pipeline_mode<synchronous>, transform_indices = @transform_3, window_bounds = array<i64: 1152, 128>}, {pipeline_mode = #tpu.pipeline_mode<synchronous>, transform_indices = @transform_4, window_bounds = array<i64: 1, 128>}, {pipeline_mode = #tpu.pipeline_mode<synchronous>, transform_indices = @transform_5, window_bounds = array<i64: 1152, 128>}, {pipeline_mode = #tpu.pipeline_mode<synchronous>, transform_indices = @transform_6, window_bounds = array<i64: 1, 128>}, {pipeline_mode = #tpu.pipeline_mode<synchronous>, transform_indices = @transform_7, window_bounds = array<i64: 1024, 64>}, {pipeline_mode = #tpu.pipeline_mode<synchronous>, transform_indices = @transform_8, window_bounds = array<i64: 1, 64>}, {pipeline_mode = #tpu.pipeline_mode<synchronous>, transform_indices = @transform_9, window_bounds = array<i64: 64, 10>}, {pipeline_mode = #tpu.pipeline_mode<synchronous>, transform_indices = @transform_10, window_bounds = array<i64: 1, 10>}, {transform_indices = @transform_11, window_bounds = array<i64: 1, 1, 10>}]} {
    %c0 = arith.constant 0 : index
    %c0_0 = arith.constant 0 : index
    %c0_1 = arith.constant 0 : index
    %0 = vector.load %arg1[%c0, %c0_0, %c0_1] : memref<1x904x27xf32, #tpu.memory_space<vmem>>, vector<1x904x27xf32>
    %1 = vector.shape_cast %0 : vector<1x904x27xf32> to vector<904x27xf32>
    %2 = arith.truncf %1 : vector<904x27xf32> to vector<904x27xbf16>
    %c0_2 = arith.constant 0 : index
    %c0_3 = arith.constant 0 : index
    %3 = vector.load %arg2[%c0_2, %c0_3] : memref<27x128xbf16, #tpu.memory_space<vmem>>, vector<27x128xbf16>
    %cst = arith.constant dense<0.000000e+00> : vector<904x128xf32>
    %4 = tpu.matmul %2, %3, %cst {dimension_numbers = #tpu.dot_dimension_numbers<[1], [0], [0], [1], [0, 0, 1, 1], [], []>} : vector<904x27xbf16>, vector<27x128xbf16>, vector<904x128xf32> -> vector<904x128xf32>
    %c0_4 = arith.constant 0 : index
    %c0_5 = arith.constant 0 : index
    %5 = vector.load %arg3[%c0_4, %c0_5] : memref<1x128xf32, #tpu.memory_space<vmem>>, vector<1x128xf32>
    %6 = vector.broadcast %5 : vector<1x128xf32> to vector<904x128xf32>
    %7 = arith.addf %4, %6 : vector<904x128xf32>
    %cst_6 = arith.constant 0.000000e+00 : f32
    %8 = vector.broadcast %cst_6 : f32 to vector<904x128xf32>
    %9 = arith.maximumf %7, %8 : vector<904x128xf32>
    %10 = vector.extract_strided_slice %9 {offsets = [0, 0], sizes = [903, 128], strides = [1, 1]} : vector<904x128xf32> to vector<903x128xf32>
    %11 = vector.extract_strided_slice %9 {offsets = [1, 0], sizes = [903, 128], strides = [1, 1]} : vector<904x128xf32> to vector<903x128xf32>
    %12 = arith.maximumf %10, %11 : vector<903x128xf32>
    %13 = vector.extract_strided_slice %12 {offsets = [0, 0], sizes = [872, 128], strides = [1, 1]} : vector<903x128xf32> to vector<872x128xf32>
    %14 = vector.extract_strided_slice %12 {offsets = [30, 0], sizes = [872, 128], strides = [1, 1]} : vector<903x128xf32> to vector<872x128xf32>
    %15 = arith.maximumf %13, %14 : vector<872x128xf32>
    %c0_7 = arith.constant 0 : index
    %c0_8 = arith.constant 0 : index
    %16 = vector.load %arg13[%c0_7, %c0_8] : memref<872x128xf32, #tpu.memory_space<vmem>>, vector<872x128xf32>
    tpu.vector_store %arg13[%c0_7, %c0_8], %15 {strides = array<i32>} : memref<872x128xf32, #tpu.memory_space<vmem>>, vector<872x128xf32>,
    %c0_9 = arith.constant 0 : index
    %c0_10 = arith.constant 0 : index
    %17 = tpu.strided_load %arg13[%c0_9, %c0_10] {strides = array<i32: 2, 1>} : memref<872x128xf32, #tpu.memory_space<vmem>>, vector<15x128xf32>
    %c0_11 = arith.constant 0 : index
    %c0_12 = arith.constant 0 : index
    %18 = vector.load %arg14[%c0_11, %c0_12] : memref<232x128xf32, #tpu.memory_space<vmem>>, vector<15x128xf32>
    tpu.vector_store %arg14[%c0_11, %c0_12], %17 {strides = array<i32>} : memref<232x128xf32, #tpu.memory_space<vmem>>, vector<15x128xf32>,
    %c60 = arith.constant 60 : index
    %c0_13 = arith.constant 0 : index
    %19 = tpu.strided_load %arg13[%c60, %c0_13] {strides = array<i32: 2, 1>} : memref<872x128xf32, #tpu.memory_space<vmem>>, vector<15x128xf32>
    %c15 = arith.constant 15 : index
    %c0_14 = arith.constant 0 : index
    %20 = vector.load %arg14[%c15, %c0_14] : memref<232x128xf32, #tpu.memory_space<vmem>>, vector<15x128xf32>
    tpu.vector_store %arg14[%c15, %c0_14], %19 {strides = array<i32>} : memref<232x128xf32, #tpu.memory_space<vmem>>, vector<15x128xf32>,
    %c120 = arith.constant 120 : index
    %c0_15 = arith.constant 0 : index
    %21 = tpu.strided_load %arg13[%c120, %c0_15] {strides = array<i32: 2, 1>} : memref<872x128xf32, #tpu.memory_space<vmem>>, vector<15x128xf32>
    %c30 = arith.constant 30 : index
    %c0_16 = arith.constant 0 : index
    %22 = vector.load %arg14[%c30, %c0_16] : memref<232x128xf32, #tpu.memory_space<vmem>>, vector<15x128xf32>
    tpu.vector_store %arg14[%c30, %c0_16], %21 {strides = array<i32>} : memref<232x128xf32, #tpu.memory_space<vmem>>, vector<15x128xf32>,
    %c180 = arith.constant 180 : index
    %c0_17 = arith.constant 0 : index
    %23 = tpu.strided_load %arg13[%c180, %c0_17] {strides = array<i32: 2, 1>} : memref<872x128xf32, #tpu.memory_space<vmem>>, vector<15x128xf32>
    %c45 = arith.constant 45 : index
    %c0_18 = arith.constant 0 : index
    %24 = vector.load %arg14[%c45, %c0_18] : memref<232x128xf32, #tpu.memory_space<vmem>>, vector<15x128xf32>
    tpu.vector_store %arg14[%c45, %c0_18], %23 {strides = array<i32>} : memref<232x128xf32, #tpu.memory_space<vmem>>, vector<15x128xf32>,
    %c240 = arith.constant 240 : index
    %c0_19 = arith.constant 0 : index
    %25 = tpu.strided_load %arg13[%c240, %c0_19] {strides = array<i32: 2, 1>} : memref<872x128xf32, #tpu.memory_space<vmem>>, vector<15x128xf32>
    %c60_20 = arith.constant 60 : index
    %c0_21 = arith.constant 0 : index
    %26 = vector.load %arg14[%c60_20, %c0_21] : memref<232x128xf32, #tpu.memory_space<vmem>>, vector<15x128xf32>
    tpu.vector_store %arg14[%c60_20, %c0_21], %25 {strides = array<i32>} : memref<232x128xf32, #tpu.memory_space<vmem>>, vector<15x128xf32>,
    %c300 = arith.constant 300 : index
    %c0_22 = arith.constant 0 : index
    %27 = tpu.strided_load %arg13[%c300, %c0_22] {strides = array<i32: 2, 1>} : memref<872x128xf32, #tpu.memory_space<vmem>>, vector<15x128xf32>
    %c75 = arith.constant 75 : index
    %c0_23 = arith.constant 0 : index
    %28 = vector.load %arg14[%c75, %c0_23] : memref<232x128xf32, #tpu.memory_space<vmem>>, vector<15x128xf32>
    tpu.vector_store %arg14[%c75, %c0_23], %27 {strides = array<i32>} : memref<232x128xf32, #tpu.memory_space<vmem>>, vector<15x128xf32>,
    %c360 = arith.constant 360 : index
    %c0_24 = arith.constant 0 : index
    %29 = tpu.strided_load %arg13[%c360, %c0_24] {strides = array<i32: 2, 1>} : memref<872x128xf32, #tpu.memory_space<vmem>>, vector<15x128xf32>
    %c90 = arith.constant 90 : index
    %c0_25 = arith.constant 0 : index
    %30 = vector.load %arg14[%c90, %c0_25] : memref<232x128xf32, #tpu.memory_space<vmem>>, vector<15x128xf32>
    tpu.vector_store %arg14[%c90, %c0_25], %29 {strides = array<i32>} : memref<232x128xf32, #tpu.memory_space<vmem>>, vector<15x128xf32>,
    %c420 = arith.constant 420 : index
    %c0_26 = arith.constant 0 : index
    %31 = tpu.strided_load %arg13[%c420, %c0_26] {strides = array<i32: 2, 1>} : memref<872x128xf32, #tpu.memory_space<vmem>>, vector<15x128xf32>
    %c105 = arith.constant 105 : index
    %c0_27 = arith.constant 0 : index
    %32 = vector.load %arg14[%c105, %c0_27] : memref<232x128xf32, #tpu.memory_space<vmem>>, vector<15x128xf32>
    tpu.vector_store %arg14[%c105, %c0_27], %31 {strides = array<i32>} : memref<232x128xf32, #tpu.memory_space<vmem>>, vector<15x128xf32>,
    %c480 = arith.constant 480 : index
    %c0_28 = arith.constant 0 : index
    %33 = tpu.strided_load %arg13[%c480, %c0_28] {strides = array<i32: 2, 1>} : memref<872x128xf32, #tpu.memory_space<vmem>>, vector<15x128xf32>
    %c120_29 = arith.constant 120 : index
    %c0_30 = arith.constant 0 : index
    %34 = vector.load %arg14[%c120_29, %c0_30] : memref<232x128xf32, #tpu.memory_space<vmem>>, vector<15x128xf32>
    tpu.vector_store %arg14[%c120_29, %c0_30], %33 {strides = array<i32>} : memref<232x128xf32, #tpu.memory_space<vmem>>, vector<15x128xf32>,
    %c540 = arith.constant 540 : index
    %c0_31 = arith.constant 0 : index
    %35 = tpu.strided_load %arg13[%c540, %c0_31] {strides = array<i32: 2, 1>} : memref<872x128xf32, #tpu.memory_space<vmem>>, vector<15x128xf32>
    %c135 = arith.constant 135 : index
    %c0_32 = arith.constant 0 : index
    %36 = vector.load %arg14[%c135, %c0_32] : memref<232x128xf32, #tpu.memory_space<vmem>>, vector<15x128xf32>
    tpu.vector_store %arg14[%c135, %c0_32], %35 {strides = array<i32>} : memref<232x128xf32, #tpu.memory_space<vmem>>, vector<15x128xf32>,
    %c600 = arith.constant 600 : index
    %c0_33 = arith.constant 0 : index
    %37 = tpu.strided_load %arg13[%c600, %c0_33] {strides = array<i32: 2, 1>} : memref<872x128xf32, #tpu.memory_space<vmem>>, vector<15x128xf32>
    %c150 = arith.constant 150 : index
    %c0_34 = arith.constant 0 : index
    %38 = vector.load %arg14[%c150, %c0_34] : memref<232x128xf32, #tpu.memory_space<vmem>>, vector<15x128xf32>
    tpu.vector_store %arg14[%c150, %c0_34], %37 {strides = array<i32>} : memref<232x128xf32, #tpu.memory_space<vmem>>, vector<15x128xf32>,
    %c660 = arith.constant 660 : index
    %c0_35 = arith.constant 0 : index
    %39 = tpu.strided_load %arg13[%c660, %c0_35] {strides = array<i32: 2, 1>} : memref<872x128xf32, #tpu.memory_space<vmem>>, vector<15x128xf32>
    %c165 = arith.constant 165 : index
    %c0_36 = arith.constant 0 : index
    %40 = vector.load %arg14[%c165, %c0_36] : memref<232x128xf32, #tpu.memory_space<vmem>>, vector<15x128xf32>
    tpu.vector_store %arg14[%c165, %c0_36], %39 {strides = array<i32>} : memref<232x128xf32, #tpu.memory_space<vmem>>, vector<15x128xf32>,
    %c720 = arith.constant 720 : index
    %c0_37 = arith.constant 0 : index
    %41 = tpu.strided_load %arg13[%c720, %c0_37] {strides = array<i32: 2, 1>} : memref<872x128xf32, #tpu.memory_space<vmem>>, vector<15x128xf32>
    %c180_38 = arith.constant 180 : index
    %c0_39 = arith.constant 0 : index
    %42 = vector.load %arg14[%c180_38, %c0_39] : memref<232x128xf32, #tpu.memory_space<vmem>>, vector<15x128xf32>
    tpu.vector_store %arg14[%c180_38, %c0_39], %41 {strides = array<i32>} : memref<232x128xf32, #tpu.memory_space<vmem>>, vector<15x128xf32>,
    %c780 = arith.constant 780 : index
    %c0_40 = arith.constant 0 : index
    %43 = tpu.strided_load %arg13[%c780, %c0_40] {strides = array<i32: 2, 1>} : memref<872x128xf32, #tpu.memory_space<vmem>>, vector<15x128xf32>
    %c195 = arith.constant 195 : index
    %c0_41 = arith.constant 0 : index
    %44 = vector.load %arg14[%c195, %c0_41] : memref<232x128xf32, #tpu.memory_space<vmem>>, vector<15x128xf32>
    tpu.vector_store %arg14[%c195, %c0_41], %43 {strides = array<i32>} : memref<232x128xf32, #tpu.memory_space<vmem>>, vector<15x128xf32>,
    %c840 = arith.constant 840 : index
    %c0_42 = arith.constant 0 : index
    %45 = tpu.strided_load %arg13[%c840, %c0_42] {strides = array<i32: 2, 1>} : memref<872x128xf32, #tpu.memory_space<vmem>>, vector<15x128xf32>
    %c210 = arith.constant 210 : index
    %c0_43 = arith.constant 0 : index
    %46 = vector.load %arg14[%c210, %c0_43] : memref<232x128xf32, #tpu.memory_space<vmem>>, vector<15x128xf32>
    tpu.vector_store %arg14[%c210, %c0_43], %45 {strides = array<i32>} : memref<232x128xf32, #tpu.memory_space<vmem>>, vector<15x128xf32>,
    %c0_44 = arith.constant 0 : index
    %c0_45 = arith.constant 0 : index
    %47 = vector.load %arg14[%c0_44, %c0_45] : memref<232x128xf32, #tpu.memory_space<vmem>>, vector<193x128xf32>
    %48 = arith.truncf %47 : vector<193x128xf32> to vector<193x128xbf16>
    %c1 = arith.constant 1 : index
    %c0_46 = arith.constant 0 : index
    %49 = vector.load %arg14[%c1, %c0_46] : memref<232x128xf32, #tpu.memory_space<vmem>>, vector<193x128xf32>
    %50 = arith.truncf %49 : vector<193x128xf32> to vector<193x128xbf16>
    %c2 = arith.constant 2 : index
    %c0_47 = arith.constant 0 : index
    %51 = vector.load %arg14[%c2, %c0_47] : memref<232x128xf32, #tpu.memory_space<vmem>>, vector<193x128xf32>
    %52 = arith.truncf %51 : vector<193x128xf32> to vector<193x128xbf16>
    %c15_48 = arith.constant 15 : index
    %c0_49 = arith.constant 0 : index
    %53 = vector.load %arg14[%c15_48, %c0_49] : memref<232x128xf32, #tpu.memory_space<vmem>>, vector<193x128xf32>
    %54 = arith.truncf %53 : vector<193x128xf32> to vector<193x128xbf16>
    %c16 = arith.constant 16 : index
    %c0_50 = arith.constant 0 : index
    %55 = vector.load %arg14[%c16, %c0_50] : memref<232x128xf32, #tpu.memory_space<vmem>>, vector<193x128xf32>
    %56 = arith.truncf %55 : vector<193x128xf32> to vector<193x128xbf16>
    %c17 = arith.constant 17 : index
    %c0_51 = arith.constant 0 : index
    %57 = vector.load %arg14[%c17, %c0_51] : memref<232x128xf32, #tpu.memory_space<vmem>>, vector<193x128xf32>
    %58 = arith.truncf %57 : vector<193x128xf32> to vector<193x128xbf16>
    %c30_52 = arith.constant 30 : index
    %c0_53 = arith.constant 0 : index
    %59 = vector.load %arg14[%c30_52, %c0_53] : memref<232x128xf32, #tpu.memory_space<vmem>>, vector<193x128xf32>
    %60 = arith.truncf %59 : vector<193x128xf32> to vector<193x128xbf16>
    %c31 = arith.constant 31 : index
    %c0_54 = arith.constant 0 : index
    %61 = vector.load %arg14[%c31, %c0_54] : memref<232x128xf32, #tpu.memory_space<vmem>>, vector<193x128xf32>
    %62 = arith.truncf %61 : vector<193x128xf32> to vector<193x128xbf16>
    %c32 = arith.constant 32 : index
    %c0_55 = arith.constant 0 : index
    %63 = vector.load %arg14[%c32, %c0_55] : memref<232x128xf32, #tpu.memory_space<vmem>>, vector<193x128xf32>
    %64 = arith.truncf %63 : vector<193x128xf32> to vector<193x128xbf16>
    %65 = tpu.concatenate %48, %50, %52, %54, %56, %58, %60, %62, %64 in 1 : vector<193x128xbf16>, vector<193x128xbf16>, vector<193x128xbf16>, vector<193x128xbf16>, vector<193x128xbf16>, vector<193x128xbf16>, vector<193x128xbf16>, vector<193x128xbf16>, vector<193x128xbf16> -> vector<193x1152xbf16>
    %c0_56 = arith.constant 0 : index
    %c0_57 = arith.constant 0 : index
    %66 = vector.load %arg4[%c0_56, %c0_57] : memref<1152x128xbf16, #tpu.memory_space<vmem>>, vector<1152x128xbf16>
    %cst_58 = arith.constant dense<0.000000e+00> : vector<193x128xf32>
    %67 = tpu.matmul %65, %66, %cst_58 {dimension_numbers = #tpu.dot_dimension_numbers<[1], [0], [0], [1], [0, 0, 1, 1], [], []>} : vector<193x1152xbf16>, vector<1152x128xbf16>, vector<193x128xf32> -> vector<193x128xf32>
    %c0_59 = arith.constant 0 : index
    %c0_60 = arith.constant 0 : index
    %68 = vector.load %arg5[%c0_59, %c0_60] : memref<1x128xf32, #tpu.memory_space<vmem>>, vector<1x128xf32>
    %69 = vector.broadcast %68 : vector<1x128xf32> to vector<193x128xf32>
    %70 = arith.addf %67, %69 : vector<193x128xf32>
    %cst_61 = arith.constant 0.000000e+00 : f32
    %71 = vector.broadcast %cst_61 : f32 to vector<193x128xf32>
    %72 = arith.maximumf %70, %71 : vector<193x128xf32>
    %73 = vector.extract_strided_slice %72 {offsets = [0, 0], sizes = [192, 128], strides = [1, 1]} : vector<193x128xf32> to vector<192x128xf32>
    %74 = vector.extract_strided_slice %72 {offsets = [1, 0], sizes = [192, 128], strides = [1, 1]} : vector<193x128xf32> to vector<192x128xf32>
    %75 = arith.maximumf %73, %74 : vector<192x128xf32>
    %76 = vector.extract_strided_slice %75 {offsets = [0, 0], sizes = [176, 128], strides = [1, 1]} : vector<192x128xf32> to vector<176x128xf32>
    %77 = vector.extract_strided_slice %75 {offsets = [15, 0], sizes = [176, 128], strides = [1, 1]} : vector<192x128xf32> to vector<176x128xf32>
    %78 = arith.maximumf %76, %77 : vector<176x128xf32>
    %c0_62 = arith.constant 0 : index
    %c0_63 = arith.constant 0 : index
    %79 = vector.load %arg15[%c0_62, %c0_63] : memref<176x128xf32, #tpu.memory_space<vmem>>, vector<176x128xf32>
    tpu.vector_store %arg15[%c0_62, %c0_63], %78 {strides = array<i32>} : memref<176x128xf32, #tpu.memory_space<vmem>>, vector<176x128xf32>,
    %c0_64 = arith.constant 0 : index
    %c0_65 = arith.constant 0 : index
    %80 = tpu.strided_load %arg15[%c0_64, %c0_65] {strides = array<i32: 2, 1>} : memref<176x128xf32, #tpu.memory_space<vmem>>, vector<6x128xf32>
    %c0_66 = arith.constant 0 : index
    %c0_67 = arith.constant 0 : index
    %81 = vector.load %arg16[%c0_66, %c0_67] : memref<40x128xf32, #tpu.memory_space<vmem>>, vector<6x128xf32>
    tpu.vector_store %arg16[%c0_66, %c0_67], %80 {strides = array<i32>} : memref<40x128xf32, #tpu.memory_space<vmem>>, vector<6x128xf32>,
    %c30_68 = arith.constant 30 : index
    %c0_69 = arith.constant 0 : index
    %82 = tpu.strided_load %arg15[%c30_68, %c0_69] {strides = array<i32: 2, 1>} : memref<176x128xf32, #tpu.memory_space<vmem>>, vector<6x128xf32>
    %c6 = arith.constant 6 : index
    %c0_70 = arith.constant 0 : index
    %83 = vector.load %arg16[%c6, %c0_70] : memref<40x128xf32, #tpu.memory_space<vmem>>, vector<6x128xf32>
    tpu.vector_store %arg16[%c6, %c0_70], %82 {strides = array<i32>} : memref<40x128xf32, #tpu.memory_space<vmem>>, vector<6x128xf32>,
    %c60_71 = arith.constant 60 : index
    %c0_72 = arith.constant 0 : index
    %84 = tpu.strided_load %arg15[%c60_71, %c0_72] {strides = array<i32: 2, 1>} : memref<176x128xf32, #tpu.memory_space<vmem>>, vector<6x128xf32>
    %c12 = arith.constant 12 : index
    %c0_73 = arith.constant 0 : index
    %85 = vector.load %arg16[%c12, %c0_73] : memref<40x128xf32, #tpu.memory_space<vmem>>, vector<6x128xf32>
    tpu.vector_store %arg16[%c12, %c0_73], %84 {strides = array<i32>} : memref<40x128xf32, #tpu.memory_space<vmem>>, vector<6x128xf32>,
    %c90_74 = arith.constant 90 : index
    %c0_75 = arith.constant 0 : index
    %86 = tpu.strided_load %arg15[%c90_74, %c0_75] {strides = array<i32: 2, 1>} : memref<176x128xf32, #tpu.memory_space<vmem>>, vector<6x128xf32>
    %c18 = arith.constant 18 : index
    %c0_76 = arith.constant 0 : index
    %87 = vector.load %arg16[%c18, %c0_76] : memref<40x128xf32, #tpu.memory_space<vmem>>, vector<6x128xf32>
    tpu.vector_store %arg16[%c18, %c0_76], %86 {strides = array<i32>} : memref<40x128xf32, #tpu.memory_space<vmem>>, vector<6x128xf32>,
    %c120_77 = arith.constant 120 : index
    %c0_78 = arith.constant 0 : index
    %88 = tpu.strided_load %arg15[%c120_77, %c0_78] {strides = array<i32: 2, 1>} : memref<176x128xf32, #tpu.memory_space<vmem>>, vector<6x128xf32>
    %c24 = arith.constant 24 : index
    %c0_79 = arith.constant 0 : index
    %89 = vector.load %arg16[%c24, %c0_79] : memref<40x128xf32, #tpu.memory_space<vmem>>, vector<6x128xf32>
    tpu.vector_store %arg16[%c24, %c0_79], %88 {strides = array<i32>} : memref<40x128xf32, #tpu.memory_space<vmem>>, vector<6x128xf32>,
    %c150_80 = arith.constant 150 : index
    %c0_81 = arith.constant 0 : index
    %90 = tpu.strided_load %arg15[%c150_80, %c0_81] {strides = array<i32: 2, 1>} : memref<176x128xf32, #tpu.memory_space<vmem>>, vector<6x128xf32>
    %c30_82 = arith.constant 30 : index
    %c0_83 = arith.constant 0 : index
    %91 = vector.load %arg16[%c30_82, %c0_83] : memref<40x128xf32, #tpu.memory_space<vmem>>, vector<6x128xf32>
    tpu.vector_store %arg16[%c30_82, %c0_83], %90 {strides = array<i32>} : memref<40x128xf32, #tpu.memory_space<vmem>>, vector<6x128xf32>,
    %c0_84 = arith.constant 0 : index
    %c0_85 = arith.constant 0 : index
    %92 = vector.load %arg16[%c0_84, %c0_85] : memref<40x128xf32, #tpu.memory_space<vmem>>, vector<22x128xf32>
    %93 = arith.truncf %92 : vector<22x128xf32> to vector<22x128xbf16>
    %c1_86 = arith.constant 1 : index
    %c0_87 = arith.constant 0 : index
    %94 = vector.load %arg16[%c1_86, %c0_87] : memref<40x128xf32, #tpu.memory_space<vmem>>, vector<22x128xf32>
    %95 = arith.truncf %94 : vector<22x128xf32> to vector<22x128xbf16>
    %c2_88 = arith.constant 2 : index
    %c0_89 = arith.constant 0 : index
    %96 = vector.load %arg16[%c2_88, %c0_89] : memref<40x128xf32, #tpu.memory_space<vmem>>, vector<22x128xf32>
    %97 = arith.truncf %96 : vector<22x128xf32> to vector<22x128xbf16>
    %c6_90 = arith.constant 6 : index
    %c0_91 = arith.constant 0 : index
    %98 = vector.load %arg16[%c6_90, %c0_91] : memref<40x128xf32, #tpu.memory_space<vmem>>, vector<22x128xf32>
    %99 = arith.truncf %98 : vector<22x128xf32> to vector<22x128xbf16>
    %c7 = arith.constant 7 : index
    %c0_92 = arith.constant 0 : index
    %100 = vector.load %arg16[%c7, %c0_92] : memref<40x128xf32, #tpu.memory_space<vmem>>, vector<22x128xf32>
    %101 = arith.truncf %100 : vector<22x128xf32> to vector<22x128xbf16>
    %c8 = arith.constant 8 : index
    %c0_93 = arith.constant 0 : index
    %102 = vector.load %arg16[%c8, %c0_93] : memref<40x128xf32, #tpu.memory_space<vmem>>, vector<22x128xf32>
    %103 = arith.truncf %102 : vector<22x128xf32> to vector<22x128xbf16>
    %c12_94 = arith.constant 12 : index
    %c0_95 = arith.constant 0 : index
    %104 = vector.load %arg16[%c12_94, %c0_95] : memref<40x128xf32, #tpu.memory_space<vmem>>, vector<22x128xf32>
    %105 = arith.truncf %104 : vector<22x128xf32> to vector<22x128xbf16>
    %c13 = arith.constant 13 : index
    %c0_96 = arith.constant 0 : index
    %106 = vector.load %arg16[%c13, %c0_96] : memref<40x128xf32, #tpu.memory_space<vmem>>, vector<22x128xf32>
    %107 = arith.truncf %106 : vector<22x128xf32> to vector<22x128xbf16>
    %c14 = arith.constant 14 : index
    %c0_97 = arith.constant 0 : index
    %108 = vector.load %arg16[%c14, %c0_97] : memref<40x128xf32, #tpu.memory_space<vmem>>, vector<22x128xf32>
    %109 = arith.truncf %108 : vector<22x128xf32> to vector<22x128xbf16>
    %110 = tpu.concatenate %93, %95, %97, %99, %101, %103, %105, %107, %109 in 1 : vector<22x128xbf16>, vector<22x128xbf16>, vector<22x128xbf16>, vector<22x128xbf16>, vector<22x128xbf16>, vector<22x128xbf16>, vector<22x128xbf16>, vector<22x128xbf16>, vector<22x128xbf16> -> vector<22x1152xbf16>
    %c0_98 = arith.constant 0 : index
    %c0_99 = arith.constant 0 : index
    %111 = vector.load %arg6[%c0_98, %c0_99] : memref<1152x128xbf16, #tpu.memory_space<vmem>>, vector<1152x128xbf16>
    %cst_100 = arith.constant dense<0.000000e+00> : vector<22x128xf32>
    %112 = tpu.matmul %110, %111, %cst_100 {dimension_numbers = #tpu.dot_dimension_numbers<[1], [0], [0], [1], [0, 0, 1, 1], [], []>} : vector<22x1152xbf16>, vector<1152x128xbf16>, vector<22x128xf32> -> vector<22x128xf32>
    %c0_101 = arith.constant 0 : index
    %c0_102 = arith.constant 0 : index
    %113 = vector.load %arg7[%c0_101, %c0_102] : memref<1x128xf32, #tpu.memory_space<vmem>>, vector<1x128xf32>
    %114 = vector.broadcast %113 : vector<1x128xf32> to vector<22x128xf32>
    %115 = arith.addf %112, %114 : vector<22x128xf32>
    %cst_103 = arith.constant 0.000000e+00 : f32
    %116 = vector.broadcast %cst_103 : f32 to vector<22x128xf32>
    %117 = arith.maximumf %115, %116 : vector<22x128xf32>
    %118 = vector.extract_strided_slice %117 {offsets = [0, 0], sizes = [1, 64], strides = [1, 1]} : vector<22x128xf32> to vector<1x64xf32>
    %119 = vector.extract_strided_slice %117 {offsets = [1, 0], sizes = [1, 64], strides = [1, 1]} : vector<22x128xf32> to vector<1x64xf32>
    %120 = vector.extract_strided_slice %117 {offsets = [2, 0], sizes = [1, 64], strides = [1, 1]} : vector<22x128xf32> to vector<1x64xf32>
    %121 = vector.extract_strided_slice %117 {offsets = [3, 0], sizes = [1, 64], strides = [1, 1]} : vector<22x128xf32> to vector<1x64xf32>
    %122 = vector.extract_strided_slice %117 {offsets = [6, 0], sizes = [1, 64], strides = [1, 1]} : vector<22x128xf32> to vector<1x64xf32>
    %123 = vector.extract_strided_slice %117 {offsets = [7, 0], sizes = [1, 64], strides = [1, 1]} : vector<22x128xf32> to vector<1x64xf32>
    %124 = vector.extract_strided_slice %117 {offsets = [8, 0], sizes = [1, 64], strides = [1, 1]} : vector<22x128xf32> to vector<1x64xf32>
    %125 = vector.extract_strided_slice %117 {offsets = [9, 0], sizes = [1, 64], strides = [1, 1]} : vector<22x128xf32> to vector<1x64xf32>
    %126 = vector.extract_strided_slice %117 {offsets = [12, 0], sizes = [1, 64], strides = [1, 1]} : vector<22x128xf32> to vector<1x64xf32>
    %127 = vector.extract_strided_slice %117 {offsets = [13, 0], sizes = [1, 64], strides = [1, 1]} : vector<22x128xf32> to vector<1x64xf32>
    %128 = vector.extract_strided_slice %117 {offsets = [14, 0], sizes = [1, 64], strides = [1, 1]} : vector<22x128xf32> to vector<1x64xf32>
    %129 = vector.extract_strided_slice %117 {offsets = [15, 0], sizes = [1, 64], strides = [1, 1]} : vector<22x128xf32> to vector<1x64xf32>
    %130 = vector.extract_strided_slice %117 {offsets = [18, 0], sizes = [1, 64], strides = [1, 1]} : vector<22x128xf32> to vector<1x64xf32>
    %131 = vector.extract_strided_slice %117 {offsets = [19, 0], sizes = [1, 64], strides = [1, 1]} : vector<22x128xf32> to vector<1x64xf32>
    %132 = vector.extract_strided_slice %117 {offsets = [20, 0], sizes = [1, 64], strides = [1, 1]} : vector<22x128xf32> to vector<1x64xf32>
    %133 = vector.extract_strided_slice %117 {offsets = [21, 0], sizes = [1, 64], strides = [1, 1]} : vector<22x128xf32> to vector<1x64xf32>
    %134 = tpu.concatenate %118, %119, %120, %121, %122, %123, %124, %125, %126, %127, %128, %129, %130, %131, %132, %133 in 1 : vector<1x64xf32>, vector<1x64xf32>, vector<1x64xf32>, vector<1x64xf32>, vector<1x64xf32>, vector<1x64xf32>, vector<1x64xf32>, vector<1x64xf32>, vector<1x64xf32>, vector<1x64xf32>, vector<1x64xf32>, vector<1x64xf32>, vector<1x64xf32>, vector<1x64xf32>, vector<1x64xf32>, vector<1x64xf32> -> vector<1x1024xf32>
    %c0_104 = arith.constant 0 : index
    %c0_105 = arith.constant 0 : index
    %135 = vector.load %arg8[%c0_104, %c0_105] : memref<1024x64xf32, #tpu.memory_space<vmem>>, vector<1024x64xf32>
    %cst_106 = arith.constant dense<0.000000e+00> : vector<1x64xf32>
    %136 = tpu.matmul %134, %135, %cst_106 {dimension_numbers = #tpu.dot_dimension_numbers<[1], [0], [0], [1], [0, 0, 1, 1], [], []>} : vector<1x1024xf32>, vector<1024x64xf32>, vector<1x64xf32> -> vector<1x64xf32>
    %c0_107 = arith.constant 0 : index
    %c0_108 = arith.constant 0 : index
    %137 = vector.load %arg9[%c0_107, %c0_108] : memref<1x64xf32, #tpu.memory_space<vmem>>, vector<1x64xf32>
    %138 = arith.addf %136, %137 : vector<1x64xf32>
    %cst_109 = arith.constant 0.000000e+00 : f32
    %139 = vector.broadcast %cst_109 : f32 to vector<1x64xf32>
    %140 = arith.maximumf %138, %139 : vector<1x64xf32>
    %c0_110 = arith.constant 0 : index
    %c0_111 = arith.constant 0 : index
    %141 = vector.load %arg10[%c0_110, %c0_111] : memref<64x10xf32, #tpu.memory_space<vmem>>, vector<64x10xf32>
    %cst_112 = arith.constant dense<0.000000e+00> : vector<1x10xf32>
    %142 = tpu.matmul %140, %141, %cst_112 {dimension_numbers = #tpu.dot_dimension_numbers<[1], [0], [0], [1], [0, 0, 1, 1], [], []>} : vector<1x64xf32>, vector<64x10xf32>, vector<1x10xf32> -> vector<1x10xf32>
    %c0_113 = arith.constant 0 : index
    %c0_114 = arith.constant 0 : index
    %143 = vector.load %arg11[%c0_113, %c0_114] : memref<1x10xf32, #tpu.memory_space<vmem>>, vector<1x10xf32>
    %144 = arith.addf %142, %143 : vector<1x10xf32>
    %c0_115 = arith.constant 0 : index
    %c0_116 = arith.constant 0 : index
    %c0_117 = arith.constant 0 : index
    %145 = vector.load %arg12[%c0_115, %c0_116, %c0_117] : memref<1x1x10xf32, #tpu.memory_space<vmem>>, vector<1x1x10xf32>
    %146 = vector.shape_cast %145 : vector<1x1x10xf32> to vector<1x10xf32>
    %147 = vector.shape_cast %144 : vector<1x10xf32> to vector<1x1x10xf32>
    tpu.vector_store %arg12[%c0_115, %c0_116, %c0_117], %147 {strides = array<i32>} : memref<1x1x10xf32, #tpu.memory_space<vmem>>, vector<1x1x10xf32>,
    return
  }
  func.func @transform_0(%arg0: i32) -> (i32, i32, i32) {
    %c0_i32 = arith.constant 0 : i32
    %c0_i32_0 = arith.constant 0 : i32
    %c0_i32_1 = arith.constant 0 : i32
    return %arg0, %c0_i32, %c0_i32_0 : i32, i32, i32
  }
  func.func @transform_1(%arg0: i32) -> (i32, i32) {
    %c0_i32 = arith.constant 0 : i32
    %c0_i32_0 = arith.constant 0 : i32
    %c0_i32_1 = arith.constant 0 : i32
    return %c0_i32, %c0_i32_0 : i32, i32
  }
  func.func @transform_2(%arg0: i32) -> (i32, i32) {
    %c0_i32 = arith.constant 0 : i32
    %c0_i32_0 = arith.constant 0 : i32
    %c0_i32_1 = arith.constant 0 : i32
    return %c0_i32, %c0_i32_0 : i32, i32
  }
  func.func @transform_3(%arg0: i32) -> (i32, i32) {
    %c0_i32 = arith.constant 0 : i32
    %c0_i32_0 = arith.constant 0 : i32
    %c0_i32_1 = arith.constant 0 : i32
    return %c0_i32, %c0_i32_0 : i32, i32
  }
  func.func @transform_4(%arg0: i32) -> (i32, i32) {
    %c0_i32 = arith.constant 0 : i32
    %c0_i32_0 = arith.constant 0 : i32
    %c0_i32_1 = arith.constant 0 : i32
    return %c0_i32, %c0_i32_0 : i32, i32
  }
  func.func @transform_5(%arg0: i32) -> (i32, i32) {
    %c0_i32 = arith.constant 0 : i32
    %c0_i32_0 = arith.constant 0 : i32
    %c0_i32_1 = arith.constant 0 : i32
    return %c0_i32, %c0_i32_0 : i32, i32
  }
  func.func @transform_6(%arg0: i32) -> (i32, i32) {
    %c0_i32 = arith.constant 0 : i32
    %c0_i32_0 = arith.constant 0 : i32
    %c0_i32_1 = arith.constant 0 : i32
    return %c0_i32, %c0_i32_0 : i32, i32
  }
  func.func @transform_7(%arg0: i32) -> (i32, i32) {
    %c0_i32 = arith.constant 0 : i32
    %c0_i32_0 = arith.constant 0 : i32
    %c0_i32_1 = arith.constant 0 : i32
    return %c0_i32, %c0_i32_0 : i32, i32
  }
  func.func @transform_8(%arg0: i32) -> (i32, i32) {
    %c0_i32 = arith.constant 0 : i32
    %c0_i32_0 = arith.constant 0 : i32
    %c0_i32_1 = arith.constant 0 : i32
    return %c0_i32, %c0_i32_0 : i32, i32
  }
  func.func @transform_9(%arg0: i32) -> (i32, i32) {
    %c0_i32 = arith.constant 0 : i32
    %c0_i32_0 = arith.constant 0 : i32
    %c0_i32_1 = arith.constant 0 : i32
    return %c0_i32, %c0_i32_0 : i32, i32
  }
  func.func @transform_10(%arg0: i32) -> (i32, i32) {
    %c0_i32 = arith.constant 0 : i32
    %c0_i32_0 = arith.constant 0 : i32
    %c0_i32_1 = arith.constant 0 : i32
    return %c0_i32, %c0_i32_0 : i32, i32
  }
  func.func @transform_11(%arg0: i32) -> (i32, i32, i32) {
    %c0_i32 = arith.constant 0 : i32
    %c0_i32_0 = arith.constant 0 : i32
    %c0_i32_1 = arith.constant 0 : i32
    return %arg0, %c0_i32, %c0_i32_0 : i32, i32, i32
  }
}

</mosaic_0001>

<llo_original>
// kernel: tfconvnet_forward.1
$region0: #{tfconvnet_forward.1}
  #allocation0 [shape = 'u32[]', space=smem, size = 0x4, offset = 0x4, fixed_abs, tag = 'smem constant byte address 0x4 - core index']
  #allocation1 [shape = 'u32[72,128]{1,0:T(1,128)}', space=vmem, size = 0x9000, scoped, tag = 'internal scratch']
  #allocation2 [shape = 'f32[872,128]{1,0:T(8,128)}', space=vmem, size = 0x6d000, scoped, tag = 'scratch operand']
  #allocation3 [shape = 'f32[232,128]{1,0:T(8,128)}', space=vmem, size = 0x1d000, scoped, tag = 'scratch operand']
  #allocation4 [shape = 'f32[176,128]{1,0:T(8,128)}', space=vmem, size = 0x16000, scoped, tag = 'scratch operand']
  #allocation5 [shape = 'f32[40,128]{1,0:T(8,128)}', space=vmem, size = 0x5000, scoped, tag = 'scratch operand']
  %s0 = inlined_call_operand.vmem [shape: f32[2,904,27], index: 0, kind: input, shape index: {}]
  %s1 = inlined_call_operand.vmem [shape: bf16[27,128], index: 1, kind: input, shape index: {}]
  %s2 = inlined_call_operand.vmem [shape: f32[1,128], index: 2, kind: input, shape index: {}]
  %s3 = inlined_call_operand.vmem [shape: bf16[1152,128], index: 3, kind: input, shape index: {}]
  %s4 = inlined_call_operand.vmem [shape: f32[1,128], index: 4, kind: input, shape index: {}]
  %s5 = inlined_call_operand.vmem [shape: bf16[1152,128], index: 5, kind: input, shape index: {}]
  %s6 = inlined_call_operand.vmem [shape: f32[1,128], index: 6, kind: input, shape index: {}]
  %s7 = inlined_call_operand.vmem [shape: f32[1024,64], index: 7, kind: input, shape index: {}]
  %s8 = inlined_call_operand.vmem [shape: f32[1,64], index: 8, kind: input, shape index: {}]
  %s9 = inlined_call_operand.vmem [shape: f32[64,10], index: 9, kind: input, shape index: {}]
  %s10 = inlined_call_operand.vmem [shape: f32[1,10], index: 10, kind: input, shape index: {}]
  %s11 = inlined_call_operand.hbm [shape: f32[2,1,10], index: 11, kind: output, shape index: {}]
  %s12 = sld [smem:[#allocation0]]
  $region77: #{tfconvnet_forward.1} parent=0
    _
  %s14 = ssub.s32 1, %s12
  %s15 = scalar_select 0, %s14, %s12
  $region1: #{tfconvnet_forward.1} parent=0
    #allocation6 [shape = 'u8[1024]{0}', space=vmem, size = 0x400, scoped, tag = 'output window, operand 0']
    #allocation7 [shape = 's32[2]{0}', space=sflag, size = 0x8, scoped, tag = 'scoped memory for tfconvnet_forward.1']
    %16 = vsyncpa [#allocation7], 0
    %s17 = scalar_lea.sflag [#allocation7], 1
    %18 = vsyncpa %s17, 0
    loop: start=0, step=1, limit=4
    $region2: #{tfconvnet_forward.1} parent=1 // loop_pre_header
      _
    $region3: #{tfconvnet_forward.1} parent=1 // loop_header
      %s20 = sphi 0, %s24
      %p21 = scmp.ge.s32.totalorder %s20, 4
      %s30 = sphi 0, %s32
      %s33 = sphi 0, %s30
      %s34 = sphi 0, %s33
      %s50 = sphi 0, %s34
      %s54 = sphi 0, %s54
      %s56 = sphi 0, %s54
      %s57 = sphi 0, %s56
      %s71 = sphi 0, %s57
      %s75 = sphi 0, %s75
      %s77 = sphi 0, %s75
      %s78 = sphi 0, %s77
      %s92 = sphi 0, %s78
      %s96 = sphi 0, %s96
      %s98 = sphi 0, %s96
      %s99 = sphi 0, %s98
      %s113 = sphi 0, %s99
      %s117 = sphi 0, %s117
      %s119 = sphi 0, %s117
      %s120 = sphi 0, %s119
      %s134 = sphi 0, %s120
      %s138 = sphi 0, %s138
      %s140 = sphi 0, %s138
      %s141 = sphi 0, %s140
      %s155 = sphi 0, %s141
      %s159 = sphi 0, %s159
      %s161 = sphi 0, %s159
      %s162 = sphi 0, %s161
      %s176 = sphi 0, %s162
      %s180 = sphi 0, %s180
      %s182 = sphi 0, %s180
      %s183 = sphi 0, %s182
      %s197 = sphi 0, %s183
      %s201 = sphi 0, %s201
      %s203 = sphi 0, %s201
      %s204 = sphi 0, %s203
      %s218 = sphi 0, %s204
      %s222 = sphi 0, %s222
      %s224 = sphi 0, %s222
      %s225 = sphi 0, %s224
      %s239 = sphi 0, %s225
      %s243 = sphi 0, %s243
      %s245 = sphi 0, %s243
      %s246 = sphi 0, %s245
      %s260 = sphi 0, %s246
      %s266 = sphi 0, %s268
      %s269 = sphi 0, %s266
      %s270 = sphi 0, %s269
      %s286 = sphi 0, %s270
    $region4: #{tfconvnet_forward.1} parent=1 // loop_header_branch
      %23 = sbr.rel (%p21) target = $region8
    $region5: #{tfconvnet_forward.1} parent=1 // loop_body
      %s25 = ssub.s32 %s20, 1
      %s26 = ssub.s32 %s20, 2
      %s27 = sadd.s32 %s20, 1
      %s28 = ssub.s32 %s20, %s27
      %p29 = scmp.eq.s32.totalorder %s28, 0
      %s31 = sadd.s32 %s30, 1
      %s32 = scalar_select %p29, %s30, %s31
      %p35 = pneg %p29
      %p36 = scmp.eq.s32.totalorder %s20, 1
      %p37 = por %p35, %p36
      %p38 = scmp.ne.s32.totalorder %s30, %s33
      %p39 = scmp.eq.s32.totalorder %s20, 0
      %p40 = por %p38, %p39
      %p41 = scmp.ne.s32.totalorder %s30, %s33
      %p42 = scmp.eq.s32.totalorder %s25, 1
      %p43 = por %p41, %p42
      %p44 = scmp.ne.s32.totalorder %s33, %s34
      %p45 = scmp.eq.s32.totalorder %s25, 0
      %p46 = por %p44, %p45
      %p47 = scmp.ne.s32.totalorder %s33, %s34
      %p48 = scmp.eq.s32.totalorder %s26, 1
      %p49 = por %p47, %p48
      %p51 = scmp.ne.s32.totalorder %s34, %s50
      %p52 = scmp.eq.s32.totalorder %s26, 0
      %p53 = por %p51, %p52
      %s55 = sadd.s32 %s54, 1
      %p58 = scmp.eq.s32.totalorder %s20, 1
      %p59 = scmp.ne.s32.totalorder %s54, %s56
      %p60 = scmp.eq.s32.totalorder %s20, 0
      %p61 = por %p59, %p60
      %p62 = scmp.ne.s32.totalorder %s54, %s56
      %p63 = scmp.eq.s32.totalorder %s25, 1
      %p64 = por %p62, %p63
      %p65 = scmp.ne.s32.totalorder %s56, %s57
      %p66 = scmp.eq.s32.totalorder %s25, 0
      %p67 = por %p65, %p66
      %p68 = scmp.ne.s32.totalorder %s56, %s57
      %p69 = scmp.eq.s32.totalorder %s26, 1
      %p70 = por %p68, %p69
      %p72 = scmp.ne.s32.totalorder %s57, %s71
      %p73 = scmp.eq.s32.totalorder %s26, 0
      %p74 = por %p72, %p73
      %s76 = sadd.s32 %s75, 1
      %p79 = scmp.eq.s32.totalorder %s20, 1
      %p80 = scmp.ne.s32.totalorder %s75, %s77
      %p81 = scmp.eq.s32.totalorder %s20, 0
      %p82 = por %p80, %p81
      %p83 = scmp.ne.s32.totalorder %s75, %s77
      %p84 = scmp.eq.s32.totalorder %s25, 1
      %p85 = por %p83, %p84
      %p86 = scmp.ne.s32.totalorder %s77, %s78
      %p87 = scmp.eq.s32.totalorder %s25, 0
      %p88 = por %p86, %p87
      %p89 = scmp.ne.s32.totalorder %s77, %s78
      %p90 = scmp.eq.s32.totalorder %s26, 1
      %p91 = por %p89, %p90
      %p93 = scmp.ne.s32.totalorder %s78, %s92
      %p94 = scmp.eq.s32.totalorder %s26, 0
      %p95 = por %p93, %p94
      %s97 = sadd.s32 %s96, 1
      %p100 = scmp.eq.s32.totalorder %s20, 1
      %p101 = scmp.ne.s32.totalorder %s96, %s98
      %p102 = scmp.eq.s32.totalorder %s20, 0
      %p103 = por %p101, %p102
      %p104 = scmp.ne.s32.totalorder %s96, %s98
      %p105 = scmp.eq.s32.totalorder %s25, 1
      %p106 = por %p104, %p105
      %p107 = scmp.ne.s32.totalorder %s98, %s99
      %p108 = scmp.eq.s32.totalorder %s25, 0
      %p109 = por %p107, %p108
      %p110 = scmp.ne.s32.totalorder %s98, %s99
      %p111 = scmp.eq.s32.totalorder %s26, 1
      %p112 = por %p110, %p111
      %p114 = scmp.ne.s32.totalorder %s99, %s113
      %p115 = scmp.eq.s32.totalorder %s26, 0
      %p116 = por %p114, %p115
      %s118 = sadd.s32 %s117, 1
      %p121 = scmp.eq.s32.totalorder %s20, 1
      %p122 = scmp.ne.s32.totalorder %s117, %s119
      %p123 = scmp.eq.s32.totalorder %s20, 0
      %p124 = por %p122, %p123
      %p125 = scmp.ne.s32.totalorder %s117, %s119
      %p126 = scmp.eq.s32.totalorder %s25, 1
      %p127 = por %p125, %p126
      %p128 = scmp.ne.s32.totalorder %s119, %s120
      %p129 = scmp.eq.s32.totalorder %s25, 0
      %p130 = por %p128, %p129
      %p131 = scmp.ne.s32.totalorder %s119, %s120
      %p132 = scmp.eq.s32.totalorder %s26, 1
      %p133 = por %p131, %p132
      %p135 = scmp.ne.s32.totalorder %s120, %s134
      %p136 = scmp.eq.s32.totalorder %s26, 0
      %p137 = por %p135, %p136
      %s139 = sadd.s32 %s138, 1
      %p142 = scmp.eq.s32.totalorder %s20, 1
      %p143 = scmp.ne.s32.totalorder %s138, %s140
      %p144 = scmp.eq.s32.totalorder %s20, 0
      %p145 = por %p143, %p144
      %p146 = scmp.ne.s32.totalorder %s138, %s140
      %p147 = scmp.eq.s32.totalorder %s25, 1
      %p148 = por %p146, %p147
      %p149 = scmp.ne.s32.totalorder %s140, %s141
      %p150 = scmp.eq.s32.totalorder %s25, 0
      %p151 = por %p149, %p150
      %p152 = scmp.ne.s32.totalorder %s140, %s141
      %p153 = scmp.eq.s32.totalorder %s26, 1
      %p154 = por %p152, %p153
      %p156 = scmp.ne.s32.totalorder %s141, %s155
      %p157 = scmp.eq.s32.totalorder %s26, 0
      %p158 = por %p156, %p157
      %s160 = sadd.s32 %s159, 1
      %p163 = scmp.eq.s32.totalorder %s20, 1
      %p164 = scmp.ne.s32.totalorder %s159, %s161
      %p165 = scmp.eq.s32.totalorder %s20, 0
      %p166 = por %p164, %p165
      %p167 = scmp.ne.s32.totalorder %s159, %s161
      %p168 = scmp.eq.s32.totalorder %s25, 1
      %p169 = por %p167, %p168
      %p170 = scmp.ne.s32.totalorder %s161, %s162
      %p171 = scmp.eq.s32.totalorder %s25, 0
      %p172 = por %p170, %p171
      %p173 = scmp.ne.s32.totalorder %s161, %s162
      %p174 = scmp.eq.s32.totalorder %s26, 1
      %p175 = por %p173, %p174
      %p177 = scmp.ne.s32.totalorder %s162, %s176
      %p178 = scmp.eq.s32.totalorder %s26, 0
      %p179 = por %p177, %p178
      %s181 = sadd.s32 %s180, 1
      %p184 = scmp.eq.s32.totalorder %s20, 1
      %p185 = scmp.ne.s32.totalorder %s180, %s182
      %p186 = scmp.eq.s32.totalorder %s20, 0
      %p187 = por %p185, %p186
      %p188 = scmp.ne.s32.totalorder %s180, %s182
      %p189 = scmp.eq.s32.totalorder %s25, 1
      %p190 = por %p188, %p189
      %p191 = scmp.ne.s32.totalorder %s182, %s183
      %p192 = scmp.eq.s32.totalorder %s25, 0
      %p193 = por %p191, %p192
      %p194 = scmp.ne.s32.totalorder %s182, %s183
      %p195 = scmp.eq.s32.totalorder %s26, 1
      %p196 = por %p194, %p195
      %p198 = scmp.ne.s32.totalorder %s183, %s197
      %p199 = scmp.eq.s32.totalorder %s26, 0
      %p200 = por %p198, %p199
      %s202 = sadd.s32 %s201, 1
      %p205 = scmp.eq.s32.totalorder %s20, 1
      %p206 = scmp.ne.s32.totalorder %s201, %s203
      %p207 = scmp.eq.s32.totalorder %s20, 0
      %p208 = por %p206, %p207
      %p209 = scmp.ne.s32.totalorder %s201, %s203
      %p210 = scmp.eq.s32.totalorder %s25, 1
      %p211 = por %p209, %p210
      %p212 = scmp.ne.s32.totalorder %s203, %s204
      %p213 = scmp.eq.s32.totalorder %s25, 0
      %p214 = por %p212, %p213
      %p215 = scmp.ne.s32.totalorder %s203, %s204
      %p216 = scmp.eq.s32.totalorder %s26, 1
      %p217 = por %p215, %p216
      %p219 = scmp.ne.s32.totalorder %s204, %s218
      %p220 = scmp.eq.s32.totalorder %s26, 0
      %p221 = por %p219, %p220
      %s223 = sadd.s32 %s222, 1
      %p226 = scmp.eq.s32.totalorder %s20, 1
      %p227 = scmp.ne.s32.totalorder %s222, %s224
      %p228 = scmp.eq.s32.totalorder %s20, 0
      %p229 = por %p227, %p228
      %p230 = scmp.ne.s32.totalorder %s222, %s224
      %p231 = scmp.eq.s32.totalorder %s25, 1
      %p232 = por %p230, %p231
      %p233 = scmp.ne.s32.totalorder %s224, %s225
      %p234 = scmp.eq.s32.totalorder %s25, 0
      %p235 = por %p233, %p234
      %p236 = scmp.ne.s32.totalorder %s224, %s225
      %p237 = scmp.eq.s32.totalorder %s26, 1
      %p238 = por %p236, %p237
      %p240 = scmp.ne.s32.totalorder %s225, %s239
      %p241 = scmp.eq.s32.totalorder %s26, 0
      %p242 = por %p240, %p241
      %s244 = sadd.s32 %s243, 1
      %p247 = scmp.eq.s32.totalorder %s20, 1
      %p248 = scmp.ne.s32.totalorder %s243, %s245
      %p249 = scmp.eq.s32.totalorder %s20, 0
      %p250 = por %p248, %p249
      %p251 = scmp.ne.s32.totalorder %s243, %s245
      %p252 = scmp.eq.s32.totalorder %s25, 1
      %p253 = por %p251, %p252
      %p254 = scmp.ne.s32.totalorder %s245, %s246
      %p255 = scmp.eq.s32.totalorder %s25, 0
      %p256 = por %p254, %p255
      %p257 = scmp.ne.s32.totalorder %s245, %s246
      %p258 = scmp.eq.s32.totalorder %s26, 1
      %p259 = por %p257, %p258
      %p261 = scmp.ne.s32.totalorder %s246, %s260
      %p262 = scmp.eq.s32.totalorder %s26, 0
      %p263 = por %p261, %p262
      %s264 = ssub.s32 %s20, %s27
      %p265 = scmp.eq.s32.totalorder %s264, 0
      %s267 = sadd.s32 %s266, 1
      %s268 = scalar_select %p265, %s266, %s267
      %p271 = pneg %p265
      %p272 = scmp.eq.s32.totalorder %s20, 1
      %p273 = por %p271, %p272
      %p274 = scmp.ne.s32.totalorder %s266, %s269
      %p275 = scmp.eq.s32.totalorder %s20, 0
      %p276 = por %p274, %p275
      %p277 = scmp.ne.s32.totalorder %s266, %s269
      %p278 = scmp.eq.s32.totalorder %s25, 1
      %p279 = por %p277, %p278
      %p280 = scmp.ne.s32.totalorder %s269, %s270
      %p281 = scmp.eq.s32.totalorder %s25, 0
      %p282 = por %p280, %p281
      %p283 = scmp.ne.s32.totalorder %s269, %s270
      %p284 = scmp.eq.s32.totalorder %s26, 1
      %p285 = por %p283, %p284
      %p287 = scmp.ne.s32.totalorder %s270, %s286
      %p288 = scmp.eq.s32.totalorder %s26, 0
      %p289 = por %p287, %p288
      %p290 = scmp.le.s32.totalorder 1, %s20
      %p291 = scmp.lt.s32.totalorder %s20, 3
      %p292 = pnand %p290, %p291
      %p293 = pneg %p292
      // Predicated region
      $region9: #{tfconvnet_forward.1} parent=5 // pred_check
        _
      $region10: #{tfconvnet_forward.1} parent=5 // pred_check_branch
        %295 = sbr.rel (%p292) target = $region12
      $region11: #{tfconvnet_forward.1} parent=5 // pred_region
        %s296 = ssub.s32 %s20, 1
        // Predicated region
        $region13: #{tfconvnet_forward.1} parent=11 // pred_check
          %p297 = pneg %p67
        $region14: #{tfconvnet_forward.1} parent=11 // pred_check_branch
          %299 = sbr.rel (%p297) target = $region16
        $region15: #{tfconvnet_forward.1} parent=11 // pred_region
          _
        $region16: #{tfconvnet_forward.1} parent=11 // pred_fallthru
          _
        // Predicated region
        $region17: #{tfconvnet_forward.1} parent=11 // pred_check
          %p300 = pneg %p88
        $region18: #{tfconvnet_forward.1} parent=11 // pred_check_branch
          %302 = sbr.rel (%p300) target = $region20
        $region19: #{tfconvnet_forward.1} parent=11 // pred_region
          _
        $region20: #{tfconvnet_forward.1} parent=11 // pred_fallthru
          _
        // Predicated region
        $region21: #{tfconvnet_forward.1} parent=11 // pred_check
          %p303 = pneg %p109
        $region22: #{tfconvnet_forward.1} parent=11 // pred_check_branch
          %305 = sbr.rel (%p303) target = $region24
        $region23: #{tfconvnet_forward.1} parent=11 // pred_region
          _
        $region24: #{tfconvnet_forward.1} parent=11 // pred_fallthru
          _
        // Predicated region
        $region25: #{tfconvnet_forward.1} parent=11 // pred_check
          %p306 = pneg %p130
        $region26: #{tfconvnet_forward.1} parent=11 // pred_check_branch
          %308 = sbr.rel (%p306) target = $region28
        $region27: #{tfconvnet_forward.1} parent=11 // pred_region
          _
        $region28: #{tfconvnet_forward.1} parent=11 // pred_fallthru
          _
        // Predicated region
        $region29: #{tfconvnet_forward.1} parent=11 // pred_check
          %p309 = pneg %p151
        $region30: #{tfconvnet_forward.1} parent=11 // pred_check_branch
          %311 = sbr.rel (%p309) target = $region32
        $region31: #{tfconvnet_forward.1} parent=11 // pred_region
          _
        $region32: #{tfconvnet_forward.1} parent=11 // pred_fallthru
          _
        // Predicated region
        $region33: #{tfconvnet_forward.1} parent=11 // pred_check
          %p312 = pneg %p172
        $region34: #{tfconvnet_forward.1} parent=11 // pred_check_branch
          %314 = sbr.rel (%p312) target = $region36
        $region35: #{tfconvnet_forward.1} parent=11 // pred_region
          _
        $region36: #{tfconvnet_forward.1} parent=11 // pred_fallthru
          _
        // Predicated region
        $region37: #{tfconvnet_forward.1} parent=11 // pred_check
          %p315 = pneg %p193
        $region38: #{tfconvnet_forward.1} parent=11 // pred_check_branch
          %317 = sbr.rel (%p315) target = $region40
        $region39: #{tfconvnet_forward.1} parent=11 // pred_region
          _
        $region40: #{tfconvnet_forward.1} parent=11 // pred_fallthru
          _
        // Predicated region
        $region41: #{tfconvnet_forward.1} parent=11 // pred_check
          %p318 = pneg %p214
        $region42: #{tfconvnet_forward.1} parent=11 // pred_check_branch
          %320 = sbr.rel (%p318) target = $region44
        $region43: #{tfconvnet_forward.1} parent=11 // pred_region
          _
        $region44: #{tfconvnet_forward.1} parent=11 // pred_fallthru
          _
        // Predicated region
        $region45: #{tfconvnet_forward.1} parent=11 // pred_check
          %p321 = pneg %p235
        $region46: #{tfconvnet_forward.1} parent=11 // pred_check_branch
          %323 = sbr.rel (%p321) target = $region48
        $region47: #{tfconvnet_forward.1} parent=11 // pred_region
          _
        $region48: #{tfconvnet_forward.1} parent=11 // pred_fallthru
          _
        // Predicated region
        $region49: #{tfconvnet_forward.1} parent=11 // pred_check
          %p324 = pneg %p256
        $region50: #{tfconvnet_forward.1} parent=11 // pred_check_branch
          %326 = sbr.rel (%p324) target = $region52
        $region51: #{tfconvnet_forward.1} parent=11 // pred_region
          _
        $region52: #{tfconvnet_forward.1} parent=11 // pred_fallthru
          _
      $region12: #{tfconvnet_forward.1} parent=5 // pred_fallthru
        _
      %p327 = scmp.lt.s32.totalorder %s20, 2
      // Predicated region
      $region53: #{tfconvnet_forward.1} parent=5 // pred_check
        %p328 = pneg %p327
      $region54: #{tfconvnet_forward.1} parent=5 // pred_check_branch
        %330 = sbr.rel (%p328) target = $region56
      $region55: #{tfconvnet_forward.1} parent=5 // pred_region
        // Predicated region
        $region57: #{tfconvnet_forward.1} parent=55 // pred_check
          %p331 = pneg %p40
        $region58: #{tfconvnet_forward.1} parent=55 // pred_check_branch
          %333 = sbr.rel (%p331) target = $region60
        $region59: #{tfconvnet_forward.1} parent=55 // pred_region
          %p334 = scmp.lt.s32.totalorder %s20, 1
          %s335 = scalar_select %p334, %s20, 1
          %s336 = smul.addr %s335, 113
          %s337 = smul.addr %s336, 8
          %s338 = scalar_lea.vmem %s0, %s337
        $region60: #{tfconvnet_forward.1} parent=55 // pred_fallthru
          _
      $region56: #{tfconvnet_forward.1} parent=5 // pred_fallthru
        _
      %p339 = scmp.le.s32.totalorder 1, %s20
      %p340 = scmp.lt.s32.totalorder %s20, 3
      %p341 = pnand %p339, %p340
      %p342 = pneg %p341
      // Predicated region
      $region61: #{tfconvnet_forward.1} parent=5 // pred_check
        _
      $region62: #{tfconvnet_forward.1} parent=5 // pred_check_branch
        %344 = sbr.rel (%p341) target = $region64
      $region63: #{tfconvnet_forward.1} parent=5 // pred_region
        %s345 = ssub.s32 %s20, 1
        %p346 = scmp.lt.s32.totalorder %s25, 1
        %s347 = scalar_select %p346, %s25, 1
        %s348 = smul.addr %s347, 113
        %s349 = smul.addr %s348, 8
        %s350 = scalar_lea.vmem %s0, %s349
        %p351 = pneg %p46
        %p352 = pneg %p43
        %p353 = pneg %p67
        %p354 = pneg %p64
        %p355 = pneg %p88
        %p356 = pneg %p85
        %p357 = pneg %p109
        %p358 = pneg %p106
        %p359 = pneg %p130
        %p360 = pneg %p127
        %p361 = pneg %p151
        %p362 = pneg %p148
        %p363 = pneg %p172
        %p364 = pneg %p169
        %p365 = pneg %p193
        %p366 = pneg %p190
        %p367 = pneg %p214
        %p368 = pneg %p211
        %p369 = pneg %p235
        %p370 = pneg %p232
        %p371 = pneg %p256
        %p372 = pneg %p253
        %p373 = pneg %p282
        %p374 = pneg %p279
        %s375 = sand.u32 %s269, 1
        %s376 = scalar_lea.sflag [#allocation7], %s375
        %s377 = sand.u32 %s269, 1
        %s378 = scalar_lea.vmem [#allocation6], %s377
        %p379 = scmp.lt.s32.totalorder %s25, 1
        %s380 = scalar_select %p379, %s25, 1
        %s381 = smul.addr %s380, 113
        %s382 = smul.addr %s381, 8
        %s383 = scalar_lea.vmem %s0, %s382
        %v385 = vld [vmem:[%s383] sm:$0xff]
        %v386 = vld [vmem:[%s383 + $0x8] sm:$0xff]
        %v387 = vld [vmem:[%s383 + $0x10] sm:$0xff]
        %v388 = vld [vmem:[%s383 + $0x18] sm:$0xff]
        %v389 = vld [vmem:[%s383 + $0x20] sm:$0xff]
        %v390 = vld [vmem:[%s383 + $0x28] sm:$0xff]
        %v391 = vld [vmem:[%s383 + $0x30] sm:$0xff]
        %v392 = vld [vmem:[%s383 + $0x38] sm:$0xff]
        %v393 = vld [vmem:[%s383 + $0x40] sm:$0xff]
        %v394 = vld [vmem:[%s383 + $0x48] sm:$0xff]
        %v395 = vld [vmem:[%s383 + $0x50] sm:$0xff]
        %v396 = vld [vmem:[%s383 + $0x58] sm:$0xff]
        %v397 = vld [vmem:[%s383 + $0x60] sm:$0xff]
        %v398 = vld [vmem:[%s383 + $0x68] sm:$0xff]
        %v399 = vld [vmem:[%s383 + $0x70] sm:$0xff]
        %v400 = vld [vmem:[%s383 + $0x78] sm:$0xff]
        %v401 = vld [vmem:[%s383 + $0x80] sm:$0xff]
        %v402 = vld [vmem:[%s383 + $0x88] sm:$0xff]
        %v403 = vld [vmem:[%s383 + $0x90] sm:$0xff]
        %v404 = vld [vmem:[%s383 + $0x98] sm:$0xff]
        %v405 = vld [vmem:[%s383 + $0xa0] sm:$0xff]
        %v406 = vld [vmem:[%s383 + $0xa8] sm:$0xff]
        %v407 = vld [vmem:[%s383 + $0xb0] sm:$0xff]
        %v408 = vld [vmem:[%s383 + $0xb8] sm:$0xff]
        %v409 = vld [vmem:[%s383 + $0xc0] sm:$0xff]
        %v410 = vld [vmem:[%s383 + $0xc8] sm:$0xff]
        %v411 = vld [vmem:[%s383 + $0xd0] sm:$0xff]
        %v412 = vld [vmem:[%s383 + $0xd8] sm:$0xff]
        %v413 = vld [vmem:[%s383 + $0xe0] sm:$0xff]
        %v414 = vld [vmem:[%s383 + $0xe8] sm:$0xff]
        %v415 = vld [vmem:[%s383 + $0xf0] sm:$0xff]
        %v416 = vld [vmem:[%s383 + $0xf8] sm:$0xff]
        %v417 = vld [vmem:[%s383 + $0x100] sm:$0xff]
        %v418 = vld [vmem:[%s383 + $0x108] sm:$0xff]
        %v419 = vld [vmem:[%s383 + $0x110] sm:$0xff]
        %v420 = vld [vmem:[%s383 + $0x118] sm:$0xff]
        %v421 = vld [vmem:[%s383 + $0x120] sm:$0xff]
        %v422 = vld [vmem:[%s383 + $0x128] sm:$0xff]
        %v423 = vld [vmem:[%s383 + $0x130] sm:$0xff]
        %v424 = vld [vmem:[%s383 + $0x138] sm:$0xff]
        %v425 = vld [vmem:[%s383 + $0x140] sm:$0xff]
        %v426 = vld [vmem:[%s383 + $0x148] sm:$0xff]
        %v427 = vld [vmem:[%s383 + $0x150] sm:$0xff]
        %v428 = vld [vmem:[%s383 + $0x158] sm:$0xff]
        %v429 = vld [vmem:[%s383 + $0x160] sm:$0xff]
        %v430 = vld [vmem:[%s383 + $0x168] sm:$0xff]
        %v431 = vld [vmem:[%s383 + $0x170] sm:$0xff]
        %v432 = vld [vmem:[%s383 + $0x178] sm:$0xff]
        %v433 = vld [vmem:[%s383 + $0x180] sm:$0xff]
        %v434 = vld [vmem:[%s383 + $0x188] sm:$0xff]
        %v435 = vld [vmem:[%s383 + $0x190] sm:$0xff]
        %v436 = vld [vmem:[%s383 + $0x198] sm:$0xff]
        %v437 = vld [vmem:[%s383 + $0x1a0] sm:$0xff]
        %v438 = vld [vmem:[%s383 + $0x1a8] sm:$0xff]
        %v439 = vld [vmem:[%s383 + $0x1b0] sm:$0xff]
        %v440 = vld [vmem:[%s383 + $0x1b8] sm:$0xff]
        %v441 = vld [vmem:[%s383 + $0x1c0] sm:$0xff]
        %v442 = vld [vmem:[%s383 + $0x1c8] sm:$0xff]
        %v443 = vld [vmem:[%s383 + $0x1d0] sm:$0xff]
        %v444 = vld [vmem:[%s383 + $0x1d8] sm:$0xff]
        %v445 = vld [vmem:[%s383 + $0x1e0] sm:$0xff]
        %v446 = vld [vmem:[%s383 + $0x1e8] sm:$0xff]
        %v447 = vld [vmem:[%s383 + $0x1f0] sm:$0xff]
        %v448 = vld [vmem:[%s383 + $0x1f8] sm:$0xff]
        %v449 = vld [vmem:[%s383 + $0x200] sm:$0xff]
        %v450 = vld [vmem:[%s383 + $0x208] sm:$0xff]
        %v451 = vld [vmem:[%s383 + $0x210] sm:$0xff]
        %v452 = vld [vmem:[%s383 + $0x218] sm:$0xff]
        %v453 = vld [vmem:[%s383 + $0x220] sm:$0xff]
        %v454 = vld [vmem:[%s383 + $0x228] sm:$0xff]
        %v455 = vld [vmem:[%s383 + $0x230] sm:$0xff]
        %v456 = vld [vmem:[%s383 + $0x238] sm:$0xff]
        %v457 = vld [vmem:[%s383 + $0x240] sm:$0xff]
        %v458 = vld [vmem:[%s383 + $0x248] sm:$0xff]
        %v459 = vld [vmem:[%s383 + $0x250] sm:$0xff]
        %v460 = vld [vmem:[%s383 + $0x258] sm:$0xff]
        %v461 = vld [vmem:[%s383 + $0x260] sm:$0xff]
        %v462 = vld [vmem:[%s383 + $0x268] sm:$0xff]
        %v463 = vld [vmem:[%s383 + $0x270] sm:$0xff]
        %v464 = vld [vmem:[%s383 + $0x278] sm:$0xff]
        %v465 = vld [vmem:[%s383 + $0x280] sm:$0xff]
        %v466 = vld [vmem:[%s383 + $0x288] sm:$0xff]
        %v467 = vld [vmem:[%s383 + $0x290] sm:$0xff]
        %v468 = vld [vmem:[%s383 + $0x298] sm:$0xff]
        %v469 = vld [vmem:[%s383 + $0x2a0] sm:$0xff]
        %v470 = vld [vmem:[%s383 + $0x2a8] sm:$0xff]
        %v471 = vld [vmem:[%s383 + $0x2b0] sm:$0xff]
        %v472 = vld [vmem:[%s383 + $0x2b8] sm:$0xff]
        %v473 = vld [vmem:[%s383 + $0x2c0] sm:$0xff]
        %v474 = vld [vmem:[%s383 + $0x2c8] sm:$0xff]
        %v475 = vld [vmem:[%s383 + $0x2d0] sm:$0xff]
        %v476 = vld [vmem:[%s383 + $0x2d8] sm:$0xff]
        %v477 = vld [vmem:[%s383 + $0x2e0] sm:$0xff]
        %v478 = vld [vmem:[%s383 + $0x2e8] sm:$0xff]
        %v479 = vld [vmem:[%s383 + $0x2f0] sm:$0xff]
        %v480 = vld [vmem:[%s383 + $0x2f8] sm:$0xff]
        %v481 = vld [vmem:[%s383 + $0x300] sm:$0xff]
        %v482 = vld [vmem:[%s383 + $0x308] sm:$0xff]
        %v483 = vld [vmem:[%s383 + $0x310] sm:$0xff]
        %v484 = vld [vmem:[%s383 + $0x318] sm:$0xff]
        %v485 = vld [vmem:[%s383 + $0x320] sm:$0xff]
        %v486 = vld [vmem:[%s383 + $0x328] sm:$0xff]
        %v487 = vld [vmem:[%s383 + $0x330] sm:$0xff]
        %v488 = vld [vmem:[%s383 + $0x338] sm:$0xff]
        %v489 = vld [vmem:[%s383 + $0x340] sm:$0xff]
        %v490 = vld [vmem:[%s383 + $0x348] sm:$0xff]
        %v491 = vld [vmem:[%s383 + $0x350] sm:$0xff]
        %v492 = vld [vmem:[%s383 + $0x358] sm:$0xff]
        %v493 = vld [vmem:[%s383 + $0x360] sm:$0xff]
        %v494 = vld [vmem:[%s383 + $0x368] sm:$0xff]
        %v495 = vld [vmem:[%s383 + $0x370] sm:$0xff]
        %v496 = vld [vmem:[%s383 + $0x378] sm:$0xff]
        %v497 = vld [vmem:[%s383 + $0x380] sm:$0xff]
        %v498 = vpack.c.bf16 %v386, %v385
        %v499 = vpack.c.bf16 %v388, %v387
        %v500 = vpack.c.bf16 %v390, %v389
        %v501 = vpack.c.bf16 %v392, %v391
        %v502 = vpack.c.bf16 %v394, %v393
        %v503 = vpack.c.bf16 %v396, %v395
        %v504 = vpack.c.bf16 %v398, %v397
        %v505 = vpack.c.bf16 %v400, %v399
        %v506 = vpack.c.bf16 %v402, %v401
        %v507 = vpack.c.bf16 %v404, %v403
        %v508 = vpack.c.bf16 %v406, %v405
        %v509 = vpack.c.bf16 %v408, %v407
        %v510 = vpack.c.bf16 %v410, %v409
        %v511 = vpack.c.bf16 %v412, %v411
        %v512 = vpack.c.bf16 %v414, %v413
        %v513 = vpack.c.bf16 %v416, %v415
        %v514 = vpack.c.bf16 %v418, %v417
        %v515 = vpack.c.bf16 %v420, %v419
        %v516 = vpack.c.bf16 %v422, %v421
        %v517 = vpack.c.bf16 %v424, %v423
        %v518 = vpack.c.bf16 %v426, %v425
        %v519 = vpack.c.bf16 %v428, %v427
        %v520 = vpack.c.bf16 %v430, %v429
        %v521 = vpack.c.bf16 %v432, %v431
        %v522 = vpack.c.bf16 %v434, %v433
        %v523 = vpack.c.bf16 %v436, %v435
        %v524 = vpack.c.bf16 %v438, %v437
        %v525 = vpack.c.bf16 %v440, %v439
        %v526 = vpack.c.bf16 %v442, %v441
        %v527 = vpack.c.bf16 %v444, %v443
        %v528 = vpack.c.bf16 %v446, %v445
        %v529 = vpack.c.bf16 %v448, %v447
        %v530 = vpack.c.bf16 %v450, %v449
        %v531 = vpack.c.bf16 %v452, %v451
        %v532 = vpack.c.bf16 %v454, %v453
        %v533 = vpack.c.bf16 %v456, %v455
        %v534 = vpack.c.bf16 %v458, %v457
        %v535 = vpack.c.bf16 %v460, %v459
        %v536 = vpack.c.bf16 %v462, %v461
        %v537 = vpack.c.bf16 %v464, %v463
        %v538 = vpack.c.bf16 %v466, %v465
        %v539 = vpack.c.bf16 %v468, %v467
        %v540 = vpack.c.bf16 %v470, %v469
        %v541 = vpack.c.bf16 %v472, %v471
        %v542 = vpack.c.bf16 %v474, %v473
        %v543 = vpack.c.bf16 %v476, %v475
        %v544 = vpack.c.bf16 %v478, %v477
        %v545 = vpack.c.bf16 %v480, %v479
        %v546 = vpack.c.bf16 %v482, %v481
        %v547 = vpack.c.bf16 %v484, %v483
        %v548 = vpack.c.bf16 %v486, %v485
        %v549 = vpack.c.bf16 %v488, %v487
        %v550 = vpack.c.bf16 %v490, %v489
        %v551 = vpack.c.bf16 %v492, %v491
        %v552 = vpack.c.bf16 %v494, %v493
        %v553 = vpack.c.bf16 %v496, %v495
        %v554 = vpack.c.bf16 %v497, %v497
        %v555 = vld [vmem:[%s1] sm:$0xf]
        %v556 = vld [vmem:[%s1 + $0x4] sm:$0xf]
        %v557 = vld [vmem:[%s1 + $0x8] sm:$0xf]
        %v558 = vld [vmem:[%s1 + $0xc] sm:$0x3]
        %v559 = vld [vmem:[%s2] sm:$0x1]
        %v561 = vperm.slane %v559, 0
        %v567 = vunpack.c.l.b16 %v555
        %v568 = vunpack.c.l.b16 %v556
        %v569 = vunpack.c.l.b16 %v557
        %v570 = vunpack.c.l.b16 %v558
        %v571 = vpack.c.b16 %v568, %v567
        %v572 = vpack.c.b16 %v570, %v569
        %vm574 = vcmask 220160
        %v576 = vsel %vm574, %v498, 0
        %v579 = vsel %vm574, %v499, 0
        %v582 = vsel %vm574, %v500, 0
        %v585 = vsel %vm574, %v501, 0
        %v588 = vsel %vm574, %v502, 0
        %v591 = vsel %vm574, %v503, 0
        %v594 = vsel %vm574, %v504, 0
        %v597 = vsel %vm574, %v505, 0
        %v600 = vsel %vm574, %v506, 0
        %v603 = vsel %vm574, %v507, 0
        %v606 = vsel %vm574, %v508, 0
        %v609 = vsel %vm574, %v509, 0
        %v612 = vsel %vm574, %v510, 0
        %v615 = vsel %vm574, %v511, 0
        %v618 = vsel %vm574, %v512, 0
        %v621 = vsel %vm574, %v513, 0
        %v624 = vsel %vm574, %v514, 0
        %v627 = vsel %vm574, %v515, 0
        %v630 = vsel %vm574, %v516, 0
        %v633 = vsel %vm574, %v517, 0
        %v636 = vsel %vm574, %v518, 0
        %v639 = vsel %vm574, %v519, 0
        %v642 = vsel %vm574, %v520, 0
        %v645 = vsel %vm574, %v521, 0
        %v648 = vsel %vm574, %v522, 0
        %v651 = vsel %vm574, %v523, 0
        %v654 = vsel %vm574, %v524, 0
        %v657 = vsel %vm574, %v525, 0
        %v660 = vsel %vm574, %v526, 0
        %v663 = vsel %vm574, %v527, 0
        %v666 = vsel %vm574, %v528, 0
        %v669 = vsel %vm574, %v529, 0
        %v672 = vsel %vm574, %v530, 0
        %v675 = vsel %vm574, %v531, 0
        %v678 = vsel %vm574, %v532, 0
        %v681 = vsel %vm574, %v533, 0
        %v684 = vsel %vm574, %v534, 0
        %v687 = vsel %vm574, %v535, 0
        %v690 = vsel %vm574, %v536, 0
        %v693 = vsel %vm574, %v537, 0
        %v696 = vsel %vm574, %v538, 0
        %v699 = vsel %vm574, %v539, 0
        %v702 = vsel %vm574, %v540, 0
        %v705 = vsel %vm574, %v541, 0
        %v708 = vsel %vm574, %v542, 0
        %v711 = vsel %vm574, %v543, 0
        %v714 = vsel %vm574, %v544, 0
        %v717 = vsel %vm574, %v545, 0
        %v720 = vsel %vm574, %v546, 0
        %v723 = vsel %vm574, %v547, 0
        %v726 = vsel %vm574, %v548, 0
        %v729 = vsel %vm574, %v549, 0
        %v732 = vsel %vm574, %v550, 0
        %v735 = vsel %vm574, %v551, 0
        %v738 = vsel %vm574, %v552, 0
        %v741 = vsel %vm574, %v553, 0
        %v744 = vsel %vm574, %v554, 0
        %vm746 = vcmask 1044480
        %vm747 = vcmask 1045504
        %v748 = vsel %vm746, 4294967295, 65535
        %v749 = vsel %vm747, %v748, 0
        %v751 = vand.u32 %v572, %v749
        %753 = vmatpush.bf16.msra.mxu0 0
        %754 = vmatpush.bf16.msra.mxu0 0
        %755 = vmatpush.bf16.msra.mxu0 0
        %756 = vmatpush.bf16.msra.mxu0 0
        %757 = vmatpush.bf16.msra.mxu0 0
        %758 = vmatpush.bf16.msra.mxu0 0
        %759 = vmatpush.bf16.msra.mxu0 %v751
        %760 = vmatpush.bf16.msra.mxu0 %v571
        %761 = vmatmul.bf16.gmra.mxu0 %v576
        %v762 = vpop.f32.mrf.mxu0
        %v763 = vadd.f32 %v561, %v762
        %v764 = vpop.f32.mrf.mxu0
        %v765 = vadd.f32 %v561, %v764
        %766 = vmatmul.bf16.gmra.mxu0 %v579
        %v767 = vpop.f32.mrf.mxu0
        %v768 = vadd.f32 %v561, %v767
        %v769 = vpop.f32.mrf.mxu0
        %v770 = vadd.f32 %v561, %v769
        %771 = vmatmul.bf16.gmra.mxu0 %v582
        %v772 = vpop.f32.mrf.mxu0
        %v773 = vadd.f32 %v561, %v772
        %v774 = vpop.f32.mrf.mxu0
        %v775 = vadd.f32 %v561, %v774
        %776 = vmatmul.bf16.gmra.mxu0 %v585
        %v777 = vpop.f32.mrf.mxu0
        %v778 = vadd.f32 %v561, %v777
        %v779 = vpop.f32.mrf.mxu0
        %v780 = vadd.f32 %v561, %v779
        %781 = vmatmul.bf16.gmra.mxu0 %v588
        %v782 = vpop.f32.mrf.mxu0
        %v783 = vadd.f32 %v561, %v782
        %v784 = vpop.f32.mrf.mxu0
        %v785 = vadd.f32 %v561, %v784
        %786 = vmatmul.bf16.gmra.mxu0 %v591
        %v787 = vpop.f32.mrf.mxu0
        %v788 = vadd.f32 %v561, %v787
        %v789 = vpop.f32.mrf.mxu0
        %v790 = vadd.f32 %v561, %v789
        %791 = vmatmul.bf16.gmra.mxu0 %v594
        %v792 = vpop.f32.mrf.mxu0
        %v793 = vadd.f32 %v561, %v792
        %v794 = vpop.f32.mrf.mxu0
        %v795 = vadd.f32 %v561, %v794
        %796 = vmatmul.bf16.gmra.mxu0 %v597
        %v797 = vpop.f32.mrf.mxu0
        %v798 = vadd.f32 %v561, %v797
        %v799 = vpop.f32.mrf.mxu0
        %v800 = vadd.f32 %v561, %v799
        %801 = vmatmul.bf16.gmra.mxu0 %v600
        %v802 = vpop.f32.mrf.mxu0
        %v803 = vadd.f32 %v561, %v802
        %v804 = vpop.f32.mrf.mxu0
        %v805 = vadd.f32 %v561, %v804
        %806 = vmatmul.bf16.gmra.mxu0 %v603
        %v807 = vpop.f32.mrf.mxu0
        %v808 = vadd.f32 %v561, %v807
        %v809 = vpop.f32.mrf.mxu0
        %v810 = vadd.f32 %v561, %v809
        %811 = vmatmul.bf16.gmra.mxu0 %v606
        %v812 = vpop.f32.mrf.mxu0
        %v813 = vadd.f32 %v561, %v812
        %v814 = vpop.f32.mrf.mxu0
        %v815 = vadd.f32 %v561, %v814
        %816 = vmatmul.bf16.gmra.mxu0 %v609
        %v817 = vpop.f32.mrf.mxu0
        %v818 = vadd.f32 %v561, %v817
        %v819 = vpop.f32.mrf.mxu0
        %v820 = vadd.f32 %v561, %v819
        %821 = vmatmul.bf16.gmra.mxu0 %v612
        %v822 = vpop.f32.mrf.mxu0
        %v823 = vadd.f32 %v561, %v822
        %v824 = vpop.f32.mrf.mxu0
        %v825 = vadd.f32 %v561, %v824
        %826 = vmatmul.bf16.gmra.mxu0 %v615
        %v827 = vpop.f32.mrf.mxu0
        %v828 = vadd.f32 %v561, %v827
        %v829 = vpop.f32.mrf.mxu0
        %v830 = vadd.f32 %v561, %v829
        %831 = vmatmul.bf16.gmra.mxu0 %v618
        %v832 = vpop.f32.mrf.mxu0
        %v833 = vadd.f32 %v561, %v832
        %v834 = vpop.f32.mrf.mxu0
        %v835 = vadd.f32 %v561, %v834
        %836 = vmatmul.bf16.gmra.mxu0 %v621
        %v837 = vpop.f32.mrf.mxu0
        %v838 = vadd.f32 %v561, %v837
        %v839 = vpop.f32.mrf.mxu0
        %v840 = vadd.f32 %v561, %v839
        %841 = vmatmul.bf16.gmra.mxu0 %v624
        %v842 = vpop.f32.mrf.mxu0
        %v843 = vadd.f32 %v561, %v842
        %v844 = vpop.f32.mrf.mxu0
        %v845 = vadd.f32 %v561, %v844
        %846 = vmatmul.bf16.gmra.mxu0 %v627
        %v847 = vpop.f32.mrf.mxu0
        %v848 = vadd.f32 %v561, %v847
        %v849 = vpop.f32.mrf.mxu0
        %v850 = vadd.f32 %v561, %v849
        %851 = vmatmul.bf16.gmra.mxu0 %v630
        %v852 = vpop.f32.mrf.mxu0
        %v853 = vadd.f32 %v561, %v852
        %v854 = vpop.f32.mrf.mxu0
        %v855 = vadd.f32 %v561, %v854
        %856 = vmatmul.bf16.gmra.mxu0 %v633
        %v857 = vpop.f32.mrf.mxu0
        %v858 = vadd.f32 %v561, %v857
        %v859 = vpop.f32.mrf.mxu0
        %v860 = vadd.f32 %v561, %v859
        %861 = vmatmul.bf16.gmra.mxu0 %v636
        %v862 = vpop.f32.mrf.mxu0
        %v863 = vadd.f32 %v561, %v862
        %v864 = vpop.f32.mrf.mxu0
        %v865 = vadd.f32 %v561, %v864
        %866 = vmatmul.bf16.gmra.mxu0 %v639
        %v867 = vpop.f32.mrf.mxu0
        %v868 = vadd.f32 %v561, %v867
        %v869 = vpop.f32.mrf.mxu0
        %v870 = vadd.f32 %v561, %v869
        %871 = vmatmul.bf16.gmra.mxu0 %v642
        %v872 = vpop.f32.mrf.mxu0
        %v873 = vadd.f32 %v561, %v872
        %v874 = vpop.f32.mrf.mxu0
        %v875 = vadd.f32 %v561, %v874
        %876 = vmatmul.bf16.gmra.mxu0 %v645
        %v877 = vpop.f32.mrf.mxu0
        %v878 = vadd.f32 %v561, %v877
        %v879 = vpop.f32.mrf.mxu0
        %v880 = vadd.f32 %v561, %v879
        %881 = vmatmul.bf16.gmra.mxu0 %v648
        %v882 = vpop.f32.mrf.mxu0
        %v883 = vadd.f32 %v561, %v882
        %v884 = vpop.f32.mrf.mxu0
        %v885 = vadd.f32 %v561, %v884
        %886 = vmatmul.bf16.gmra.mxu0 %v651
        %v887 = vpop.f32.mrf.mxu0
        %v888 = vadd.f32 %v561, %v887
        %v889 = vpop.f32.mrf.mxu0
        %v890 = vadd.f32 %v561, %v889
        %891 = vmatmul.bf16.gmra.mxu0 %v654
        %v892 = vpop.f32.mrf.mxu0
        %v893 = vadd.f32 %v561, %v892
        %v894 = vpop.f32.mrf.mxu0
        %v895 = vadd.f32 %v561, %v894
        %896 = vmatmul.bf16.gmra.mxu0 %v657
        %v897 = vpop.f32.mrf.mxu0
        %v898 = vadd.f32 %v561, %v897
        %v899 = vpop.f32.mrf.mxu0
        %v900 = vadd.f32 %v561, %v899
        %901 = vmatmul.bf16.gmra.mxu0 %v660
        %v902 = vpop.f32.mrf.mxu0
        %v903 = vadd.f32 %v561, %v902
        %v904 = vpop.f32.mrf.mxu0
        %v905 = vadd.f32 %v561, %v904
        %906 = vmatmul.bf16.gmra.mxu0 %v663
        %v907 = vpop.f32.mrf.mxu0
        %v908 = vadd.f32 %v561, %v907
        %v909 = vpop.f32.mrf.mxu0
        %v910 = vadd.f32 %v561, %v909
        %911 = vmatmul.bf16.gmra.mxu0 %v666
        %v912 = vpop.f32.mrf.mxu0
        %v913 = vadd.f32 %v561, %v912
        %v914 = vpop.f32.mrf.mxu0
        %v915 = vadd.f32 %v561, %v914
        %916 = vmatmul.bf16.gmra.mxu0 %v669
        %v917 = vpop.f32.mrf.mxu0
        %v918 = vadd.f32 %v561, %v917
        %v919 = vpop.f32.mrf.mxu0
        %v920 = vadd.f32 %v561, %v919
        %921 = vmatmul.bf16.gmra.mxu0 %v672
        %v922 = vpop.f32.mrf.mxu0
        %v923 = vadd.f32 %v561, %v922
        %v924 = vpop.f32.mrf.mxu0
        %v925 = vadd.f32 %v561, %v924
        %926 = vmatmul.bf16.gmra.mxu0 %v675
        %v927 = vpop.f32.mrf.mxu0
        %v928 = vadd.f32 %v561, %v927
        %v929 = vpop.f32.mrf.mxu0
        %v930 = vadd.f32 %v561, %v929
        %931 = vmatmul.bf16.gmra.mxu0 %v678
        %v932 = vpop.f32.mrf.mxu0
        %v933 = vadd.f32 %v561, %v932
        %v934 = vpop.f32.mrf.mxu0
        %v935 = vadd.f32 %v561, %v934
        %936 = vmatmul.bf16.gmra.mxu0 %v681
        %v937 = vpop.f32.mrf.mxu0
        %v938 = vadd.f32 %v561, %v937
        %v939 = vpop.f32.mrf.mxu0
        %v940 = vadd.f32 %v561, %v939
        %941 = vmatmul.bf16.gmra.mxu0 %v684
        %v942 = vpop.f32.mrf.mxu0
        %v943 = vadd.f32 %v561, %v942
        %v944 = vpop.f32.mrf.mxu0
        %v945 = vadd.f32 %v561, %v944
        %946 = vmatmul.bf16.gmra.mxu0 %v687
        %v947 = vpop.f32.mrf.mxu0
        %v948 = vadd.f32 %v561, %v947
        %v949 = vpop.f32.mrf.mxu0
        %v950 = vadd.f32 %v561, %v949
        %951 = vmatmul.bf16.gmra.mxu0 %v690
        %v952 = vpop.f32.mrf.mxu0
        %v953 = vadd.f32 %v561, %v952
        %v954 = vpop.f32.mrf.mxu0
        %v955 = vadd.f32 %v561, %v954
        %956 = vmatmul.bf16.gmra.mxu0 %v693
        %v957 = vpop.f32.mrf.mxu0
        %v958 = vadd.f32 %v561, %v957
        %v959 = vpop.f32.mrf.mxu0
        %v960 = vadd.f32 %v561, %v959
        %961 = vmatmul.bf16.gmra.mxu0 %v696
        %v962 = vpop.f32.mrf.mxu0
        %v963 = vadd.f32 %v561, %v962
        %v964 = vpop.f32.mrf.mxu0
        %v965 = vadd.f32 %v561, %v964
        %966 = vmatmul.bf16.gmra.mxu0 %v699
        %v967 = vpop.f32.mrf.mxu0
        %v968 = vadd.f32 %v561, %v967
        %v969 = vpop.f32.mrf.mxu0
        %v970 = vadd.f32 %v561, %v969
        %971 = vmatmul.bf16.gmra.mxu0 %v702
        %v972 = vpop.f32.mrf.mxu0
        %v973 = vadd.f32 %v561, %v972
        %v974 = vpop.f32.mrf.mxu0
        %v975 = vadd.f32 %v561, %v974
        %976 = vmatmul.bf16.gmra.mxu0 %v705
        %v977 = vpop.f32.mrf.mxu0
        %v978 = vadd.f32 %v561, %v977
        %v979 = vpop.f32.mrf.mxu0
        %v980 = vadd.f32 %v561, %v979
        %981 = vmatmul.bf16.gmra.mxu0 %v708
        %v982 = vpop.f32.mrf.mxu0
        %v983 = vadd.f32 %v561, %v982
        %v984 = vpop.f32.mrf.mxu0
        %v985 = vadd.f32 %v561, %v984
        %986 = vmatmul.bf16.gmra.mxu0 %v711
        %v987 = vpop.f32.mrf.mxu0
        %v988 = vadd.f32 %v561, %v987
        %v989 = vpop.f32.mrf.mxu0
        %v990 = vadd.f32 %v561, %v989
        %991 = vmatmul.bf16.gmra.mxu0 %v714
        %v992 = vpop.f32.mrf.mxu0
        %v993 = vadd.f32 %v561, %v992
        %v994 = vpop.f32.mrf.mxu0
        %v995 = vadd.f32 %v561, %v994
        %996 = vmatmul.bf16.gmra.mxu0 %v717
        %v997 = vpop.f32.mrf.mxu0
        %v998 = vadd.f32 %v561, %v997
        %v999 = vpop.f32.mrf.mxu0
        %v1000 = vadd.f32 %v561, %v999
        %1001 = vmatmul.bf16.gmra.mxu0 %v720
        %v1002 = vpop.f32.mrf.mxu0
        %v1003 = vadd.f32 %v561, %v1002
        %v1004 = vpop.f32.mrf.mxu0
        %v1005 = vadd.f32 %v561, %v1004
        %1006 = vmatmul.bf16.gmra.mxu0 %v723
        %v1007 = vpop.f32.mrf.mxu0
        %v1008 = vadd.f32 %v561, %v1007
        %v1009 = vpop.f32.mrf.mxu0
        %v1010 = vadd.f32 %v561, %v1009
        %1011 = vmatmul.bf16.gmra.mxu0 %v726
        %v1012 = vpop.f32.mrf.mxu0
        %v1013 = vadd.f32 %v561, %v1012
        %v1014 = vpop.f32.mrf.mxu0
        %v1015 = vadd.f32 %v561, %v1014
        %1016 = vmatmul.bf16.gmra.mxu0 %v729
        %v1017 = vpop.f32.mrf.mxu0
        %v1018 = vadd.f32 %v561, %v1017
        %v1019 = vpop.f32.mrf.mxu0
        %v1020 = vadd.f32 %v561, %v1019
        %1021 = vmatmul.bf16.gmra.mxu0 %v732
        %v1022 = vpop.f32.mrf.mxu0
        %v1023 = vadd.f32 %v561, %v1022
        %v1024 = vpop.f32.mrf.mxu0
        %v1025 = vadd.f32 %v561, %v1024
        %1026 = vmatmul.bf16.gmra.mxu0 %v735
        %v1027 = vpop.f32.mrf.mxu0
        %v1028 = vadd.f32 %v561, %v1027
        %v1029 = vpop.f32.mrf.mxu0
        %v1030 = vadd.f32 %v561, %v1029
        %1031 = vmatmul.bf16.gmra.mxu0 %v738
        %v1032 = vpop.f32.mrf.mxu0
        %v1033 = vadd.f32 %v561, %v1032
        %v1034 = vpop.f32.mrf.mxu0
        %v1035 = vadd.f32 %v561, %v1034
        %1036 = vmatmul.bf16.gmra.mxu0 %v741
        %v1037 = vpop.f32.mrf.mxu0
        %v1038 = vadd.f32 %v561, %v1037
        %v1039 = vpop.f32.mrf.mxu0
        %v1040 = vadd.f32 %v561, %v1039
        %1041 = vmatmul.bf16.gmra.mxu0 %v744
        %v1042 = vpop.f32.mrf.mxu0
        %v1043 = vadd.f32 %v561, %v1042
        %v1044 = vpop.f32.mrf.mxu0
        %1045 = vdwg.mxu0
        %v1046 = vmax.f32 %v763, 0.0
        %v1047 = vmax.f32 %v765, 0.0
        %v1048 = vmax.f32 %v768, 0.0
        %v1049 = vmax.f32 %v770, 0.0
        %v1050 = vmax.f32 %v773, 0.0
        %v1051 = vmax.f32 %v775, 0.0
        %v1052 = vmax.f32 %v778, 0.0
        %v1053 = vmax.f32 %v780, 0.0
        %v1054 = vmax.f32 %v783, 0.0
        %v1055 = vmax.f32 %v785, 0.0
        %v1056 = vmax.f32 %v788, 0.0
        %v1057 = vmax.f32 %v790, 0.0
        %v1058 = vmax.f32 %v793, 0.0
        %v1059 = vmax.f32 %v795, 0.0
        %v1060 = vmax.f32 %v798, 0.0
        %v1061 = vmax.f32 %v800, 0.0
        %v1062 = vmax.f32 %v803, 0.0
        %v1063 = vmax.f32 %v805, 0.0
        %v1064 = vmax.f32 %v808, 0.0
        %v1065 = vmax.f32 %v810, 0.0
        %v1066 = vmax.f32 %v813, 0.0
        %v1067 = vmax.f32 %v815, 0.0
        %v1068 = vmax.f32 %v818, 0.0
        %v1069 = vmax.f32 %v820, 0.0
        %v1070 = vmax.f32 %v823, 0.0
        %v1071 = vmax.f32 %v825, 0.0
        %v1072 = vmax.f32 %v828, 0.0
        %v1073 = vmax.f32 %v830, 0.0
        %v1074 = vmax.f32 %v833, 0.0
        %v1075 = vmax.f32 %v835, 0.0
        %v1076 = vmax.f32 %v838, 0.0
        %v1077 = vmax.f32 %v840, 0.0
        %v1078 = vmax.f32 %v843, 0.0
        %v1079 = vmax.f32 %v845, 0.0
        %v1080 = vmax.f32 %v848, 0.0
        %v1081 = vmax.f32 %v850, 0.0
        %v1082 = vmax.f32 %v853, 0.0
        %v1083 = vmax.f32 %v855, 0.0
        %v1084 = vmax.f32 %v858, 0.0
        %v1085 = vmax.f32 %v860, 0.0
        %v1086 = vmax.f32 %v863, 0.0
        %v1087 = vmax.f32 %v865, 0.0
        %v1088 = vmax.f32 %v868, 0.0
        %v1089 = vmax.f32 %v870, 0.0
        %v1090 = vmax.f32 %v873, 0.0
        %v1091 = vmax.f32 %v875, 0.0
        %v1092 = vmax.f32 %v878, 0.0
        %v1093 = vmax.f32 %v880, 0.0
        %v1094 = vmax.f32 %v883, 0.0
        %v1095 = vmax.f32 %v885, 0.0
        %v1096 = vmax.f32 %v888, 0.0
        %v1097 = vmax.f32 %v890, 0.0
        %v1098 = vmax.f32 %v893, 0.0
        %v1099 = vmax.f32 %v895, 0.0
        %v1100 = vmax.f32 %v898, 0.0
        %v1101 = vmax.f32 %v900, 0.0
        %v1102 = vmax.f32 %v903, 0.0
        %v1103 = vmax.f32 %v905, 0.0
        %v1104 = vmax.f32 %v908, 0.0
        %v1105 = vmax.f32 %v910, 0.0
        %v1106 = vmax.f32 %v913, 0.0
        %v1107 = vmax.f32 %v915, 0.0
        %v1108 = vmax.f32 %v918, 0.0
        %v1109 = vmax.f32 %v920, 0.0
        %v1110 = vmax.f32 %v923, 0.0
        %v1111 = vmax.f32 %v925, 0.0
        %v1112 = vmax.f32 %v928, 0.0
        %v1113 = vmax.f32 %v930, 0.0
        %v1114 = vmax.f32 %v933, 0.0
        %v1115 = vmax.f32 %v935, 0.0
        %v1116 = vmax.f32 %v938, 0.0
        %v1117 = vmax.f32 %v940, 0.0
        %v1118 = vmax.f32 %v943, 0.0
        %v1119 = vmax.f32 %v945, 0.0
        %v1120 = vmax.f32 %v948, 0.0
        %v1121 = vmax.f32 %v950, 0.0
        %v1122 = vmax.f32 %v953, 0.0
        %v1123 = vmax.f32 %v955, 0.0
        %v1124 = vmax.f32 %v958, 0.0
        %v1125 = vmax.f32 %v960, 0.0
        %v1126 = vmax.f32 %v963, 0.0
        %v1127 = vmax.f32 %v965, 0.0
        %v1128 = vmax.f32 %v968, 0.0
        %v1129 = vmax.f32 %v970, 0.0
        %v1130 = vmax.f32 %v973, 0.0
        %v1131 = vmax.f32 %v975, 0.0
        %v1132 = vmax.f32 %v978, 0.0
        %v1133 = vmax.f32 %v980, 0.0
        %v1134 = vmax.f32 %v983, 0.0
        %v1135 = vmax.f32 %v985, 0.0
        %v1136 = vmax.f32 %v988, 0.0
        %v1137 = vmax.f32 %v990, 0.0
        %v1138 = vmax.f32 %v993, 0.0
        %v1139 = vmax.f32 %v995, 0.0
        %v1140 = vmax.f32 %v998, 0.0
        %v1141 = vmax.f32 %v1000, 0.0
        %v1142 = vmax.f32 %v1003, 0.0
        %v1143 = vmax.f32 %v1005, 0.0
        %v1144 = vmax.f32 %v1008, 0.0
        %v1145 = vmax.f32 %v1010, 0.0
        %v1146 = vmax.f32 %v1013, 0.0
        %v1147 = vmax.f32 %v1015, 0.0
        %v1148 = vmax.f32 %v1018, 0.0
        %v1149 = vmax.f32 %v1020, 0.0
        %v1150 = vmax.f32 %v1023, 0.0
        %v1151 = vmax.f32 %v1025, 0.0
        %v1152 = vmax.f32 %v1028, 0.0
        %v1153 = vmax.f32 %v1030, 0.0
        %v1154 = vmax.f32 %v1033, 0.0
        %v1155 = vmax.f32 %v1035, 0.0
        %v1156 = vmax.f32 %v1038, 0.0
        %v1157 = vmax.f32 %v1040, 0.0
        %v1158 = vmax.f32 %v1043, 0.0
        %vm1272 = vcmask 1046528
        %v1273 = vrot.slane %v1046, 1
        %v1274 = vrot.slane %v1047, 1
        %v1275 = vsel %vm1272, %v1273, %v1274
        %v1276 = vrot.slane %v1048, 1
        %v1277 = vsel %vm1272, %v1274, %v1276
        %v1278 = vrot.slane %v1049, 1
        %v1279 = vsel %vm1272, %v1276, %v1278
        %v1280 = vrot.slane %v1050, 1
        %v1281 = vsel %vm1272, %v1278, %v1280
        %v1282 = vrot.slane %v1051, 1
        %v1283 = vsel %vm1272, %v1280, %v1282
        %v1284 = vrot.slane %v1052, 1
        %v1285 = vsel %vm1272, %v1282, %v1284
        %v1286 = vrot.slane %v1053, 1
        %v1287 = vsel %vm1272, %v1284, %v1286
        %v1288 = vrot.slane %v1054, 1
        %v1289 = vsel %vm1272, %v1286, %v1288
        %v1290 = vrot.slane %v1055, 1
        %v1291 = vsel %vm1272, %v1288, %v1290
        %v1292 = vrot.slane %v1056, 1
        %v1293 = vsel %vm1272, %v1290, %v1292
        %v1294 = vrot.slane %v1057, 1
        %v1295 = vsel %vm1272, %v1292, %v1294
        %v1296 = vrot.slane %v1058, 1
        %v1297 = vsel %vm1272, %v1294, %v1296
        %v1298 = vrot.slane %v1059, 1
        %v1299 = vsel %vm1272, %v1296, %v1298
        %v1300 = vrot.slane %v1060, 1
        %v1301 = vsel %vm1272, %v1298, %v1300
        %v1302 = vrot.slane %v1061, 1
        %v1303 = vsel %vm1272, %v1300, %v1302
        %v1304 = vrot.slane %v1062, 1
        %v1305 = vsel %vm1272, %v1302, %v1304
        %v1306 = vrot.slane %v1063, 1
        %v1307 = vsel %vm1272, %v1304, %v1306
        %v1308 = vrot.slane %v1064, 1
        %v1309 = vsel %vm1272, %v1306, %v1308
        %v1310 = vrot.slane %v1065, 1
        %v1311 = vsel %vm1272, %v1308, %v1310
        %v1312 = vrot.slane %v1066, 1
        %v1313 = vsel %vm1272, %v1310, %v1312
        %v1314 = vrot.slane %v1067, 1
        %v1315 = vsel %vm1272, %v1312, %v1314
        %v1316 = vrot.slane %v1068, 1
        %v1317 = vsel %vm1272, %v1314, %v1316
        %v1318 = vrot.slane %v1069, 1
        %v1319 = vsel %vm1272, %v1316, %v1318
        %v1320 = vrot.slane %v1070, 1
        %v1321 = vsel %vm1272, %v1318, %v1320
        %v1322 = vrot.slane %v1071, 1
        %v1323 = vsel %vm1272, %v1320, %v1322
        %v1324 = vrot.slane %v1072, 1
        %v1325 = vsel %vm1272, %v1322, %v1324
        %v1326 = vrot.slane %v1073, 1
        %v1327 = vsel %vm1272, %v1324, %v1326
        %v1328 = vrot.slane %v1074, 1
        %v1329 = vsel %vm1272, %v1326, %v1328
        %v1330 = vrot.slane %v1075, 1
        %v1331 = vsel %vm1272, %v1328, %v1330
        %v1332 = vrot.slane %v1076, 1
        %v1333 = vsel %vm1272, %v1330, %v1332
        %v1334 = vrot.slane %v1077, 1
        %v1335 = vsel %vm1272, %v1332, %v1334
        %v1336 = vrot.slane %v1078, 1
        %v1337 = vsel %vm1272, %v1334, %v1336
        %v1338 = vrot.slane %v1079, 1
        %v1339 = vsel %vm1272, %v1336, %v1338
        %v1340 = vrot.slane %v1080, 1
        %v1341 = vsel %vm1272, %v1338, %v1340
        %v1342 = vrot.slane %v1081, 1
        %v1343 = vsel %vm1272, %v1340, %v1342
        %v1344 = vrot.slane %v1082, 1
        %v1345 = vsel %vm1272, %v1342, %v1344
        %v1346 = vrot.slane %v1083, 1
        %v1347 = vsel %vm1272, %v1344, %v1346
        %v1348 = vrot.slane %v1084, 1
        %v1349 = vsel %vm1272, %v1346, %v1348
        %v1350 = vrot.slane %v1085, 1
        %v1351 = vsel %vm1272, %v1348, %v1350
        %v1352 = vrot.slane %v1086, 1
        %v1353 = vsel %vm1272, %v1350, %v1352
        %v1354 = vrot.slane %v1087, 1
        %v1355 = vsel %vm1272, %v1352, %v1354
        %v1356 = vrot.slane %v1088, 1
        %v1357 = vsel %vm1272, %v1354, %v1356
        %v1358 = vrot.slane %v1089, 1
        %v1359 = vsel %vm1272, %v1356, %v1358
        %v1360 = vrot.slane %v1090, 1
        %v1361 = vsel %vm1272, %v1358, %v1360
        %v1362 = vrot.slane %v1091, 1
        %v1363 = vsel %vm1272, %v1360, %v1362
        %v1364 = vrot.slane %v1092, 1
        %v1365 = vsel %vm1272, %v1362, %v1364
        %v1366 = vrot.slane %v1093, 1
        %v1367 = vsel %vm1272, %v1364, %v1366
        %v1368 = vrot.slane %v1094, 1
        %v1369 = vsel %vm1272, %v1366, %v1368
        %v1370 = vrot.slane %v1095, 1
        %v1371 = vsel %vm1272, %v1368, %v1370
        %v1372 = vrot.slane %v1096, 1
        %v1373 = vsel %vm1272, %v1370, %v1372
        %v1374 = vrot.slane %v1097, 1
        %v1375 = vsel %vm1272, %v1372, %v1374
        %v1376 = vrot.slane %v1098, 1
        %v1377 = vsel %vm1272, %v1374, %v1376
        %v1378 = vrot.slane %v1099, 1
        %v1379 = vsel %vm1272, %v1376, %v1378
        %v1380 = vrot.slane %v1100, 1
        %v1381 = vsel %vm1272, %v1378, %v1380
        %v1382 = vrot.slane %v1101, 1
        %v1383 = vsel %vm1272, %v1380, %v1382
        %v1384 = vrot.slane %v1102, 1
        %v1385 = vsel %vm1272, %v1382, %v1384
        %v1386 = vrot.slane %v1103, 1
        %v1387 = vsel %vm1272, %v1384, %v1386
        %v1388 = vrot.slane %v1104, 1
        %v1389 = vsel %vm1272, %v1386, %v1388
        %v1390 = vrot.slane %v1105, 1
        %v1391 = vsel %vm1272, %v1388, %v1390
        %v1392 = vrot.slane %v1106, 1
        %v1393 = vsel %vm1272, %v1390, %v1392
        %v1394 = vrot.slane %v1107, 1
        %v1395 = vsel %vm1272, %v1392, %v1394
        %v1396 = vrot.slane %v1108, 1
        %v1397 = vsel %vm1272, %v1394, %v1396
        %v1398 = vrot.slane %v1109, 1
        %v1399 = vsel %vm1272, %v1396, %v1398
        %v1400 = vrot.slane %v1110, 1
        %v1401 = vsel %vm1272, %v1398, %v1400
        %v1402 = vrot.slane %v1111, 1
        %v1403 = vsel %vm1272, %v1400, %v1402
        %v1404 = vrot.slane %v1112, 1
        %v1405 = vsel %vm1272, %v1402, %v1404
        %v1406 = vrot.slane %v1113, 1
        %v1407 = vsel %vm1272, %v1404, %v1406
        %v1408 = vrot.slane %v1114, 1
        %v1409 = vsel %vm1272, %v1406, %v1408
        %v1410 = vrot.slane %v1115, 1
        %v1411 = vsel %vm1272, %v1408, %v1410
        %v1412 = vrot.slane %v1116, 1
        %v1413 = vsel %vm1272, %v1410, %v1412
        %v1414 = vrot.slane %v1117, 1
        %v1415 = vsel %vm1272, %v1412, %v1414
        %v1416 = vrot.slane %v1118, 1
        %v1417 = vsel %vm1272, %v1414, %v1416
        %v1418 = vrot.slane %v1119, 1
        %v1419 = vsel %vm1272, %v1416, %v1418
        %v1420 = vrot.slane %v1120, 1
        %v1421 = vsel %vm1272, %v1418, %v1420
        %v1422 = vrot.slane %v1121, 1
        %v1423 = vsel %vm1272, %v1420, %v1422
        %v1424 = vrot.slane %v1122, 1
        %v1425 = vsel %vm1272, %v1422, %v1424
        %v1426 = vrot.slane %v1123, 1
        %v1427 = vsel %vm1272, %v1424, %v1426
        %v1428 = vrot.slane %v1124, 1
        %v1429 = vsel %vm1272, %v1426, %v1428
        %v1430 = vrot.slane %v1125, 1
        %v1431 = vsel %vm1272, %v1428, %v1430
        %v1432 = vrot.slane %v1126, 1
        %v1433 = vsel %vm1272, %v1430, %v1432
        %v1434 = vrot.slane %v1127, 1
        %v1435 = vsel %vm1272, %v1432, %v1434
        %v1436 = vrot.slane %v1128, 1
        %v1437 = vsel %vm1272, %v1434, %v1436
        %v1438 = vrot.slane %v1129, 1
        %v1439 = vsel %vm1272, %v1436, %v1438
        %v1440 = vrot.slane %v1130, 1
        %v1441 = vsel %vm1272, %v1438, %v1440
        %v1442 = vrot.slane %v1131, 1
        %v1443 = vsel %vm1272, %v1440, %v1442
        %v1444 = vrot.slane %v1132, 1
        %v1445 = vsel %vm1272, %v1442, %v1444
        %v1446 = vrot.slane %v1133, 1
        %v1447 = vsel %vm1272, %v1444, %v1446
        %v1448 = vrot.slane %v1134, 1
        %v1449 = vsel %vm1272, %v1446, %v1448
        %v1450 = vrot.slane %v1135, 1
        %v1451 = vsel %vm1272, %v1448, %v1450
        %v1452 = vrot.slane %v1136, 1
        %v1453 = vsel %vm1272, %v1450, %v1452
        %v1454 = vrot.slane %v1137, 1
        %v1455 = vsel %vm1272, %v1452, %v1454
        %v1456 = vrot.slane %v1138, 1
        %v1457 = vsel %vm1272, %v1454, %v1456
        %v1458 = vrot.slane %v1139, 1
        %v1459 = vsel %vm1272, %v1456, %v1458
        %v1460 = vrot.slane %v1140, 1
        %v1461 = vsel %vm1272, %v1458, %v1460
        %v1462 = vrot.slane %v1141, 1
        %v1463 = vsel %vm1272, %v1460, %v1462
        %v1464 = vrot.slane %v1142, 1
        %v1465 = vsel %vm1272, %v1462, %v1464
        %v1466 = vrot.slane %v1143, 1
        %v1467 = vsel %vm1272, %v1464, %v1466
        %v1468 = vrot.slane %v1144, 1
        %v1469 = vsel %vm1272, %v1466, %v1468
        %v1470 = vrot.slane %v1145, 1
        %v1471 = vsel %vm1272, %v1468, %v1470
        %v1472 = vrot.slane %v1146, 1
        %v1473 = vsel %vm1272, %v1470, %v1472
        %v1474 = vrot.slane %v1147, 1
        %v1475 = vsel %vm1272, %v1472, %v1474
        %v1476 = vrot.slane %v1148, 1
        %v1477 = vsel %vm1272, %v1474, %v1476
        %v1478 = vrot.slane %v1149, 1
        %v1479 = vsel %vm1272, %v1476, %v1478
        %v1480 = vrot.slane %v1150, 1
        %v1481 = vsel %vm1272, %v1478, %v1480
        %v1482 = vrot.slane %v1151, 1
        %v1483 = vsel %vm1272, %v1480, %v1482
        %v1484 = vrot.slane %v1152, 1
        %v1485 = vsel %vm1272, %v1482, %v1484
        %v1486 = vrot.slane %v1153, 1
        %v1487 = vsel %vm1272, %v1484, %v1486
        %v1488 = vrot.slane %v1154, 1
        %v1489 = vsel %vm1272, %v1486, %v1488
        %v1490 = vrot.slane %v1155, 1
        %v1491 = vsel %vm1272, %v1488, %v1490
        %v1492 = vrot.slane %v1156, 1
        %v1493 = vsel %vm1272, %v1490, %v1492
        %v1494 = vrot.slane %v1157, 1
        %v1495 = vsel %vm1272, %v1492, %v1494
        %v1496 = vrot.slane %v1158, 1
        %v1497 = vsel %vm1272, %v1494, %v1496
        %v1611 = vmax.f32 %v1046, %v1275
        %v1612 = vmax.f32 %v1047, %v1277
        %v1613 = vmax.f32 %v1048, %v1279
        %v1614 = vmax.f32 %v1049, %v1281
        %v1615 = vmax.f32 %v1050, %v1283
        %v1616 = vmax.f32 %v1051, %v1285
        %v1617 = vmax.f32 %v1052, %v1287
        %v1618 = vmax.f32 %v1053, %v1289
        %v1619 = vmax.f32 %v1054, %v1291
        %v1620 = vmax.f32 %v1055, %v1293
        %v1621 = vmax.f32 %v1056, %v1295
        %v1622 = vmax.f32 %v1057, %v1297
        %v1623 = vmax.f32 %v1058, %v1299
        %v1624 = vmax.f32 %v1059, %v1301
        %v1625 = vmax.f32 %v1060, %v1303
        %v1626 = vmax.f32 %v1061, %v1305
        %v1627 = vmax.f32 %v1062, %v1307
        %v1628 = vmax.f32 %v1063, %v1309
        %v1629 = vmax.f32 %v1064, %v1311
        %v1630 = vmax.f32 %v1065, %v1313
        %v1631 = vmax.f32 %v1066, %v1315
        %v1632 = vmax.f32 %v1067, %v1317
        %v1633 = vmax.f32 %v1068, %v1319
        %v1634 = vmax.f32 %v1069, %v1321
        %v1635 = vmax.f32 %v1070, %v1323
        %v1636 = vmax.f32 %v1071, %v1325
        %v1637 = vmax.f32 %v1072, %v1327
        %v1638 = vmax.f32 %v1073, %v1329
        %v1639 = vmax.f32 %v1074, %v1331
        %v1640 = vmax.f32 %v1075, %v1333
        %v1641 = vmax.f32 %v1076, %v1335
        %v1642 = vmax.f32 %v1077, %v1337
        %v1643 = vmax.f32 %v1078, %v1339
        %v1644 = vmax.f32 %v1079, %v1341
        %v1645 = vmax.f32 %v1080, %v1343
        %v1646 = vmax.f32 %v1081, %v1345
        %v1647 = vmax.f32 %v1082, %v1347
        %v1648 = vmax.f32 %v1083, %v1349
        %v1649 = vmax.f32 %v1084, %v1351
        %v1650 = vmax.f32 %v1085, %v1353
        %v1651 = vmax.f32 %v1086, %v1355
        %v1652 = vmax.f32 %v1087, %v1357
        %v1653 = vmax.f32 %v1088, %v1359
        %v1654 = vmax.f32 %v1089, %v1361
        %v1655 = vmax.f32 %v1090, %v1363
        %v1656 = vmax.f32 %v1091, %v1365
        %v1657 = vmax.f32 %v1092, %v1367
        %v1658 = vmax.f32 %v1093, %v1369
        %v1659 = vmax.f32 %v1094, %v1371
        %v1660 = vmax.f32 %v1095, %v1373
        %v1661 = vmax.f32 %v1096, %v1375
        %v1662 = vmax.f32 %v1097, %v1377
        %v1663 = vmax.f32 %v1098, %v1379
        %v1664 = vmax.f32 %v1099, %v1381
        %v1665 = vmax.f32 %v1100, %v1383
        %v1666 = vmax.f32 %v1101, %v1385
        %v1667 = vmax.f32 %v1102, %v1387
        %v1668 = vmax.f32 %v1103, %v1389
        %v1669 = vmax.f32 %v1104, %v1391
        %v1670 = vmax.f32 %v1105, %v1393
        %v1671 = vmax.f32 %v1106, %v1395
        %v1672 = vmax.f32 %v1107, %v1397
        %v1673 = vmax.f32 %v1108, %v1399
        %v1674 = vmax.f32 %v1109, %v1401
        %v1675 = vmax.f32 %v1110, %v1403
        %v1676 = vmax.f32 %v1111, %v1405
        %v1677 = vmax.f32 %v1112, %v1407
        %v1678 = vmax.f32 %v1113, %v1409
        %v1679 = vmax.f32 %v1114, %v1411
        %v1680 = vmax.f32 %v1115, %v1413
        %v1681 = vmax.f32 %v1116, %v1415
        %v1682 = vmax.f32 %v1117, %v1417
        %v1683 = vmax.f32 %v1118, %v1419
        %v1684 = vmax.f32 %v1119, %v1421
        %v1685 = vmax.f32 %v1120, %v1423
        %v1686 = vmax.f32 %v1121, %v1425
        %v1687 = vmax.f32 %v1122, %v1427
        %v1688 = vmax.f32 %v1123, %v1429
        %v1689 = vmax.f32 %v1124, %v1431
        %v1690 = vmax.f32 %v1125, %v1433
        %v1691 = vmax.f32 %v1126, %v1435
        %v1692 = vmax.f32 %v1127, %v1437
        %v1693 = vmax.f32 %v1128, %v1439
        %v1694 = vmax.f32 %v1129, %v1441
        %v1695 = vmax.f32 %v1130, %v1443
        %v1696 = vmax.f32 %v1131, %v1445
        %v1697 = vmax.f32 %v1132, %v1447
        %v1698 = vmax.f32 %v1133, %v1449
        %v1699 = vmax.f32 %v1134, %v1451
        %v1700 = vmax.f32 %v1135, %v1453
        %v1701 = vmax.f32 %v1136, %v1455
        %v1702 = vmax.f32 %v1137, %v1457
        %v1703 = vmax.f32 %v1138, %v1459
        %v1704 = vmax.f32 %v1139, %v1461
        %v1705 = vmax.f32 %v1140, %v1463
        %v1706 = vmax.f32 %v1141, %v1465
        %v1707 = vmax.f32 %v1142, %v1467
        %v1708 = vmax.f32 %v1143, %v1469
        %v1709 = vmax.f32 %v1144, %v1471
        %v1710 = vmax.f32 %v1145, %v1473
        %v1711 = vmax.f32 %v1146, %v1475
        %v1712 = vmax.f32 %v1147, %v1477
        %v1713 = vmax.f32 %v1148, %v1479
        %v1714 = vmax.f32 %v1149, %v1481
        %v1715 = vmax.f32 %v1150, %v1483
        %v1716 = vmax.f32 %v1151, %v1485
        %v1717 = vmax.f32 %v1152, %v1487
        %v1718 = vmax.f32 %v1153, %v1489
        %v1719 = vmax.f32 %v1154, %v1491
        %v1720 = vmax.f32 %v1155, %v1493
        %v1721 = vmax.f32 %v1156, %v1495
        %v1722 = vmax.f32 %v1157, %v1497
        %v1723 = vmax.f32 %v1158, %v1496
        %vm1834 = vcmask 1041408
        %v1835 = vrot.slane %v1614, 6
        %v1836 = vrot.slane %v1615, 6
        %v1837 = vsel %vm1834, %v1835, %v1836
        %v1838 = vrot.slane %v1616, 6
        %v1839 = vsel %vm1834, %v1836, %v1838
        %v1840 = vrot.slane %v1617, 6
        %v1841 = vsel %vm1834, %v1838, %v1840
        %v1842 = vrot.slane %v1618, 6
        %v1843 = vsel %vm1834, %v1840, %v1842
        %v1844 = vrot.slane %v1619, 6
        %v1845 = vsel %vm1834, %v1842, %v1844
        %v1846 = vrot.slane %v1620, 6
        %v1847 = vsel %vm1834, %v1844, %v1846
        %v1848 = vrot.slane %v1621, 6
        %v1849 = vsel %vm1834, %v1846, %v1848
        %v1850 = vrot.slane %v1622, 6
        %v1851 = vsel %vm1834, %v1848, %v1850
        %v1852 = vrot.slane %v1623, 6
        %v1853 = vsel %vm1834, %v1850, %v1852
        %v1854 = vrot.slane %v1624, 6
        %v1855 = vsel %vm1834, %v1852, %v1854
        %v1856 = vrot.slane %v1625, 6
        %v1857 = vsel %vm1834, %v1854, %v1856
        %v1858 = vrot.slane %v1626, 6
        %v1859 = vsel %vm1834, %v1856, %v1858
        %v1860 = vrot.slane %v1627, 6
        %v1861 = vsel %vm1834, %v1858, %v1860
        %v1862 = vrot.slane %v1628, 6
        %v1863 = vsel %vm1834, %v1860, %v1862
        %v1864 = vrot.slane %v1629, 6
        %v1865 = vsel %vm1834, %v1862, %v1864
        %v1866 = vrot.slane %v1630, 6
        %v1867 = vsel %vm1834, %v1864, %v1866
        %v1868 = vrot.slane %v1631, 6
        %v1869 = vsel %vm1834, %v1866, %v1868
        %v1870 = vrot.slane %v1632, 6
        %v1871 = vsel %vm1834, %v1868, %v1870
        %v1872 = vrot.slane %v1633, 6
        %v1873 = vsel %vm1834, %v1870, %v1872
        %v1874 = vrot.slane %v1634, 6
        %v1875 = vsel %vm1834, %v1872, %v1874
        %v1876 = vrot.slane %v1635, 6
        %v1877 = vsel %vm1834, %v1874, %v1876
        %v1878 = vrot.slane %v1636, 6
        %v1879 = vsel %vm1834, %v1876, %v1878
        %v1880 = vrot.slane %v1637, 6
        %v1881 = vsel %vm1834, %v1878, %v1880
        %v1882 = vrot.slane %v1638, 6
        %v1883 = vsel %vm1834, %v1880, %v1882
        %v1884 = vrot.slane %v1639, 6
        %v1885 = vsel %vm1834, %v1882, %v1884
        %v1886 = vrot.slane %v1640, 6
        %v1887 = vsel %vm1834, %v1884, %v1886
        %v1888 = vrot.slane %v1641, 6
        %v1889 = vsel %vm1834, %v1886, %v1888
        %v1890 = vrot.slane %v1642, 6
        %v1891 = vsel %vm1834, %v1888, %v1890
        %v1892 = vrot.slane %v1643, 6
        %v1893 = vsel %vm1834, %v1890, %v1892
        %v1894 = vrot.slane %v1644, 6
        %v1895 = vsel %vm1834, %v1892, %v1894
        %v1896 = vrot.slane %v1645, 6
        %v1897 = vsel %vm1834, %v1894, %v1896
        %v1898 = vrot.slane %v1646, 6
        %v1899 = vsel %vm1834, %v1896, %v1898
        %v1900 = vrot.slane %v1647, 6
        %v1901 = vsel %vm1834, %v1898, %v1900
        %v1902 = vrot.slane %v1648, 6
        %v1903 = vsel %vm1834, %v1900, %v1902
        %v1904 = vrot.slane %v1649, 6
        %v1905 = vsel %vm1834, %v1902, %v1904
        %v1906 = vrot.slane %v1650, 6
        %v1907 = vsel %vm1834, %v1904, %v1906
        %v1908 = vrot.slane %v1651, 6
        %v1909 = vsel %vm1834, %v1906, %v1908
        %v1910 = vrot.slane %v1652, 6
        %v1911 = vsel %vm1834, %v1908, %v1910
        %v1912 = vrot.slane %v1653, 6
        %v1913 = vsel %vm1834, %v1910, %v1912
        %v1914 = vrot.slane %v1654, 6
        %v1915 = vsel %vm1834, %v1912, %v1914
        %v1916 = vrot.slane %v1655, 6
        %v1917 = vsel %vm1834, %v1914, %v1916
        %v1918 = vrot.slane %v1656, 6
        %v1919 = vsel %vm1834, %v1916, %v1918
        %v1920 = vrot.slane %v1657, 6
        %v1921 = vsel %vm1834, %v1918, %v1920
        %v1922 = vrot.slane %v1658, 6
        %v1923 = vsel %vm1834, %v1920, %v1922
        %v1924 = vrot.slane %v1659, 6
        %v1925 = vsel %vm1834, %v1922, %v1924
        %v1926 = vrot.slane %v1660, 6
        %v1927 = vsel %vm1834, %v1924, %v1926
        %v1928 = vrot.slane %v1661, 6
        %v1929 = vsel %vm1834, %v1926, %v1928
        %v1930 = vrot.slane %v1662, 6
        %v1931 = vsel %vm1834, %v1928, %v1930
        %v1932 = vrot.slane %v1663, 6
        %v1933 = vsel %vm1834, %v1930, %v1932
        %v1934 = vrot.slane %v1664, 6
        %v1935 = vsel %vm1834, %v1932, %v1934
        %v1936 = vrot.slane %v1665, 6
        %v1937 = vsel %vm1834, %v1934, %v1936
        %v1938 = vrot.slane %v1666, 6
        %v1939 = vsel %vm1834, %v1936, %v1938
        %v1940 = vrot.slane %v1667, 6
        %v1941 = vsel %vm1834, %v1938, %v1940
        %v1942 = vrot.slane %v1668, 6
        %v1943 = vsel %vm1834, %v1940, %v1942
        %v1944 = vrot.slane %v1669, 6
        %v1945 = vsel %vm1834, %v1942, %v1944
        %v1946 = vrot.slane %v1670, 6
        %v1947 = vsel %vm1834, %v1944, %v1946
        %v1948 = vrot.slane %v1671, 6
        %v1949 = vsel %vm1834, %v1946, %v1948
        %v1950 = vrot.slane %v1672, 6
        %v1951 = vsel %vm1834, %v1948, %v1950
        %v1952 = vrot.slane %v1673, 6
        %v1953 = vsel %vm1834, %v1950, %v1952
        %v1954 = vrot.slane %v1674, 6
        %v1955 = vsel %vm1834, %v1952, %v1954
        %v1956 = vrot.slane %v1675, 6
        %v1957 = vsel %vm1834, %v1954, %v1956
        %v1958 = vrot.slane %v1676, 6
        %v1959 = vsel %vm1834, %v1956, %v1958
        %v1960 = vrot.slane %v1677, 6
        %v1961 = vsel %vm1834, %v1958, %v1960
        %v1962 = vrot.slane %v1678, 6
        %v1963 = vsel %vm1834, %v1960, %v1962
        %v1964 = vrot.slane %v1679, 6
        %v1965 = vsel %vm1834, %v1962, %v1964
        %v1966 = vrot.slane %v1680, 6
        %v1967 = vsel %vm1834, %v1964, %v1966
        %v1968 = vrot.slane %v1681, 6
        %v1969 = vsel %vm1834, %v1966, %v1968
        %v1970 = vrot.slane %v1682, 6
        %v1971 = vsel %vm1834, %v1968, %v1970
        %v1972 = vrot.slane %v1683, 6
        %v1973 = vsel %vm1834, %v1970, %v1972
        %v1974 = vrot.slane %v1684, 6
        %v1975 = vsel %vm1834, %v1972, %v1974
        %v1976 = vrot.slane %v1685, 6
        %v1977 = vsel %vm1834, %v1974, %v1976
        %v1978 = vrot.slane %v1686, 6
        %v1979 = vsel %vm1834, %v1976, %v1978
        %v1980 = vrot.slane %v1687, 6
        %v1981 = vsel %vm1834, %v1978, %v1980
        %v1982 = vrot.slane %v1688, 6
        %v1983 = vsel %vm1834, %v1980, %v1982
        %v1984 = vrot.slane %v1689, 6
        %v1985 = vsel %vm1834, %v1982, %v1984
        %v1986 = vrot.slane %v1690, 6
        %v1987 = vsel %vm1834, %v1984, %v1986
        %v1988 = vrot.slane %v1691, 6
        %v1989 = vsel %vm1834, %v1986, %v1988
        %v1990 = vrot.slane %v1692, 6
        %v1991 = vsel %vm1834, %v1988, %v1990
        %v1992 = vrot.slane %v1693, 6
        %v1993 = vsel %vm1834, %v1990, %v1992
        %v1994 = vrot.slane %v1694, 6
        %v1995 = vsel %vm1834, %v1992, %v1994
        %v1996 = vrot.slane %v1695, 6
        %v1997 = vsel %vm1834, %v1994, %v1996
        %v1998 = vrot.slane %v1696, 6
        %v1999 = vsel %vm1834, %v1996, %v1998
        %v2000 = vrot.slane %v1697, 6
        %v2001 = vsel %vm1834, %v1998, %v2000
        %v2002 = vrot.slane %v1698, 6
        %v2003 = vsel %vm1834, %v2000, %v2002
        %v2004 = vrot.slane %v1699, 6
        %v2005 = vsel %vm1834, %v2002, %v2004
        %v2006 = vrot.slane %v1700, 6
        %v2007 = vsel %vm1834, %v2004, %v2006
        %v2008 = vrot.slane %v1701, 6
        %v2009 = vsel %vm1834, %v2006, %v2008
        %v2010 = vrot.slane %v1702, 6
        %v2011 = vsel %vm1834, %v2008, %v2010
        %v2012 = vrot.slane %v1703, 6
        %v2013 = vsel %vm1834, %v2010, %v2012
        %v2014 = vrot.slane %v1704, 6
        %v2015 = vsel %vm1834, %v2012, %v2014
        %v2016 = vrot.slane %v1705, 6
        %v2017 = vsel %vm1834, %v2014, %v2016
        %v2018 = vrot.slane %v1706, 6
        %v2019 = vsel %vm1834, %v2016, %v2018
        %v2020 = vrot.slane %v1707, 6
        %v2021 = vsel %vm1834, %v2018, %v2020
        %v2022 = vrot.slane %v1708, 6
        %v2023 = vsel %vm1834, %v2020, %v2022
        %v2024 = vrot.slane %v1709, 6
        %v2025 = vsel %vm1834, %v2022, %v2024
        %v2026 = vrot.slane %v1710, 6
        %v2027 = vsel %vm1834, %v2024, %v2026
        %v2028 = vrot.slane %v1711, 6
        %v2029 = vsel %vm1834, %v2026, %v2028
        %v2030 = vrot.slane %v1712, 6
        %v2031 = vsel %vm1834, %v2028, %v2030
        %v2032 = vrot.slane %v1713, 6
        %v2033 = vsel %vm1834, %v2030, %v2032
        %v2034 = vrot.slane %v1714, 6
        %v2035 = vsel %vm1834, %v2032, %v2034
        %v2036 = vrot.slane %v1715, 6
        %v2037 = vsel %vm1834, %v2034, %v2036
        %v2038 = vrot.slane %v1716, 6
        %v2039 = vsel %vm1834, %v2036, %v2038
        %v2040 = vrot.slane %v1717, 6
        %v2041 = vsel %vm1834, %v2038, %v2040
        %v2042 = vrot.slane %v1718, 6
        %v2043 = vsel %vm1834, %v2040, %v2042
        %v2044 = vrot.slane %v1719, 6
        %v2045 = vsel %vm1834, %v2042, %v2044
        %v2046 = vrot.slane %v1720, 6
        %v2047 = vsel %vm1834, %v2044, %v2046
        %v2048 = vrot.slane %v1721, 6
        %v2049 = vsel %vm1834, %v2046, %v2048
        %v2050 = vrot.slane %v1722, 6
        %v2051 = vsel %vm1834, %v2048, %v2050
        %v2052 = vrot.slane %v1723, 6
        %v2053 = vsel %vm1834, %v2050, %v2052
        %v2163 = vmax.f32 %v1611, %v1837
        %v2164 = vmax.f32 %v1612, %v1839
        %v2165 = vmax.f32 %v1613, %v1841
        %v2166 = vmax.f32 %v1614, %v1843
        %v2167 = vmax.f32 %v1615, %v1845
        %v2168 = vmax.f32 %v1616, %v1847
        %v2169 = vmax.f32 %v1617, %v1849
        %v2170 = vmax.f32 %v1618, %v1851
        %v2171 = vmax.f32 %v1619, %v1853
        %v2172 = vmax.f32 %v1620, %v1855
        %v2173 = vmax.f32 %v1621, %v1857
        %v2174 = vmax.f32 %v1622, %v1859
        %v2175 = vmax.f32 %v1623, %v1861
        %v2176 = vmax.f32 %v1624, %v1863
        %v2177 = vmax.f32 %v1625, %v1865
        %v2178 = vmax.f32 %v1626, %v1867
        %v2179 = vmax.f32 %v1627, %v1869
        %v2180 = vmax.f32 %v1628, %v1871
        %v2181 = vmax.f32 %v1629, %v1873
        %v2182 = vmax.f32 %v1630, %v1875
        %v2183 = vmax.f32 %v1631, %v1877
        %v2184 = vmax.f32 %v1632, %v1879
        %v2185 = vmax.f32 %v1633, %v1881
        %v2186 = vmax.f32 %v1634, %v1883
        %v2187 = vmax.f32 %v1635, %v1885
        %v2188 = vmax.f32 %v1636, %v1887
        %v2189 = vmax.f32 %v1637, %v1889
        %v2190 = vmax.f32 %v1638, %v1891
        %v2191 = vmax.f32 %v1639, %v1893
        %v2192 = vmax.f32 %v1640, %v1895
        %v2193 = vmax.f32 %v1641, %v1897
        %v2194 = vmax.f32 %v1642, %v1899
        %v2195 = vmax.f32 %v1643, %v1901
        %v2196 = vmax.f32 %v1644, %v1903
        %v2197 = vmax.f32 %v1645, %v1905
        %v2198 = vmax.f32 %v1646, %v1907
        %v2199 = vmax.f32 %v1647, %v1909
        %v2200 = vmax.f32 %v1648, %v1911
        %v2201 = vmax.f32 %v1649, %v1913
        %v2202 = vmax.f32 %v1650, %v1915
        %v2203 = vmax.f32 %v1651, %v1917
        %v2204 = vmax.f32 %v1652, %v1919
        %v2205 = vmax.f32 %v1653, %v1921
        %v2206 = vmax.f32 %v1654, %v1923
        %v2207 = vmax.f32 %v1655, %v1925
        %v2208 = vmax.f32 %v1656, %v1927
        %v2209 = vmax.f32 %v1657, %v1929
        %v2210 = vmax.f32 %v1658, %v1931
        %v2211 = vmax.f32 %v1659, %v1933
        %v2212 = vmax.f32 %v1660, %v1935
        %v2213 = vmax.f32 %v1661, %v1937
        %v2214 = vmax.f32 %v1662, %v1939
        %v2215 = vmax.f32 %v1663, %v1941
        %v2216 = vmax.f32 %v1664, %v1943
        %v2217 = vmax.f32 %v1665, %v1945
        %v2218 = vmax.f32 %v1666, %v1947
        %v2219 = vmax.f32 %v1667, %v1949
        %v2220 = vmax.f32 %v1668, %v1951
        %v2221 = vmax.f32 %v1669, %v1953
        %v2222 = vmax.f32 %v1670, %v1955
        %v2223 = vmax.f32 %v1671, %v1957
        %v2224 = vmax.f32 %v1672, %v1959
        %v2225 = vmax.f32 %v1673, %v1961
        %v2226 = vmax.f32 %v1674, %v1963
        %v2227 = vmax.f32 %v1675, %v1965
        %v2228 = vmax.f32 %v1676, %v1967
        %v2229 = vmax.f32 %v1677, %v1969
        %v2230 = vmax.f32 %v1678, %v1971
        %v2231 = vmax.f32 %v1679, %v1973
        %v2232 = vmax.f32 %v1680, %v1975
        %v2233 = vmax.f32 %v1681, %v1977
        %v2234 = vmax.f32 %v1682, %v1979
        %v2235 = vmax.f32 %v1683, %v1981
        %v2236 = vmax.f32 %v1684, %v1983
        %v2237 = vmax.f32 %v1685, %v1985
        %v2238 = vmax.f32 %v1686, %v1987
        %v2239 = vmax.f32 %v1687, %v1989
        %v2240 = vmax.f32 %v1688, %v1991
        %v2241 = vmax.f32 %v1689, %v1993
        %v2242 = vmax.f32 %v1690, %v1995
        %v2243 = vmax.f32 %v1691, %v1997
        %v2244 = vmax.f32 %v1692, %v1999
        %v2245 = vmax.f32 %v1693, %v2001
        %v2246 = vmax.f32 %v1694, %v2003
        %v2247 = vmax.f32 %v1695, %v2005
        %v2248 = vmax.f32 %v1696, %v2007
        %v2249 = vmax.f32 %v1697, %v2009
        %v2250 = vmax.f32 %v1698, %v2011
        %v2251 = vmax.f32 %v1699, %v2013
        %v2252 = vmax.f32 %v1700, %v2015
        %v2253 = vmax.f32 %v1701, %v2017
        %v2254 = vmax.f32 %v1702, %v2019
        %v2255 = vmax.f32 %v1703, %v2021
        %v2256 = vmax.f32 %v1704, %v2023
        %v2257 = vmax.f32 %v1705, %v2025
        %v2258 = vmax.f32 %v1706, %v2027
        %v2259 = vmax.f32 %v1707, %v2029
        %v2260 = vmax.f32 %v1708, %v2031
        %v2261 = vmax.f32 %v1709, %v2033
        %v2262 = vmax.f32 %v1710, %v2035
        %v2263 = vmax.f32 %v1711, %v2037
        %v2264 = vmax.f32 %v1712, %v2039
        %v2265 = vmax.f32 %v1713, %v2041
        %v2266 = vmax.f32 %v1714, %v2043
        %v2267 = vmax.f32 %v1715, %v2045
        %v2268 = vmax.f32 %v1716, %v2047
        %v2269 = vmax.f32 %v1717, %v2049
        %v2270 = vmax.f32 %v1718, %v2051
        %v2271 = vmax.f32 %v1719, %v2053
        %2272 = vst [vmem:[#allocation2] sm:$0xff] %v2163
        %2273 = vst [vmem:[#allocation2 + $0x8] sm:$0xff] %v2164
        %2274 = vst [vmem:[#allocation2 + $0x10] sm:$0xff] %v2165
        %2275 = vst [vmem:[#allocation2 + $0x18] sm:$0xff] %v2166
        %2276 = vst [vmem:[#allocation2 + $0x20] sm:$0xff] %v2167
        %2277 = vst [vmem:[#allocation2 + $0x28] sm:$0xff] %v2168
        %2278 = vst [vmem:[#allocation2 + $0x30] sm:$0xff] %v2169
        %2279 = vst [vmem:[#allocation2 + $0x38] sm:$0xff] %v2170
        %2280 = vst [vmem:[#allocation2 + $0x40] sm:$0xff] %v2171
        %2281 = vst [vmem:[#allocation2 + $0x48] sm:$0xff] %v2172
        %2282 = vst [vmem:[#allocation2 + $0x50] sm:$0xff] %v2173
        %2283 = vst [vmem:[#allocation2 + $0x58] sm:$0xff] %v2174
        %2284 = vst [vmem:[#allocation2 + $0x60] sm:$0xff] %v2175
        %2285 = vst [vmem:[#allocation2 + $0x68] sm:$0xff] %v2176
        %2286 = vst [vmem:[#allocation2 + $0x70] sm:$0xff] %v2177
        %2287 = vst [vmem:[#allocation2 + $0x78] sm:$0xff] %v2178
        %2288 = vst [vmem:[#allocation2 + $0x80] sm:$0xff] %v2179
        %2289 = vst [vmem:[#allocation2 + $0x88] sm:$0xff] %v2180
        %2290 = vst [vmem:[#allocation2 + $0x90] sm:$0xff] %v2181
        %2291 = vst [vmem:[#allocation2 + $0x98] sm:$0xff] %v2182
        %2292 = vst [vmem:[#allocation2 + $0xa0] sm:$0xff] %v2183
        %2293 = vst [vmem:[#allocation2 + $0xa8] sm:$0xff] %v2184
        %2294 = vst [vmem:[#allocation2 + $0xb0] sm:$0xff] %v2185
        %2295 = vst [vmem:[#allocation2 + $0xb8] sm:$0xff] %v2186
        %2296 = vst [vmem:[#allocation2 + $0xc0] sm:$0xff] %v2187
        %2297 = vst [vmem:[#allocation2 + $0xc8] sm:$0xff] %v2188
        %2298 = vst [vmem:[#allocation2 + $0xd0] sm:$0xff] %v2189
        %2299 = vst [vmem:[#allocation2 + $0xd8] sm:$0xff] %v2190
        %2300 = vst [vmem:[#allocation2 + $0xe0] sm:$0xff] %v2191
        %2301 = vst [vmem:[#allocation2 + $0xe8] sm:$0xff] %v2192
        %2302 = vst [vmem:[#allocation2 + $0xf0] sm:$0xff] %v2193
        %2303 = vst [vmem:[#allocation2 + $0xf8] sm:$0xff] %v2194
        %2304 = vst [vmem:[#allocation2 + $0x100] sm:$0xff] %v2195
        %2305 = vst [vmem:[#allocation2 + $0x108] sm:$0xff] %v2196
        %2306 = vst [vmem:[#allocation2 + $0x110] sm:$0xff] %v2197
        %2307 = vst [vmem:[#allocation2 + $0x118] sm:$0xff] %v2198
        %2308 = vst [vmem:[#allocation2 + $0x120] sm:$0xff] %v2199
        %2309 = vst [vmem:[#allocation2 + $0x128] sm:$0xff] %v2200
        %2310 = vst [vmem:[#allocation2 + $0x130] sm:$0xff] %v2201
        %2311 = vst [vmem:[#allocation2 + $0x138] sm:$0xff] %v2202
        %2312 = vst [vmem:[#allocation2 + $0x140] sm:$0xff] %v2203
        %2313 = vst [vmem:[#allocation2 + $0x148] sm:$0xff] %v2204
        %2314 = vst [vmem:[#allocation2 + $0x150] sm:$0xff] %v2205
        %2315 = vst [vmem:[#allocation2 + $0x158] sm:$0xff] %v2206
        %2316 = vst [vmem:[#allocation2 + $0x160] sm:$0xff] %v2207
        %2317 = vst [vmem:[#allocation2 + $0x168] sm:$0xff] %v2208
        %2318 = vst [vmem:[#allocation2 + $0x170] sm:$0xff] %v2209
        %2319 = vst [vmem:[#allocation2 + $0x178] sm:$0xff] %v2210
        %2320 = vst [vmem:[#allocation2 + $0x180] sm:$0xff] %v2211
        %2321 = vst [vmem:[#allocation2 + $0x188] sm:$0xff] %v2212
        %2322 = vst [vmem:[#allocation2 + $0x190] sm:$0xff] %v2213
        %2323 = vst [vmem:[#allocation2 + $0x198] sm:$0xff] %v2214
        %2324 = vst [vmem:[#allocation2 + $0x1a0] sm:$0xff] %v2215
        %2325 = vst [vmem:[#allocation2 + $0x1a8] sm:$0xff] %v2216
        %2326 = vst [vmem:[#allocation2 + $0x1b0] sm:$0xff] %v2217
        %2327 = vst [vmem:[#allocation2 + $0x1b8] sm:$0xff] %v2218
        %2328 = vst [vmem:[#allocation2 + $0x1c0] sm:$0xff] %v2219
        %2329 = vst [vmem:[#allocation2 + $0x1c8] sm:$0xff] %v2220
        %2330 = vst [vmem:[#allocation2 + $0x1d0] sm:$0xff] %v2221
        %2331 = vst [vmem:[#allocation2 + $0x1d8] sm:$0xff] %v2222
        %2332 = vst [vmem:[#allocation2 + $0x1e0] sm:$0xff] %v2223
        %2333 = vst [vmem:[#allocation2 + $0x1e8] sm:$0xff] %v2224
        %2334 = vst [vmem:[#allocation2 + $0x1f0] sm:$0xff] %v2225
        %2335 = vst [vmem:[#allocation2 + $0x1f8] sm:$0xff] %v2226
        %2336 = vst [vmem:[#allocation2 + $0x200] sm:$0xff] %v2227
        %2337 = vst [vmem:[#allocation2 + $0x208] sm:$0xff] %v2228
        %2338 = vst [vmem:[#allocation2 + $0x210] sm:$0xff] %v2229
        %2339 = vst [vmem:[#allocation2 + $0x218] sm:$0xff] %v2230
        %2340 = vst [vmem:[#allocation2 + $0x220] sm:$0xff] %v2231
        %2341 = vst [vmem:[#allocation2 + $0x228] sm:$0xff] %v2232
        %2342 = vst [vmem:[#allocation2 + $0x230] sm:$0xff] %v2233
        %2343 = vst [vmem:[#allocation2 + $0x238] sm:$0xff] %v2234
        %2344 = vst [vmem:[#allocation2 + $0x240] sm:$0xff] %v2235
        %2345 = vst [vmem:[#allocation2 + $0x248] sm:$0xff] %v2236
        %2346 = vst [vmem:[#allocation2 + $0x250] sm:$0xff] %v2237
        %2347 = vst [vmem:[#allocation2 + $0x258] sm:$0xff] %v2238
        %2348 = vst [vmem:[#allocation2 + $0x260] sm:$0xff] %v2239
        %2349 = vst [vmem:[#allocation2 + $0x268] sm:$0xff] %v2240
        %2350 = vst [vmem:[#allocation2 + $0x270] sm:$0xff] %v2241
        %2351 = vst [vmem:[#allocation2 + $0x278] sm:$0xff] %v2242
        %2352 = vst [vmem:[#allocation2 + $0x280] sm:$0xff] %v2243
        %2353 = vst [vmem:[#allocation2 + $0x288] sm:$0xff] %v2244
        %2354 = vst [vmem:[#allocation2 + $0x290] sm:$0xff] %v2245
        %2355 = vst [vmem:[#allocation2 + $0x298] sm:$0xff] %v2246
        %2356 = vst [vmem:[#allocation2 + $0x2a0] sm:$0xff] %v2247
        %2357 = vst [vmem:[#allocation2 + $0x2a8] sm:$0xff] %v2248
        %2358 = vst [vmem:[#allocation2 + $0x2b0] sm:$0xff] %v2249
        %2359 = vst [vmem:[#allocation2 + $0x2b8] sm:$0xff] %v2250
        %2360 = vst [vmem:[#allocation2 + $0x2c0] sm:$0xff] %v2251
        %2361 = vst [vmem:[#allocation2 + $0x2c8] sm:$0xff] %v2252
        %2362 = vst [vmem:[#allocation2 + $0x2d0] sm:$0xff] %v2253
        %2363 = vst [vmem:[#allocation2 + $0x2d8] sm:$0xff] %v2254
        %2364 = vst [vmem:[#allocation2 + $0x2e0] sm:$0xff] %v2255
        %2365 = vst [vmem:[#allocation2 + $0x2e8] sm:$0xff] %v2256
        %2366 = vst [vmem:[#allocation2 + $0x2f0] sm:$0xff] %v2257
        %2367 = vst [vmem:[#allocation2 + $0x2f8] sm:$0xff] %v2258
        %2368 = vst [vmem:[#allocation2 + $0x300] sm:$0xff] %v2259
        %2369 = vst [vmem:[#allocation2 + $0x308] sm:$0xff] %v2260
        %2370 = vst [vmem:[#allocation2 + $0x310] sm:$0xff] %v2261
        %2371 = vst [vmem:[#allocation2 + $0x318] sm:$0xff] %v2262
        %2372 = vst [vmem:[#allocation2 + $0x320] sm:$0xff] %v2263
        %2373 = vst [vmem:[#allocation2 + $0x328] sm:$0xff] %v2264
        %2374 = vst [vmem:[#allocation2 + $0x330] sm:$0xff] %v2265
        %2375 = vst [vmem:[#allocation2 + $0x338] sm:$0xff] %v2266
        %2376 = vst [vmem:[#allocation2 + $0x340] sm:$0xff] %v2267
        %2377 = vst [vmem:[#allocation2 + $0x348] sm:$0xff] %v2268
        %2378 = vst [vmem:[#allocation2 + $0x350] sm:$0xff] %v2269
        %2379 = vst [vmem:[#allocation2 + $0x358] sm:$0xff] %v2270
        %2380 = vst [vmem:[#allocation2 + $0x360] sm:$0xff] %v2271
        %v2381 = vld [vmem:[#allocation2] ss:$2 sm:$0xff]
        %s2382 = scalar_lea.vmem [#allocation2], 16
        %v2383 = vld [vmem:[%s2382] ss:$2 sm:$0x7f]
        %2384 = vst [vmem:[#allocation3] sm:$0xff] %v2381
        %2385 = vst [vmem:[#allocation3 + $0x8] sm:$0x7f] %v2383
        %s2386 = scalar_lea.vmem [#allocation2], 60
        %v2387 = vld [vmem:[%s2386] ss:$2 sm:$0xff]
        %s2388 = scalar_lea.vmem [#allocation2], 76
        %v2389 = vld [vmem:[%s2388] ss:$2 sm:$0x7f]
        %2390 = vst [vmem:[#allocation3 + $0xf] sm:$0xff] %v2387
        %2391 = vst [vmem:[#allocation3 + $0x17] sm:$0x7f] %v2389
        %s2392 = scalar_lea.vmem [#allocation2], 120
        %v2393 = vld [vmem:[%s2392] ss:$2 sm:$0xff]
        %s2394 = scalar_lea.vmem [#allocation2], 136
        %v2395 = vld [vmem:[%s2394] ss:$2 sm:$0x7f]
        %2396 = vst [vmem:[#allocation3 + $0x1e] sm:$0xff] %v2393
        %2397 = vst [vmem:[#allocation3 + $0x26] sm:$0x7f] %v2395
        %s2398 = scalar_lea.vmem [#allocation2], 180
        %v2399 = vld [vmem:[%s2398] ss:$2 sm:$0xff]
        %s2400 = scalar_lea.vmem [#allocation2], 196
        %v2401 = vld [vmem:[%s2400] ss:$2 sm:$0x7f]
        %2402 = vst [vmem:[#allocation3 + $0x2d] sm:$0xff] %v2399
        %2403 = vst [vmem:[#allocation3 + $0x35] sm:$0x7f] %v2401
        %s2404 = scalar_lea.vmem [#allocation2], 240
        %v2405 = vld [vmem:[%s2404] ss:$2 sm:$0xff]
        %s2406 = scalar_lea.vmem [#allocation2], 256
        %v2407 = vld [vmem:[%s2406] ss:$2 sm:$0x7f]
        %2408 = vst [vmem:[#allocation3 + $0x3c] sm:$0xff] %v2405
        %2409 = vst [vmem:[#allocation3 + $0x44] sm:$0x7f] %v2407
        %s2410 = scalar_lea.vmem [#allocation2], 300
        %v2411 = vld [vmem:[%s2410] ss:$2 sm:$0xff]
        %s2412 = scalar_lea.vmem [#allocation2], 316
        %v2413 = vld [vmem:[%s2412] ss:$2 sm:$0x7f]
        %2414 = vst [vmem:[#allocation3 + $0x4b] sm:$0xff] %v2411
        %2415 = vst [vmem:[#allocation3 + $0x53] sm:$0x7f] %v2413
        %s2416 = scalar_lea.vmem [#allocation2], 360
        %v2417 = vld [vmem:[%s2416] ss:$2 sm:$0xff]
        %s2418 = scalar_lea.vmem [#allocation2], 376
        %v2419 = vld [vmem:[%s2418] ss:$2 sm:$0x7f]
        %2420 = vst [vmem:[#allocation3 + $0x5a] sm:$0xff] %v2417
        %2421 = vst [vmem:[#allocation3 + $0x62] sm:$0x7f] %v2419
        %s2422 = scalar_lea.vmem [#allocation2], 420
        %v2423 = vld [vmem:[%s2422] ss:$2 sm:$0xff]
        %s2424 = scalar_lea.vmem [#allocation2], 436
        %v2425 = vld [vmem:[%s2424] ss:$2 sm:$0x7f]
        %2426 = vst [vmem:[#allocation3 + $0x69] sm:$0xff] %v2423
        %2427 = vst [vmem:[#allocation3 + $0x71] sm:$0x7f] %v2425
        %s2428 = scalar_lea.vmem [#allocation2], 480
        %v2429 = vld [vmem:[%s2428] ss:$2 sm:$0xff]
        %s2430 = scalar_lea.vmem [#allocation2], 496
        %v2431 = vld [vmem:[%s2430] ss:$2 sm:$0x7f]
        %2432 = vst [vmem:[#allocation3 + $0x78] sm:$0xff] %v2429
        %2433 = vst [vmem:[#allocation3 + $0x80] sm:$0x7f] %v2431
        %s2434 = scalar_lea.vmem [#allocation2], 540
        %v2435 = vld [vmem:[%s2434] ss:$2 sm:$0xff]
        %s2436 = scalar_lea.vmem [#allocation2], 556
        %v2437 = vld [vmem:[%s2436] ss:$2 sm:$0x7f]
        %2438 = vst [vmem:[#allocation3 + $0x87] sm:$0xff] %v2435
        %2439 = vst [vmem:[#allocation3 + $0x8f] sm:$0x7f] %v2437
        %s2440 = scalar_lea.vmem [#allocation2], 600
        %v2441 = vld [vmem:[%s2440] ss:$2 sm:$0xff]
        %s2442 = scalar_lea.vmem [#allocation2], 616
        %v2443 = vld [vmem:[%s2442] ss:$2 sm:$0x7f]
        %2444 = vst [vmem:[#allocation3 + $0x96] sm:$0xff] %v2441
        %2445 = vst [vmem:[#allocation3 + $0x9e] sm:$0x7f] %v2443
        %s2446 = scalar_lea.vmem [#allocation2], 660
        %v2447 = vld [vmem:[%s2446] ss:$2 sm:$0xff]
        %s2448 = scalar_lea.vmem [#allocation2], 676
        %v2449 = vld [vmem:[%s2448] ss:$2 sm:$0x7f]
        %2450 = vst [vmem:[#allocation3 + $0xa5] sm:$0xff] %v2447
        %2451 = vst [vmem:[#allocation3 + $0xad] sm:$0x7f] %v2449
        %s2452 = scalar_lea.vmem [#allocation2], 720
        %v2453 = vld [vmem:[%s2452] ss:$2 sm:$0xff]
        %s2454 = scalar_lea.vmem [#allocation2], 736
        %v2455 = vld [vmem:[%s2454] ss:$2 sm:$0x7f]
        %2456 = vst [vmem:[#allocation3 + $0xb4] sm:$0xff] %v2453
        %2457 = vst [vmem:[#allocation3 + $0xbc] sm:$0x7f] %v2455
        %s2458 = scalar_lea.vmem [#allocation2], 780
        %v2459 = vld [vmem:[%s2458] ss:$2 sm:$0xff]
        %s2460 = scalar_lea.vmem [#allocation2], 796
        %v2461 = vld [vmem:[%s2460] ss:$2 sm:$0x7f]
        %2462 = vst [vmem:[#allocation3 + $0xc3] sm:$0xff] %v2459
        %2463 = vst [vmem:[#allocation3 + $0xcb] sm:$0x7f] %v2461
        %s2464 = scalar_lea.vmem [#allocation2], 840
        %v2465 = vld [vmem:[%s2464] ss:$2 sm:$0xff]
        %s2466 = scalar_lea.vmem [#allocation2], 856
        %v2467 = vld [vmem:[%s2466] ss:$2 sm:$0x7f]
        %2468 = vst [vmem:[#allocation3 + $0xd2] sm:$0xff] %v2465
        %2469 = vst [vmem:[#allocation3 + $0xda] sm:$0x7f] %v2467
        %v2470 = vld [vmem:[#allocation3] sm:$0xff]
        %v2471 = vld [vmem:[#allocation3 + $0x8] sm:$0xff]
        %v2472 = vld [vmem:[#allocation3 + $0x10] sm:$0xff]
        %v2473 = vld [vmem:[#allocation3 + $0x18] sm:$0xff]
        %v2474 = vld [vmem:[#allocation3 + $0x20] sm:$0xff]
        %v2475 = vld [vmem:[#allocation3 + $0x28] sm:$0xff]
        %v2476 = vld [vmem:[#allocation3 + $0x30] sm:$0xff]
        %v2477 = vld [vmem:[#allocation3 + $0x38] sm:$0xff]
        %v2478 = vld [vmem:[#allocation3 + $0x40] sm:$0xff]
        %v2479 = vld [vmem:[#allocation3 + $0x48] sm:$0xff]
        %v2480 = vld [vmem:[#allocation3 + $0x50] sm:$0xff]
        %v2481 = vld [vmem:[#allocation3 + $0x58] sm:$0xff]
        %v2482 = vld [vmem:[#allocation3 + $0x60] sm:$0xff]
        %v2483 = vld [vmem:[#allocation3 + $0x68] sm:$0xff]
        %v2484 = vld [vmem:[#allocation3 + $0x70] sm:$0xff]
        %v2485 = vld [vmem:[#allocation3 + $0x78] sm:$0xff]
        %v2486 = vld [vmem:[#allocation3 + $0x80] sm:$0xff]
        %v2487 = vld [vmem:[#allocation3 + $0x88] sm:$0xff]
        %v2488 = vld [vmem:[#allocation3 + $0x90] sm:$0xff]
        %v2489 = vld [vmem:[#allocation3 + $0x98] sm:$0xff]
        %v2490 = vld [vmem:[#allocation3 + $0xa0] sm:$0xff]
        %v2491 = vld [vmem:[#allocation3 + $0xa8] sm:$0xff]
        %v2492 = vld [vmem:[#allocation3 + $0xb0] sm:$0xff]
        %v2493 = vld [vmem:[#allocation3 + $0xb8] sm:$0xff]
        %v2494 = vld [vmem:[#allocation3 + $0xc0] sm:$0x1]
        %v2495 = vpack.c.bf16 %v2470, %v2470
        %v2496 = vpack.c.bf16 %v2471, %v2471
        %v2497 = vpack.c.bf16 %v2472, %v2472
        %v2498 = vpack.c.bf16 %v2473, %v2473
        %v2499 = vpack.c.bf16 %v2474, %v2474
        %v2500 = vpack.c.bf16 %v2475, %v2475
        %v2501 = vpack.c.bf16 %v2476, %v2476
        %v2502 = vpack.c.bf16 %v2477, %v2477
        %v2503 = vpack.c.bf16 %v2478, %v2478
        %v2504 = vpack.c.bf16 %v2479, %v2479
        %v2505 = vpack.c.bf16 %v2480, %v2480
        %v2506 = vpack.c.bf16 %v2481, %v2481
        %v2507 = vpack.c.bf16 %v2482, %v2482
        %v2508 = vpack.c.bf16 %v2483, %v2483
        %v2509 = vpack.c.bf16 %v2484, %v2484
        %v2510 = vpack.c.bf16 %v2485, %v2485
        %v2511 = vpack.c.bf16 %v2486, %v2486
        %v2512 = vpack.c.bf16 %v2487, %v2487
        %v2513 = vpack.c.bf16 %v2488, %v2488
        %v2514 = vpack.c.bf16 %v2489, %v2489
        %v2515 = vpack.c.bf16 %v2490, %v2490
        %v2516 = vpack.c.bf16 %v2491, %v2491
        %v2517 = vpack.c.bf16 %v2492, %v2492
        %v2518 = vpack.c.bf16 %v2493, %v2493
        %v2519 = vpack.c.bf16 %v2494, %v2494
        %v2520 = vld [vmem:[#allocation3 + $0x1] sm:$0xff]
        %v2521 = vld [vmem:[#allocation3 + $0x9] sm:$0xff]
        %v2522 = vld [vmem:[#allocation3 + $0x11] sm:$0xff]
        %v2523 = vld [vmem:[#allocation3 + $0x19] sm:$0xff]
        %v2524 = vld [vmem:[#allocation3 + $0x21] sm:$0xff]
        %v2525 = vld [vmem:[#allocation3 + $0x29] sm:$0xff]
        %v2526 = vld [vmem:[#allocation3 + $0x31] sm:$0xff]
        %v2527 = vld [vmem:[#allocation3 + $0x39] sm:$0xff]
        %v2528 = vld [vmem:[#allocation3 + $0x41] sm:$0xff]
        %v2529 = vld [vmem:[#allocation3 + $0x49] sm:$0xff]
        %v2530 = vld [vmem:[#allocation3 + $0x51] sm:$0xff]
        %v2531 = vld [vmem:[#allocation3 + $0x59] sm:$0xff]
        %v2532 = vld [vmem:[#allocation3 + $0x61] sm:$0xff]
        %v2533 = vld [vmem:[#allocation3 + $0x69] sm:$0xff]
        %v2534 = vld [vmem:[#allocation3 + $0x71] sm:$0xff]
        %v2535 = vld [vmem:[#allocation3 + $0x79] sm:$0xff]
        %v2536 = vld [vmem:[#allocation3 + $0x81] sm:$0xff]
        %v2537 = vld [vmem:[#allocation3 + $0x89] sm:$0xff]
        %v2538 = vld [vmem:[#allocation3 + $0x91] sm:$0xff]
        %v2539 = vld [vmem:[#allocation3 + $0x99] sm:$0xff]
        %v2540 = vld [vmem:[#allocation3 + $0xa1] sm:$0xff]
        %v2541 = vld [vmem:[#allocation3 + $0xa9] sm:$0xff]
        %v2542 = vld [vmem:[#allocation3 + $0xb1] sm:$0xff]
        %v2543 = vld [vmem:[#allocation3 + $0xb9] sm:$0xff]
        %v2544 = vld [vmem:[#allocation3 + $0xc1] sm:$0x1]
        %v2545 = vpack.c.bf16 %v2520, %v2520
        %v2546 = vpack.c.bf16 %v2521, %v2521
        %v2547 = vpack.c.bf16 %v2522, %v2522
        %v2548 = vpack.c.bf16 %v2523, %v2523
        %v2549 = vpack.c.bf16 %v2524, %v2524
        %v2550 = vpack.c.bf16 %v2525, %v2525
        %v2551 = vpack.c.bf16 %v2526, %v2526
        %v2552 = vpack.c.bf16 %v2527, %v2527
        %v2553 = vpack.c.bf16 %v2528, %v2528
        %v2554 = vpack.c.bf16 %v2529, %v2529
        %v2555 = vpack.c.bf16 %v2530, %v2530
        %v2556 = vpack.c.bf16 %v2531, %v2531
        %v2557 = vpack.c.bf16 %v2532, %v2532
        %v2558 = vpack.c.bf16 %v2533, %v2533
        %v2559 = vpack.c.bf16 %v2534, %v2534
        %v2560 = vpack.c.bf16 %v2535, %v2535
        %v2561 = vpack.c.bf16 %v2536, %v2536
        %v2562 = vpack.c.bf16 %v2537, %v2537
        %v2563 = vpack.c.bf16 %v2538, %v2538
        %v2564 = vpack.c.bf16 %v2539, %v2539
        %v2565 = vpack.c.bf16 %v2540, %v2540
        %v2566 = vpack.c.bf16 %v2541, %v2541
        %v2567 = vpack.c.bf16 %v2542, %v2542
        %v2568 = vpack.c.bf16 %v2543, %v2543
        %v2569 = vpack.c.bf16 %v2544, %v2544
        %v2570 = vld [vmem:[#allocation3 + $0x2] sm:$0xff]
        %v2571 = vld [vmem:[#allocation3 + $0xa] sm:$0xff]
        %v2572 = vld [vmem:[#allocation3 + $0x12] sm:$0xff]
        %v2573 = vld [vmem:[#allocation3 + $0x1a] sm:$0xff]
        %v2574 = vld [vmem:[#allocation3 + $0x22] sm:$0xff]
        %v2575 = vld [vmem:[#allocation3 + $0x2a] sm:$0xff]
        %v2576 = vld [vmem:[#allocation3 + $0x32] sm:$0xff]
        %v2577 = vld [vmem:[#allocation3 + $0x3a] sm:$0xff]
        %v2578 = vld [vmem:[#allocation3 + $0x42] sm:$0xff]
        %v2579 = vld [vmem:[#allocation3 + $0x4a] sm:$0xff]
        %v2580 = vld [vmem:[#allocation3 + $0x52] sm:$0xff]
        %v2581 = vld [vmem:[#allocation3 + $0x5a] sm:$0xff]
        %v2582 = vld [vmem:[#allocation3 + $0x62] sm:$0xff]
        %v2583 = vld [vmem:[#allocation3 + $0x6a] sm:$0xff]
        %v2584 = vld [vmem:[#allocation3 + $0x72] sm:$0xff]
        %v2585 = vld [vmem:[#allocation3 + $0x7a] sm:$0xff]
        %v2586 = vld [vmem:[#allocation3 + $0x82] sm:$0xff]
        %v2587 = vld [vmem:[#allocation3 + $0x8a] sm:$0xff]
        %v2588 = vld [vmem:[#allocation3 + $0x92] sm:$0xff]
        %v2589 = vld [vmem:[#allocation3 + $0x9a] sm:$0xff]
        %v2590 = vld [vmem:[#allocation3 + $0xa2] sm:$0xff]
        %v2591 = vld [vmem:[#allocation3 + $0xaa] sm:$0xff]
        %v2592 = vld [vmem:[#allocation3 + $0xb2] sm:$0xff]
        %v2593 = vld [vmem:[#allocation3 + $0xba] sm:$0xff]
        %v2594 = vld [vmem:[#allocation3 + $0xc2] sm:$0x1]
        %v2595 = vpack.c.bf16 %v2570, %v2570
        %v2596 = vpack.c.bf16 %v2571, %v2571
        %v2597 = vpack.c.bf16 %v2572, %v2572
        %v2598 = vpack.c.bf16 %v2573, %v2573
        %v2599 = vpack.c.bf16 %v2574, %v2574
        %v2600 = vpack.c.bf16 %v2575, %v2575
        %v2601 = vpack.c.bf16 %v2576, %v2576
        %v2602 = vpack.c.bf16 %v2577, %v2577
        %v2603 = vpack.c.bf16 %v2578, %v2578
        %v2604 = vpack.c.bf16 %v2579, %v2579
        %v2605 = vpack.c.bf16 %v2580, %v2580
        %v2606 = vpack.c.bf16 %v2581, %v2581
        %v2607 = vpack.c.bf16 %v2582, %v2582
        %v2608 = vpack.c.bf16 %v2583, %v2583
        %v2609 = vpack.c.bf16 %v2584, %v2584
        %v2610 = vpack.c.bf16 %v2585, %v2585
        %v2611 = vpack.c.bf16 %v2586, %v2586
        %v2612 = vpack.c.bf16 %v2587, %v2587
        %v2613 = vpack.c.bf16 %v2588, %v2588
        %v2614 = vpack.c.bf16 %v2589, %v2589
        %v2615 = vpack.c.bf16 %v2590, %v2590
        %v2616 = vpack.c.bf16 %v2591, %v2591
        %v2617 = vpack.c.bf16 %v2592, %v2592
        %v2618 = vpack.c.bf16 %v2593, %v2593
        %v2619 = vpack.c.bf16 %v2594, %v2594
        %v2620 = vld [vmem:[#allocation3 + $0xf] sm:$0xff]
        %v2621 = vld [vmem:[#allocation3 + $0x17] sm:$0xff]
        %v2622 = vld [vmem:[#allocation3 + $0x1f] sm:$0xff]
        %v2623 = vld [vmem:[#allocation3 + $0x27] sm:$0xff]
        %v2624 = vld [vmem:[#allocation3 + $0x2f] sm:$0xff]
        %v2625 = vld [vmem:[#allocation3 + $0x37] sm:$0xff]
        %v2626 = vld [vmem:[#allocation3 + $0x3f] sm:$0xff]
        %v2627 = vld [vmem:[#allocation3 + $0x47] sm:$0xff]
        %v2628 = vld [vmem:[#allocation3 + $0x4f] sm:$0xff]
        %v2629 = vld [vmem:[#allocation3 + $0x57] sm:$0xff]
        %v2630 = vld [vmem:[#allocation3 + $0x5f] sm:$0xff]
        %v2631 = vld [vmem:[#allocation3 + $0x67] sm:$0xff]
        %v2632 = vld [vmem:[#allocation3 + $0x6f] sm:$0xff]
        %v2633 = vld [vmem:[#allocation3 + $0x77] sm:$0xff]
        %v2634 = vld [vmem:[#allocation3 + $0x7f] sm:$0xff]
        %v2635 = vld [vmem:[#allocation3 + $0x87] sm:$0xff]
        %v2636 = vld [vmem:[#allocation3 + $0x8f] sm:$0xff]
        %v2637 = vld [vmem:[#allocation3 + $0x97] sm:$0xff]
        %v2638 = vld [vmem:[#allocation3 + $0x9f] sm:$0xff]
        %v2639 = vld [vmem:[#allocation3 + $0xa7] sm:$0xff]
        %v2640 = vld [vmem:[#allocation3 + $0xaf] sm:$0xff]
        %v2641 = vld [vmem:[#allocation3 + $0xb7] sm:$0xff]
        %v2642 = vld [vmem:[#allocation3 + $0xbf] sm:$0xff]
        %v2643 = vld [vmem:[#allocation3 + $0xc7] sm:$0xff]
        %v2644 = vld [vmem:[#allocation3 + $0xcf] sm:$0x1]
        %v2645 = vpack.c.bf16 %v2620, %v2620
        %v2646 = vpack.c.bf16 %v2621, %v2621
        %v2647 = vpack.c.bf16 %v2622, %v2622
        %v2648 = vpack.c.bf16 %v2623, %v2623
        %v2649 = vpack.c.bf16 %v2624, %v2624
        %v2650 = vpack.c.bf16 %v2625, %v2625
        %v2651 = vpack.c.bf16 %v2626, %v2626
        %v2652 = vpack.c.bf16 %v2627, %v2627
        %v2653 = vpack.c.bf16 %v2628, %v2628
        %v2654 = vpack.c.bf16 %v2629, %v2629
        %v2655 = vpack.c.bf16 %v2630, %v2630
        %v2656 = vpack.c.bf16 %v2631, %v2631
        %v2657 = vpack.c.bf16 %v2632, %v2632
        %v2658 = vpack.c.bf16 %v2633, %v2633
        %v2659 = vpack.c.bf16 %v2634, %v2634
        %v2660 = vpack.c.bf16 %v2635, %v2635
        %v2661 = vpack.c.bf16 %v2636, %v2636
        %v2662 = vpack.c.bf16 %v2637, %v2637
        %v2663 = vpack.c.bf16 %v2638, %v2638
        %v2664 = vpack.c.bf16 %v2639, %v2639
        %v2665 = vpack.c.bf16 %v2640, %v2640
        %v2666 = vpack.c.bf16 %v2641, %v2641
        %v2667 = vpack.c.bf16 %v2642, %v2642
        %v2668 = vpack.c.bf16 %v2643, %v2643
        %v2669 = vpack.c.bf16 %v2644, %v2644
        %v2670 = vld [vmem:[#allocation3 + $0xc0] sm:$0xff]
        %v2671 = vld [vmem:[#allocation3 + $0xc8] sm:$0xff]
        %v2672 = vld [vmem:[#allocation3 + $0xd0] sm:$0x1]
        %v2673 = vpack.c.bf16 %v2670, %v2670
        %v2674 = vpack.c.bf16 %v2671, %v2671
        %v2675 = vpack.c.bf16 %v2672, %v2672
        %v2676 = vld [vmem:[#allocation3 + $0xc1] sm:$0xff]
        %v2677 = vld [vmem:[#allocation3 + $0xc9] sm:$0xff]
        %v2678 = vld [vmem:[#allocation3 + $0xd1] sm:$0x1]
        %v2679 = vpack.c.bf16 %v2676, %v2676
        %v2680 = vpack.c.bf16 %v2677, %v2677
        %v2681 = vpack.c.bf16 %v2678, %v2678
        %v2682 = vld [vmem:[#allocation3 + $0x1e] sm:$0xff]
        %v2683 = vld [vmem:[#allocation3 + $0x26] sm:$0xff]
        %v2684 = vld [vmem:[#allocation3 + $0x2e] sm:$0xff]
        %v2685 = vld [vmem:[#allocation3 + $0x36] sm:$0xff]
        %v2686 = vld [vmem:[#allocation3 + $0x3e] sm:$0xff]
        %v2687 = vld [vmem:[#allocation3 + $0x46] sm:$0xff]
        %v2688 = vld [vmem:[#allocation3 + $0x4e] sm:$0xff]
        %v2689 = vld [vmem:[#allocation3 + $0x56] sm:$0xff]
        %v2690 = vld [vmem:[#allocation3 + $0x5e] sm:$0xff]
        %v2691 = vld [vmem:[#allocation3 + $0x66] sm:$0xff]
        %v2692 = vld [vmem:[#allocation3 + $0x6e] sm:$0xff]
        %v2693 = vld [vmem:[#allocation3 + $0x76] sm:$0xff]
        %v2694 = vld [vmem:[#allocation3 + $0x7e] sm:$0xff]
        %v2695 = vld [vmem:[#allocation3 + $0x86] sm:$0xff]
        %v2696 = vld [vmem:[#allocation3 + $0x8e] sm:$0xff]
        %v2697 = vld [vmem:[#allocation3 + $0x96] sm:$0xff]
        %v2698 = vld [vmem:[#allocation3 + $0x9e] sm:$0xff]
        %v2699 = vld [vmem:[#allocation3 + $0xa6] sm:$0xff]
        %v2700 = vld [vmem:[#allocation3 + $0xae] sm:$0xff]
        %v2701 = vld [vmem:[#allocation3 + $0xb6] sm:$0xff]
        %v2702 = vld [vmem:[#allocation3 + $0xbe] sm:$0xff]
        %v2703 = vld [vmem:[#allocation3 + $0xc6] sm:$0xff]
        %v2704 = vld [vmem:[#allocation3 + $0xce] sm:$0xff]
        %v2705 = vld [vmem:[#allocation3 + $0xd6] sm:$0xff]
        %v2706 = vld [vmem:[#allocation3 + $0xde] sm:$0x1]
        %v2707 = vpack.c.bf16 %v2682, %v2682
        %v2708 = vpack.c.bf16 %v2683, %v2683
        %v2709 = vpack.c.bf16 %v2684, %v2684
        %v2710 = vpack.c.bf16 %v2685, %v2685
        %v2711 = vpack.c.bf16 %v2686, %v2686
        %v2712 = vpack.c.bf16 %v2687, %v2687
        %v2713 = vpack.c.bf16 %v2688, %v2688
        %v2714 = vpack.c.bf16 %v2689, %v2689
        %v2715 = vpack.c.bf16 %v2690, %v2690
        %v2716 = vpack.c.bf16 %v2691, %v2691
        %v2717 = vpack.c.bf16 %v2692, %v2692
        %v2718 = vpack.c.bf16 %v2693, %v2693
        %v2719 = vpack.c.bf16 %v2694, %v2694
        %v2720 = vpack.c.bf16 %v2695, %v2695
        %v2721 = vpack.c.bf16 %v2696, %v2696
        %v2722 = vpack.c.bf16 %v2697, %v2697
        %v2723 = vpack.c.bf16 %v2698, %v2698
        %v2724 = vpack.c.bf16 %v2699, %v2699
        %v2725 = vpack.c.bf16 %v2700, %v2700
        %v2726 = vpack.c.bf16 %v2701, %v2701
        %v2727 = vpack.c.bf16 %v2702, %v2702
        %v2728 = vpack.c.bf16 %v2703, %v2703
        %v2729 = vpack.c.bf16 %v2704, %v2704
        %v2730 = vpack.c.bf16 %v2705, %v2705
        %v2731 = vpack.c.bf16 %v2706, %v2706
        %v2732 = vld [vmem:[#allocation3 + $0xcf] sm:$0xff]
        %v2733 = vld [vmem:[#allocation3 + $0xd7] sm:$0xff]
        %v2734 = vld [vmem:[#allocation3 + $0xdf] sm:$0x1]
        %v2735 = vpack.c.bf16 %v2732, %v2732
        %v2736 = vpack.c.bf16 %v2733, %v2733
        %v2737 = vpack.c.bf16 %v2734, %v2734
        %v2738 = vld [vmem:[#allocation3 + $0xd0] sm:$0xff]
        %v2739 = vld [vmem:[#allocation3 + $0xd8] sm:$0xff]
        %v2740 = vld [vmem:[#allocation3 + $0xe0] sm:$0x1]
        %v2741 = vpack.c.bf16 %v2738, %v2738
        %v2742 = vpack.c.bf16 %v2739, %v2739
        %v2743 = vpack.c.bf16 %v2740, %v2740
        %v2769 = vunpack.c.l.b16 %v2495
        %v2770 = vunpack.c.l.b16 %v2496
        %v2771 = vunpack.c.l.b16 %v2497
        %v2772 = vunpack.c.l.b16 %v2498
        %v2773 = vunpack.c.l.b16 %v2499
        %v2774 = vunpack.c.l.b16 %v2500
        %v2775 = vunpack.c.l.b16 %v2501
        %v2776 = vunpack.c.l.b16 %v2502
        %v2777 = vunpack.c.l.b16 %v2503
        %v2778 = vunpack.c.l.b16 %v2504
        %v2779 = vunpack.c.l.b16 %v2505
        %v2780 = vunpack.c.l.b16 %v2506
        %v2781 = vunpack.c.l.b16 %v2507
        %v2782 = vunpack.c.l.b16 %v2508
        %v2783 = vunpack.c.l.b16 %v2509
        %v2784 = vunpack.c.l.b16 %v2510
        %v2785 = vunpack.c.l.b16 %v2511
        %v2786 = vunpack.c.l.b16 %v2512
        %v2787 = vunpack.c.l.b16 %v2513
        %v2788 = vunpack.c.l.b16 %v2514
        %v2789 = vunpack.c.l.b16 %v2515
        %v2790 = vunpack.c.l.b16 %v2516
        %v2791 = vunpack.c.l.b16 %v2517
        %v2792 = vunpack.c.l.b16 %v2518
        %v2793 = vunpack.c.l.b16 %v2519
        %v2794 = vpack.c.b16 %v2770, %v2769
        %v2795 = vpack.c.b16 %v2772, %v2771
        %v2796 = vpack.c.b16 %v2774, %v2773
        %v2797 = vpack.c.b16 %v2776, %v2775
        %v2798 = vpack.c.b16 %v2778, %v2777
        %v2799 = vpack.c.b16 %v2780, %v2779
        %v2800 = vpack.c.b16 %v2782, %v2781
        %v2801 = vpack.c.b16 %v2784, %v2783
        %v2802 = vpack.c.b16 %v2786, %v2785
        %v2803 = vpack.c.b16 %v2788, %v2787
        %v2804 = vpack.c.b16 %v2790, %v2789
        %v2805 = vpack.c.b16 %v2792, %v2791
        %v2806 = vpack.c.b16 %v2793, %v2793
        %v2845 = vunpack.c.l.b16 %v2545
        %v2846 = vunpack.c.l.b16 %v2546
        %v2847 = vunpack.c.l.b16 %v2547
        %v2848 = vunpack.c.l.b16 %v2548
        %v2849 = vunpack.c.l.b16 %v2549
        %v2850 = vunpack.c.l.b16 %v2550
        %v2851 = vunpack.c.l.b16 %v2551
        %v2852 = vunpack.c.l.b16 %v2552
        %v2853 = vunpack.c.l.b16 %v2553
        %v2854 = vunpack.c.l.b16 %v2554
        %v2855 = vunpack.c.l.b16 %v2555
        %v2856 = vunpack.c.l.b16 %v2556
        %v2857 = vunpack.c.l.b16 %v2557
        %v2858 = vunpack.c.l.b16 %v2558
        %v2859 = vunpack.c.l.b16 %v2559
        %v2860 = vunpack.c.l.b16 %v2560
        %v2861 = vunpack.c.l.b16 %v2561
        %v2862 = vunpack.c.l.b16 %v2562
        %v2863 = vunpack.c.l.b16 %v2563
        %v2864 = vunpack.c.l.b16 %v2564
        %v2865 = vunpack.c.l.b16 %v2565
        %v2866 = vunpack.c.l.b16 %v2566
        %v2867 = vunpack.c.l.b16 %v2567
        %v2868 = vunpack.c.l.b16 %v2568
        %v2869 = vunpack.c.l.b16 %v2569
        %v2870 = vpack.c.b16 %v2846, %v2845
        %v2871 = vpack.c.b16 %v2848, %v2847
        %v2872 = vpack.c.b16 %v2850, %v2849
        %v2873 = vpack.c.b16 %v2852, %v2851
        %v2874 = vpack.c.b16 %v2854, %v2853
        %v2875 = vpack.c.b16 %v2856, %v2855
        %v2876 = vpack.c.b16 %v2858, %v2857
        %v2877 = vpack.c.b16 %v2860, %v2859
        %v2878 = vpack.c.b16 %v2862, %v2861
        %v2879 = vpack.c.b16 %v2864, %v2863
        %v2880 = vpack.c.b16 %v2866, %v2865
        %v2881 = vpack.c.b16 %v2868, %v2867
        %v2882 = vpack.c.b16 %v2869, %v2869
        %v2921 = vunpack.c.l.b16 %v2595
        %v2922 = vunpack.c.l.b16 %v2596
        %v2923 = vunpack.c.l.b16 %v2597
        %v2924 = vunpack.c.l.b16 %v2598
        %v2925 = vunpack.c.l.b16 %v2599
        %v2926 = vunpack.c.l.b16 %v2600
        %v2927 = vunpack.c.l.b16 %v2601
        %v2928 = vunpack.c.l.b16 %v2602
        %v2929 = vunpack.c.l.b16 %v2603
        %v2930 = vunpack.c.l.b16 %v2604
        %v2931 = vunpack.c.l.b16 %v2605
        %v2932 = vunpack.c.l.b16 %v2606
        %v2933 = vunpack.c.l.b16 %v2607
        %v2934 = vunpack.c.l.b16 %v2608
        %v2935 = vunpack.c.l.b16 %v2609
        %v2936 = vunpack.c.l.b16 %v2610
        %v2937 = vunpack.c.l.b16 %v2611
        %v2938 = vunpack.c.l.b16 %v2612
        %v2939 = vunpack.c.l.b16 %v2613
        %v2940 = vunpack.c.l.b16 %v2614
        %v2941 = vunpack.c.l.b16 %v2615
        %v2942 = vunpack.c.l.b16 %v2616
        %v2943 = vunpack.c.l.b16 %v2617
        %v2944 = vunpack.c.l.b16 %v2618
        %v2945 = vunpack.c.l.b16 %v2619
        %v2946 = vpack.c.b16 %v2922, %v2921
        %v2947 = vpack.c.b16 %v2924, %v2923
        %v2948 = vpack.c.b16 %v2926, %v2925
        %v2949 = vpack.c.b16 %v2928, %v2927
        %v2950 = vpack.c.b16 %v2930, %v2929
        %v2951 = vpack.c.b16 %v2932, %v2931
        %v2952 = vpack.c.b16 %v2934, %v2933
        %v2953 = vpack.c.b16 %v2936, %v2935
        %v2954 = vpack.c.b16 %v2938, %v2937
        %v2955 = vpack.c.b16 %v2940, %v2939
        %v2956 = vpack.c.b16 %v2942, %v2941
        %v2957 = vpack.c.b16 %v2944, %v2943
        %v2958 = vpack.c.b16 %v2945, %v2945
        %v2997 = vunpack.c.l.b16 %v2645
        %v2998 = vunpack.c.l.b16 %v2646
        %v2999 = vunpack.c.l.b16 %v2647
        %v3000 = vunpack.c.l.b16 %v2648
        %v3001 = vunpack.c.l.b16 %v2649
        %v3002 = vunpack.c.l.b16 %v2650
        %v3003 = vunpack.c.l.b16 %v2651
        %v3004 = vunpack.c.l.b16 %v2652
        %v3005 = vunpack.c.l.b16 %v2653
        %v3006 = vunpack.c.l.b16 %v2654
        %v3007 = vunpack.c.l.b16 %v2655
        %v3008 = vunpack.c.l.b16 %v2656
        %v3009 = vunpack.c.l.b16 %v2657
        %v3010 = vunpack.c.l.b16 %v2658
        %v3011 = vunpack.c.l.b16 %v2659
        %v3012 = vunpack.c.l.b16 %v2660
        %v3013 = vunpack.c.l.b16 %v2661
        %v3014 = vunpack.c.l.b16 %v2662
        %v3015 = vunpack.c.l.b16 %v2663
        %v3016 = vunpack.c.l.b16 %v2664
        %v3017 = vunpack.c.l.b16 %v2665
        %v3018 = vunpack.c.l.b16 %v2666
        %v3019 = vunpack.c.l.b16 %v2667
        %v3020 = vunpack.c.l.b16 %v2668
        %v3021 = vunpack.c.l.b16 %v2669
        %v3022 = vpack.c.b16 %v2998, %v2997
        %v3023 = vpack.c.b16 %v3000, %v2999
        %v3024 = vpack.c.b16 %v3002, %v3001
        %v3025 = vpack.c.b16 %v3004, %v3003
        %v3026 = vpack.c.b16 %v3006, %v3005
        %v3027 = vpack.c.b16 %v3008, %v3007
        %v3028 = vpack.c.b16 %v3010, %v3009
        %v3029 = vpack.c.b16 %v3012, %v3011
        %v3030 = vpack.c.b16 %v3014, %v3013
        %v3031 = vpack.c.b16 %v3016, %v3015
        %v3032 = vpack.c.b16 %v3018, %v3017
        %v3033 = vpack.c.b16 %v3020, %v3019
        %v3034 = vpack.c.b16 %v3021, %v3021
        %v3051 = vunpack.c.l.b16 %v2673
        %v3052 = vunpack.c.l.b16 %v2674
        %v3053 = vunpack.c.l.b16 %v2675
        %v3054 = vpack.c.b16 %v3052, %v3051
        %v3055 = vpack.c.b16 %v3053, %v3053
        %v3061 = vunpack.c.l.b16 %v2679
        %v3062 = vunpack.c.l.b16 %v2680
        %v3063 = vunpack.c.l.b16 %v2681
        %v3064 = vpack.c.b16 %v3062, %v3061
        %v3065 = vpack.c.b16 %v3063, %v3063
        %v3093 = vunpack.c.l.b16 %v2707
        %v3094 = vunpack.c.l.b16 %v2708
        %v3095 = vunpack.c.l.b16 %v2709
        %v3096 = vunpack.c.l.b16 %v2710
        %v3097 = vunpack.c.l.b16 %v2711
        %v3098 = vunpack.c.l.b16 %v2712
        %v3099 = vunpack.c.l.b16 %v2713
        %v3100 = vunpack.c.l.b16 %v2714
        %v3101 = vunpack.c.l.b16 %v2715
        %v3102 = vunpack.c.l.b16 %v2716
        %v3103 = vunpack.c.l.b16 %v2717
        %v3104 = vunpack.c.l.b16 %v2718
        %v3105 = vunpack.c.l.b16 %v2719
        %v3106 = vunpack.c.l.b16 %v2720
        %v3107 = vunpack.c.l.b16 %v2721
        %v3108 = vunpack.c.l.b16 %v2722
        %v3109 = vunpack.c.l.b16 %v2723
        %v3110 = vunpack.c.l.b16 %v2724
        %v3111 = vunpack.c.l.b16 %v2725
        %v3112 = vunpack.c.l.b16 %v2726
        %v3113 = vunpack.c.l.b16 %v2727
        %v3114 = vunpack.c.l.b16 %v2728
        %v3115 = vunpack.c.l.b16 %v2729
        %v3116 = vunpack.c.l.b16 %v2730
        %v3117 = vunpack.c.l.b16 %v2731
        %v3118 = vpack.c.b16 %v3094, %v3093
        %v3119 = vpack.c.b16 %v3096, %v3095
        %v3120 = vpack.c.b16 %v3098, %v3097
        %v3121 = vpack.c.b16 %v3100, %v3099
        %v3122 = vpack.c.b16 %v3102, %v3101
        %v3123 = vpack.c.b16 %v3104, %v3103
        %v3124 = vpack.c.b16 %v3106, %v3105
        %v3125 = vpack.c.b16 %v3108, %v3107
        %v3126 = vpack.c.b16 %v3110, %v3109
        %v3127 = vpack.c.b16 %v3112, %v3111
        %v3128 = vpack.c.b16 %v3114, %v3113
        %v3129 = vpack.c.b16 %v3116, %v3115
        %v3130 = vpack.c.b16 %v3117, %v3117
        %v3147 = vunpack.c.l.b16 %v2735
        %v3148 = vunpack.c.l.b16 %v2736
        %v3149 = vunpack.c.l.b16 %v2737
        %v3150 = vpack.c.b16 %v3148, %v3147
        %v3151 = vpack.c.b16 %v3149, %v3149
        %v3157 = vunpack.c.l.b16 %v2741
        %v3158 = vunpack.c.l.b16 %v2742
        %v3159 = vunpack.c.l.b16 %v2743
        %v3160 = vpack.c.b16 %v3158, %v3157
        %v3161 = vpack.c.b16 %v3159, %v3159
        %v3164 = vld [vmem:[%s3] sm:$0xf]
        %v3165 = vld [vmem:[%s3 + $0x4] sm:$0xf]
        %v3166 = vld [vmem:[%s3 + $0x8] sm:$0xf]
        %v3167 = vld [vmem:[%s3 + $0xc] sm:$0xf]
        %v3168 = vld [vmem:[%s3 + $0x10] sm:$0xf]
        %v3169 = vld [vmem:[%s3 + $0x14] sm:$0xf]
        %v3170 = vld [vmem:[%s3 + $0x18] sm:$0xf]
        %v3171 = vld [vmem:[%s3 + $0x1c] sm:$0xf]
        %v3172 = vld [vmem:[%s3 + $0x20] sm:$0xf]
        %v3173 = vld [vmem:[%s3 + $0x24] sm:$0xf]
        %v3174 = vld [vmem:[%s3 + $0x28] sm:$0xf]
        %v3175 = vld [vmem:[%s3 + $0x2c] sm:$0xf]
        %v3176 = vld [vmem:[%s3 + $0x30] sm:$0xf]
        %v3177 = vld [vmem:[%s3 + $0x34] sm:$0xf]
        %v3178 = vld [vmem:[%s3 + $0x38] sm:$0xf]
        %v3179 = vld [vmem:[%s3 + $0x3c] sm:$0xf]
        %v3180 = vld [vmem:[%s3 + $0x40] sm:$0xf]
        %v3181 = vld [vmem:[%s3 + $0x44] sm:$0xf]
        %v3182 = vld [vmem:[%s3 + $0x48] sm:$0xf]
        %v3183 = vld [vmem:[%s3 + $0x4c] sm:$0xf]
        %v3184 = vld [vmem:[%s3 + $0x50] sm:$0xf]
        %v3185 = vld [vmem:[%s3 + $0x54] sm:$0xf]
        %v3186 = vld [vmem:[%s3 + $0x58] sm:$0xf]
        %v3187 = vld [vmem:[%s3 + $0x5c] sm:$0xf]
        %v3188 = vld [vmem:[%s3 + $0x60] sm:$0xf]
        %v3189 = vld [vmem:[%s3 + $0x64] sm:$0xf]
        %v3190 = vld [vmem:[%s3 + $0x68] sm:$0xf]
        %v3191 = vld [vmem:[%s3 + $0x6c] sm:$0xf]
        %v3192 = vld [vmem:[%s3 + $0x70] sm:$0xf]
        %v3193 = vld [vmem:[%s3 + $0x74] sm:$0xf]
        %v3194 = vld [vmem:[%s3 + $0x78] sm:$0xf]
        %v3195 = vld [vmem:[%s3 + $0x7c] sm:$0xf]
        %v3196 = vld [vmem:[%s3 + $0x80] sm:$0xf]
        %v3197 = vld [vmem:[%s3 + $0x84] sm:$0xf]
        %v3198 = vld [vmem:[%s3 + $0x88] sm:$0xf]
        %v3199 = vld [vmem:[%s3 + $0x8c] sm:$0xf]
        %v3200 = vld [vmem:[%s3 + $0x90] sm:$0xf]
        %v3201 = vld [vmem:[%s3 + $0x94] sm:$0xf]
        %v3202 = vld [vmem:[%s3 + $0x98] sm:$0xf]
        %v3203 = vld [vmem:[%s3 + $0x9c] sm:$0xf]
        %v3204 = vld [vmem:[%s3 + $0xa0] sm:$0xf]
        %v3205 = vld [vmem:[%s3 + $0xa4] sm:$0xf]
        %v3206 = vld [vmem:[%s3 + $0xa8] sm:$0xf]
        %v3207 = vld [vmem:[%s3 + $0xac] sm:$0xf]
        %v3208 = vld [vmem:[%s3 + $0xb0] sm:$0xf]
        %v3209 = vld [vmem:[%s3 + $0xb4] sm:$0xf]
        %v3210 = vld [vmem:[%s3 + $0xb8] sm:$0xf]
        %v3211 = vld [vmem:[%s3 + $0xbc] sm:$0xf]
        %v3212 = vld [vmem:[%s3 + $0xc0] sm:$0xf]
        %v3213 = vld [vmem:[%s3 + $0xc4] sm:$0xf]
        %v3214 = vld [vmem:[%s3 + $0xc8] sm:$0xf]
        %v3215 = vld [vmem:[%s3 + $0xcc] sm:$0xf]
        %v3216 = vld [vmem:[%s3 + $0xd0] sm:$0xf]
        %v3217 = vld [vmem:[%s3 + $0xd4] sm:$0xf]
        %v3218 = vld [vmem:[%s3 + $0xd8] sm:$0xf]
        %v3219 = vld [vmem:[%s3 + $0xdc] sm:$0xf]
        %v3220 = vld [vmem:[%s3 + $0xe0] sm:$0xf]
        %v3221 = vld [vmem:[%s3 + $0xe4] sm:$0xf]
        %v3222 = vld [vmem:[%s3 + $0xe8] sm:$0xf]
        %v3223 = vld [vmem:[%s3 + $0xec] sm:$0xf]
        %v3224 = vld [vmem:[%s3 + $0xf0] sm:$0xf]
        %v3225 = vld [vmem:[%s3 + $0xf4] sm:$0xf]
        %v3226 = vld [vmem:[%s3 + $0xf8] sm:$0xf]
        %v3227 = vld [vmem:[%s3 + $0xfc] sm:$0xf]
        %v3228 = vld [vmem:[%s3 + $0x100] sm:$0xf]
        %v3229 = vld [vmem:[%s3 + $0x104] sm:$0xf]
        %v3230 = vld [vmem:[%s3 + $0x108] sm:$0xf]
        %v3231 = vld [vmem:[%s3 + $0x10c] sm:$0xf]
        %v3232 = vld [vmem:[%s3 + $0x110] sm:$0xf]
        %v3233 = vld [vmem:[%s3 + $0x114] sm:$0xf]
        %v3234 = vld [vmem:[%s3 + $0x118] sm:$0xf]
        %v3235 = vld [vmem:[%s3 + $0x11c] sm:$0xf]
        %v3236 = vld [vmem:[%s3 + $0x120] sm:$0xf]
        %v3237 = vld [vmem:[%s3 + $0x124] sm:$0xf]
        %v3238 = vld [vmem:[%s3 + $0x128] sm:$0xf]
        %v3239 = vld [vmem:[%s3 + $0x12c] sm:$0xf]
        %v3240 = vld [vmem:[%s3 + $0x130] sm:$0xf]
        %v3241 = vld [vmem:[%s3 + $0x134] sm:$0xf]
        %v3242 = vld [vmem:[%s3 + $0x138] sm:$0xf]
        %v3243 = vld [vmem:[%s3 + $0x13c] sm:$0xf]
        %v3244 = vld [vmem:[%s3 + $0x140] sm:$0xf]
        %v3245 = vld [vmem:[%s3 + $0x144] sm:$0xf]
        %v3246 = vld [vmem:[%s3 + $0x148] sm:$0xf]
        %v3247 = vld [vmem:[%s3 + $0x14c] sm:$0xf]
        %v3248 = vld [vmem:[%s3 + $0x150] sm:$0xf]
        %v3249 = vld [vmem:[%s3 + $0x154] sm:$0xf]
        %v3250 = vld [vmem:[%s3 + $0x158] sm:$0xf]
        %v3251 = vld [vmem:[%s3 + $0x15c] sm:$0xf]
        %v3252 = vld [vmem:[%s3 + $0x160] sm:$0xf]
        %v3253 = vld [vmem:[%s3 + $0x164] sm:$0xf]
        %v3254 = vld [vmem:[%s3 + $0x168] sm:$0xf]
        %v3255 = vld [vmem:[%s3 + $0x16c] sm:$0xf]
        %v3256 = vld [vmem:[%s3 + $0x170] sm:$0xf]
        %v3257 = vld [vmem:[%s3 + $0x174] sm:$0xf]
        %v3258 = vld [vmem:[%s3 + $0x178] sm:$0xf]
        %v3259 = vld [vmem:[%s3 + $0x17c] sm:$0xf]
        %v3260 = vld [vmem:[%s3 + $0x180] sm:$0xf]
        %v3261 = vld [vmem:[%s3 + $0x184] sm:$0xf]
        %v3262 = vld [vmem:[%s3 + $0x188] sm:$0xf]
        %v3263 = vld [vmem:[%s3 + $0x18c] sm:$0xf]
        %v3264 = vld [vmem:[%s3 + $0x190] sm:$0xf]
        %v3265 = vld [vmem:[%s3 + $0x194] sm:$0xf]
        %v3266 = vld [vmem:[%s3 + $0x198] sm:$0xf]
        %v3267 = vld [vmem:[%s3 + $0x19c] sm:$0xf]
        %v3268 = vld [vmem:[%s3 + $0x1a0] sm:$0xf]
        %v3269 = vld [vmem:[%s3 + $0x1a4] sm:$0xf]
        %v3270 = vld [vmem:[%s3 + $0x1a8] sm:$0xf]
        %v3271 = vld [vmem:[%s3 + $0x1ac] sm:$0xf]
        %v3272 = vld [vmem:[%s3 + $0x1b0] sm:$0xf]
        %v3273 = vld [vmem:[%s3 + $0x1b4] sm:$0xf]
        %v3274 = vld [vmem:[%s3 + $0x1b8] sm:$0xf]
        %v3275 = vld [vmem:[%s3 + $0x1bc] sm:$0xf]
        %v3276 = vld [vmem:[%s3 + $0x1c0] sm:$0xf]
        %v3277 = vld [vmem:[%s3 + $0x1c4] sm:$0xf]
        %v3278 = vld [vmem:[%s3 + $0x1c8] sm:$0xf]
        %v3279 = vld [vmem:[%s3 + $0x1cc] sm:$0xf]
        %v3280 = vld [vmem:[%s3 + $0x1d0] sm:$0xf]
        %v3281 = vld [vmem:[%s3 + $0x1d4] sm:$0xf]
        %v3282 = vld [vmem:[%s3 + $0x1d8] sm:$0xf]
        %v3283 = vld [vmem:[%s3 + $0x1dc] sm:$0xf]
        %v3284 = vld [vmem:[%s3 + $0x1e0] sm:$0xf]
        %v3285 = vld [vmem:[%s3 + $0x1e4] sm:$0xf]
        %v3286 = vld [vmem:[%s3 + $0x1e8] sm:$0xf]
        %v3287 = vld [vmem:[%s3 + $0x1ec] sm:$0xf]
        %v3288 = vld [vmem:[%s3 + $0x1f0] sm:$0xf]
        %v3289 = vld [vmem:[%s3 + $0x1f4] sm:$0xf]
        %v3290 = vld [vmem:[%s3 + $0x1f8] sm:$0xf]
        %v3291 = vld [vmem:[%s3 + $0x1fc] sm:$0xf]
        %v3292 = vld [vmem:[%s3 + $0x200] sm:$0xf]
        %v3293 = vld [vmem:[%s3 + $0x204] sm:$0xf]
        %v3294 = vld [vmem:[%s3 + $0x208] sm:$0xf]
        %v3295 = vld [vmem:[%s3 + $0x20c] sm:$0xf]
        %v3296 = vld [vmem:[%s3 + $0x210] sm:$0xf]
        %v3297 = vld [vmem:[%s3 + $0x214] sm:$0xf]
        %v3298 = vld [vmem:[%s3 + $0x218] sm:$0xf]
        %v3299 = vld [vmem:[%s3 + $0x21c] sm:$0xf]
        %v3300 = vld [vmem:[%s3 + $0x220] sm:$0xf]
        %v3301 = vld [vmem:[%s3 + $0x224] sm:$0xf]
        %v3302 = vld [vmem:[%s3 + $0x228] sm:$0xf]
        %v3303 = vld [vmem:[%s3 + $0x22c] sm:$0xf]
        %v3304 = vld [vmem:[%s3 + $0x230] sm:$0xf]
        %v3305 = vld [vmem:[%s3 + $0x234] sm:$0xf]
        %v3306 = vld [vmem:[%s3 + $0x238] sm:$0xf]
        %v3307 = vld [vmem:[%s3 + $0x23c] sm:$0xf]
        %v3308 = vld [vmem:[%s4] sm:$0x1]
        %v3310 = vperm.slane %v3308, 0
        %v3456 = vunpack.c.l.b16 %v3164
        %v3457 = vunpack.c.l.b16 %v3165
        %v3458 = vunpack.c.l.b16 %v3166
        %v3459 = vunpack.c.l.b16 %v3167
        %v3460 = vunpack.c.l.b16 %v3168
        %v3461 = vunpack.c.l.b16 %v3169
        %v3462 = vunpack.c.l.b16 %v3170
        %v3463 = vunpack.c.l.b16 %v3171
        %v3464 = vunpack.c.l.b16 %v3172
        %v3465 = vunpack.c.l.b16 %v3173
        %v3466 = vunpack.c.l.b16 %v3174
        %v3467 = vunpack.c.l.b16 %v3175
        %v3468 = vunpack.c.l.b16 %v3176
        %v3469 = vunpack.c.l.b16 %v3177
        %v3470 = vunpack.c.l.b16 %v3178
        %v3471 = vunpack.c.l.b16 %v3179
        %v3472 = vunpack.c.l.b16 %v3180
        %v3473 = vunpack.c.l.b16 %v3181
        %v3474 = vunpack.c.l.b16 %v3182
        %v3475 = vunpack.c.l.b16 %v3183
        %v3476 = vunpack.c.l.b16 %v3184
        %v3477 = vunpack.c.l.b16 %v3185
        %v3478 = vunpack.c.l.b16 %v3186
        %v3479 = vunpack.c.l.b16 %v3187
        %v3480 = vunpack.c.l.b16 %v3188
        %v3481 = vunpack.c.l.b16 %v3189
        %v3482 = vunpack.c.l.b16 %v3190
        %v3483 = vunpack.c.l.b16 %v3191
        %v3484 = vunpack.c.l.b16 %v3192
        %v3485 = vunpack.c.l.b16 %v3193
        %v3486 = vunpack.c.l.b16 %v3194
        %v3487 = vunpack.c.l.b16 %v3195
        %v3488 = vunpack.c.l.b16 %v3196
        %v3489 = vunpack.c.l.b16 %v3197
        %v3490 = vunpack.c.l.b16 %v3198
        %v3491 = vunpack.c.l.b16 %v3199
        %v3492 = vunpack.c.l.b16 %v3200
        %v3493 = vunpack.c.l.b16 %v3201
        %v3494 = vunpack.c.l.b16 %v3202
        %v3495 = vunpack.c.l.b16 %v3203
        %v3496 = vunpack.c.l.b16 %v3204
        %v3497 = vunpack.c.l.b16 %v3205
        %v3498 = vunpack.c.l.b16 %v3206
        %v3499 = vunpack.c.l.b16 %v3207
        %v3500 = vunpack.c.l.b16 %v3208
        %v3501 = vunpack.c.l.b16 %v3209
        %v3502 = vunpack.c.l.b16 %v3210
        %v3503 = vunpack.c.l.b16 %v3211
        %v3504 = vunpack.c.l.b16 %v3212
        %v3505 = vunpack.c.l.b16 %v3213
        %v3506 = vunpack.c.l.b16 %v3214
        %v3507 = vunpack.c.l.b16 %v3215
        %v3508 = vunpack.c.l.b16 %v3216
        %v3509 = vunpack.c.l.b16 %v3217
        %v3510 = vunpack.c.l.b16 %v3218
        %v3511 = vunpack.c.l.b16 %v3219
        %v3512 = vunpack.c.l.b16 %v3220
        %v3513 = vunpack.c.l.b16 %v3221
        %v3514 = vunpack.c.l.b16 %v3222
        %v3515 = vunpack.c.l.b16 %v3223
        %v3516 = vunpack.c.l.b16 %v3224
        %v3517 = vunpack.c.l.b16 %v3225
        %v3518 = vunpack.c.l.b16 %v3226
        %v3519 = vunpack.c.l.b16 %v3227
        %v3520 = vunpack.c.l.b16 %v3228
        %v3521 = vunpack.c.l.b16 %v3229
        %v3522 = vunpack.c.l.b16 %v3230
        %v3523 = vunpack.c.l.b16 %v3231
        %v3524 = vunpack.c.l.b16 %v3232
        %v3525 = vunpack.c.l.b16 %v3233
        %v3526 = vunpack.c.l.b16 %v3234
        %v3527 = vunpack.c.l.b16 %v3235
        %v3528 = vunpack.c.l.b16 %v3236
        %v3529 = vunpack.c.l.b16 %v3237
        %v3530 = vunpack.c.l.b16 %v3238
        %v3531 = vunpack.c.l.b16 %v3239
        %v3532 = vunpack.c.l.b16 %v3240
        %v3533 = vunpack.c.l.b16 %v3241
        %v3534 = vunpack.c.l.b16 %v3242
        %v3535 = vunpack.c.l.b16 %v3243
        %v3536 = vunpack.c.l.b16 %v3244
        %v3537 = vunpack.c.l.b16 %v3245
        %v3538 = vunpack.c.l.b16 %v3246
        %v3539 = vunpack.c.l.b16 %v3247
        %v3540 = vunpack.c.l.b16 %v3248
        %v3541 = vunpack.c.l.b16 %v3249
        %v3542 = vunpack.c.l.b16 %v3250
        %v3543 = vunpack.c.l.b16 %v3251
        %v3544 = vunpack.c.l.b16 %v3252
        %v3545 = vunpack.c.l.b16 %v3253
        %v3546 = vunpack.c.l.b16 %v3254
        %v3547 = vunpack.c.l.b16 %v3255
        %v3548 = vunpack.c.l.b16 %v3256
        %v3549 = vunpack.c.l.b16 %v3257
        %v3550 = vunpack.c.l.b16 %v3258
        %v3551 = vunpack.c.l.b16 %v3259
        %v3552 = vunpack.c.l.b16 %v3260
        %v3553 = vunpack.c.l.b16 %v3261
        %v3554 = vunpack.c.l.b16 %v3262
        %v3555 = vunpack.c.l.b16 %v3263
        %v3556 = vunpack.c.l.b16 %v3264
        %v3557 = vunpack.c.l.b16 %v3265
        %v3558 = vunpack.c.l.b16 %v3266
        %v3559 = vunpack.c.l.b16 %v3267
        %v3560 = vunpack.c.l.b16 %v3268
        %v3561 = vunpack.c.l.b16 %v3269
        %v3562 = vunpack.c.l.b16 %v3270
        %v3563 = vunpack.c.l.b16 %v3271
        %v3564 = vunpack.c.l.b16 %v3272
        %v3565 = vunpack.c.l.b16 %v3273
        %v3566 = vunpack.c.l.b16 %v3274
        %v3567 = vunpack.c.l.b16 %v3275
        %v3568 = vunpack.c.l.b16 %v3276
        %v3569 = vunpack.c.l.b16 %v3277
        %v3570 = vunpack.c.l.b16 %v3278
        %v3571 = vunpack.c.l.b16 %v3279
        %v3572 = vunpack.c.l.b16 %v3280
        %v3573 = vunpack.c.l.b16 %v3281
        %v3574 = vunpack.c.l.b16 %v3282
        %v3575 = vunpack.c.l.b16 %v3283
        %v3576 = vunpack.c.l.b16 %v3284
        %v3577 = vunpack.c.l.b16 %v3285
        %v3578 = vunpack.c.l.b16 %v3286
        %v3579 = vunpack.c.l.b16 %v3287
        %v3580 = vunpack.c.l.b16 %v3288
        %v3581 = vunpack.c.l.b16 %v3289
        %v3582 = vunpack.c.l.b16 %v3290
        %v3583 = vunpack.c.l.b16 %v3291
        %v3584 = vunpack.c.l.b16 %v3292
        %v3585 = vunpack.c.l.b16 %v3293
        %v3586 = vunpack.c.l.b16 %v3294
        %v3587 = vunpack.c.l.b16 %v3295
        %v3588 = vunpack.c.l.b16 %v3296
        %v3589 = vunpack.c.l.b16 %v3297
        %v3590 = vunpack.c.l.b16 %v3298
        %v3591 = vunpack.c.l.b16 %v3299
        %v3592 = vunpack.c.l.b16 %v3300
        %v3593 = vunpack.c.l.b16 %v3301
        %v3594 = vunpack.c.l.b16 %v3302
        %v3595 = vunpack.c.l.b16 %v3303
        %v3596 = vunpack.c.l.b16 %v3304
        %v3597 = vunpack.c.l.b16 %v3305
        %v3598 = vunpack.c.l.b16 %v3306
        %v3599 = vunpack.c.l.b16 %v3307
        %v3600 = vpack.c.b16 %v3457, %v3456
        %v3601 = vpack.c.b16 %v3459, %v3458
        %v3602 = vpack.c.b16 %v3461, %v3460
        %v3603 = vpack.c.b16 %v3463, %v3462
        %v3604 = vpack.c.b16 %v3465, %v3464
        %v3605 = vpack.c.b16 %v3467, %v3466
        %v3606 = vpack.c.b16 %v3469, %v3468
        %v3607 = vpack.c.b16 %v3471, %v3470
        %v3608 = vpack.c.b16 %v3473, %v3472
        %v3609 = vpack.c.b16 %v3475, %v3474
        %v3610 = vpack.c.b16 %v3477, %v3476
        %v3611 = vpack.c.b16 %v3479, %v3478
        %v3612 = vpack.c.b16 %v3481, %v3480
        %v3613 = vpack.c.b16 %v3483, %v3482
        %v3614 = vpack.c.b16 %v3485, %v3484
        %v3615 = vpack.c.b16 %v3487, %v3486
        %v3616 = vpack.c.b16 %v3489, %v3488
        %v3617 = vpack.c.b16 %v3491, %v3490
        %v3618 = vpack.c.b16 %v3493, %v3492
        %v3619 = vpack.c.b16 %v3495, %v3494
        %v3620 = vpack.c.b16 %v3497, %v3496
        %v3621 = vpack.c.b16 %v3499, %v3498
        %v3622 = vpack.c.b16 %v3501, %v3500
        %v3623 = vpack.c.b16 %v3503, %v3502
        %v3624 = vpack.c.b16 %v3505, %v3504
        %v3625 = vpack.c.b16 %v3507, %v3506
        %v3626 = vpack.c.b16 %v3509, %v3508
        %v3627 = vpack.c.b16 %v3511, %v3510
        %v3628 = vpack.c.b16 %v3513, %v3512
        %v3629 = vpack.c.b16 %v3515, %v3514
        %v3630 = vpack.c.b16 %v3517, %v3516
        %v3631 = vpack.c.b16 %v3519, %v3518
        %v3632 = vpack.c.b16 %v3521, %v3520
        %v3633 = vpack.c.b16 %v3523, %v3522
        %v3634 = vpack.c.b16 %v3525, %v3524
        %v3635 = vpack.c.b16 %v3527, %v3526
        %v3636 = vpack.c.b16 %v3529, %v3528
        %v3637 = vpack.c.b16 %v3531, %v3530
        %v3638 = vpack.c.b16 %v3533, %v3532
        %v3639 = vpack.c.b16 %v3535, %v3534
        %v3640 = vpack.c.b16 %v3537, %v3536
        %v3641 = vpack.c.b16 %v3539, %v3538
        %v3642 = vpack.c.b16 %v3541, %v3540
        %v3643 = vpack.c.b16 %v3543, %v3542
        %v3644 = vpack.c.b16 %v3545, %v3544
        %v3645 = vpack.c.b16 %v3547, %v3546
        %v3646 = vpack.c.b16 %v3549, %v3548
        %v3647 = vpack.c.b16 %v3551, %v3550
        %v3648 = vpack.c.b16 %v3553, %v3552
        %v3649 = vpack.c.b16 %v3555, %v3554
        %v3650 = vpack.c.b16 %v3557, %v3556
        %v3651 = vpack.c.b16 %v3559, %v3558
        %v3652 = vpack.c.b16 %v3561, %v3560
        %v3653 = vpack.c.b16 %v3563, %v3562
        %v3654 = vpack.c.b16 %v3565, %v3564
        %v3655 = vpack.c.b16 %v3567, %v3566
        %v3656 = vpack.c.b16 %v3569, %v3568
        %v3657 = vpack.c.b16 %v3571, %v3570
        %v3658 = vpack.c.b16 %v3573, %v3572
        %v3659 = vpack.c.b16 %v3575, %v3574
        %v3660 = vpack.c.b16 %v3577, %v3576
        %v3661 = vpack.c.b16 %v3579, %v3578
        %v3662 = vpack.c.b16 %v3581, %v3580
        %v3663 = vpack.c.b16 %v3583, %v3582
        %v3664 = vpack.c.b16 %v3585, %v3584
        %v3665 = vpack.c.b16 %v3587, %v3586
        %v3666 = vpack.c.b16 %v3589, %v3588
        %v3667 = vpack.c.b16 %v3591, %v3590
        %v3668 = vpack.c.b16 %v3593, %v3592
        %v3669 = vpack.c.b16 %v3595, %v3594
        %v3670 = vpack.c.b16 %v3597, %v3596
        %v3671 = vpack.c.b16 %v3599, %v3598
        %3744 = vmatpush.bf16.msra.mxu0 %v3607
        %3745 = vmatpush.bf16.msra.mxu0 %v3606
        %3746 = vmatpush.bf16.msra.mxu0 %v3605
        %3747 = vmatpush.bf16.msra.mxu0 %v3604
        %3748 = vmatpush.bf16.msra.mxu0 %v3603
        %3749 = vmatpush.bf16.msra.mxu0 %v3602
        %3750 = vmatpush.bf16.msra.mxu0 %v3601
        %3751 = vmatpush.bf16.msra.mxu0 %v3600
        %3752 = vmatmul.bf16.gmra.mxu0 %v2794
        %v3753 = vpop.f32.mrf.mxu0
        %v3754 = vadd.f32 %v3310, %v3753
        %v3755 = vpop.f32.mrf.mxu0
        %v3756 = vadd.f32 %v3310, %v3755
        %3757 = vmatmul.bf16.gmra.mxu0 %v2795
        %v3758 = vpop.f32.mrf.mxu0
        %v3759 = vadd.f32 %v3310, %v3758
        %v3760 = vpop.f32.mrf.mxu0
        %v3761 = vadd.f32 %v3310, %v3760
        %3762 = vmatmul.bf16.gmra.mxu0 %v2796
        %v3763 = vpop.f32.mrf.mxu0
        %v3764 = vadd.f32 %v3310, %v3763
        %v3765 = vpop.f32.mrf.mxu0
        %v3766 = vadd.f32 %v3310, %v3765
        %3767 = vmatmul.bf16.gmra.mxu0 %v2797
        %v3768 = vpop.f32.mrf.mxu0
        %v3769 = vadd.f32 %v3310, %v3768
        %v3770 = vpop.f32.mrf.mxu0
        %v3771 = vadd.f32 %v3310, %v3770
        %3772 = vmatmul.bf16.gmra.mxu0 %v2798
        %v3773 = vpop.f32.mrf.mxu0
        %v3774 = vadd.f32 %v3310, %v3773
        %v3775 = vpop.f32.mrf.mxu0
        %v3776 = vadd.f32 %v3310, %v3775
        %3777 = vmatmul.bf16.gmra.mxu0 %v2799
        %v3778 = vpop.f32.mrf.mxu0
        %v3779 = vadd.f32 %v3310, %v3778
        %v3780 = vpop.f32.mrf.mxu0
        %v3781 = vadd.f32 %v3310, %v3780
        %3782 = vmatmul.bf16.gmra.mxu0 %v2800
        %v3783 = vpop.f32.mrf.mxu0
        %v3784 = vadd.f32 %v3310, %v3783
        %v3785 = vpop.f32.mrf.mxu0
        %v3786 = vadd.f32 %v3310, %v3785
        %3787 = vmatmul.bf16.gmra.mxu0 %v2801
        %v3788 = vpop.f32.mrf.mxu0
        %v3789 = vadd.f32 %v3310, %v3788
        %v3790 = vpop.f32.mrf.mxu0
        %v3791 = vadd.f32 %v3310, %v3790
        %3792 = vmatmul.bf16.gmra.mxu0 %v2802
        %v3793 = vpop.f32.mrf.mxu0
        %v3794 = vadd.f32 %v3310, %v3793
        %v3795 = vpop.f32.mrf.mxu0
        %v3796 = vadd.f32 %v3310, %v3795
        %3797 = vmatmul.bf16.gmra.mxu0 %v2803
        %v3798 = vpop.f32.mrf.mxu0
        %v3799 = vadd.f32 %v3310, %v3798
        %v3800 = vpop.f32.mrf.mxu0
        %v3801 = vadd.f32 %v3310, %v3800
        %3802 = vmatmul.bf16.gmra.mxu0 %v2804
        %v3803 = vpop.f32.mrf.mxu0
        %v3804 = vadd.f32 %v3310, %v3803
        %v3805 = vpop.f32.mrf.mxu0
        %v3806 = vadd.f32 %v3310, %v3805
        %3807 = vmatmul.bf16.gmra.mxu0 %v2805
        %v3808 = vpop.f32.mrf.mxu0
        %v3809 = vadd.f32 %v3310, %v3808
        %v3810 = vpop.f32.mrf.mxu0
        %v3811 = vadd.f32 %v3310, %v3810
        %3812 = vmatmul.bf16.gmra.mxu0 %v2806
        %v3813 = vpop.f32.mrf.mxu0
        %v3814 = vadd.f32 %v3310, %v3813
        %v3815 = vpop.f32.mrf.mxu0
        %3816 = vdwg.mxu0
        %3817 = vmatpush.bf16.msra.mxu0 %v3615
        %3818 = vmatpush.bf16.msra.mxu0 %v3614
        %3819 = vmatpush.bf16.msra.mxu0 %v3613
        %3820 = vmatpush.bf16.msra.mxu0 %v3612
        %3821 = vmatpush.bf16.msra.mxu0 %v3611
        %3822 = vmatpush.bf16.msra.mxu0 %v3610
        %3823 = vmatpush.bf16.msra.mxu0 %v3609
        %3824 = vmatpush.bf16.msra.mxu0 %v3608
        %3825 = vmatmul.bf16.gmra.mxu0 %v2870
        %v3826 = vpop.f32.mrf.mxu0
        %v3827 = vadd.f32 %v3754, %v3826
        %v3828 = vpop.f32.mrf.mxu0
        %v3829 = vadd.f32 %v3756, %v3828
        %3830 = vmatmul.bf16.gmra.mxu0 %v2871
        %v3831 = vpop.f32.mrf.mxu0
        %v3832 = vadd.f32 %v3759, %v3831
        %v3833 = vpop.f32.mrf.mxu0
        %v3834 = vadd.f32 %v3761, %v3833
        %3835 = vmatmul.bf16.gmra.mxu0 %v2872
        %v3836 = vpop.f32.mrf.mxu0
        %v3837 = vadd.f32 %v3764, %v3836
        %v3838 = vpop.f32.mrf.mxu0
        %v3839 = vadd.f32 %v3766, %v3838
        %3840 = vmatmul.bf16.gmra.mxu0 %v2873
        %v3841 = vpop.f32.mrf.mxu0
        %v3842 = vadd.f32 %v3769, %v3841
        %v3843 = vpop.f32.mrf.mxu0
        %v3844 = vadd.f32 %v3771, %v3843
        %3845 = vmatmul.bf16.gmra.mxu0 %v2874
        %v3846 = vpop.f32.mrf.mxu0
        %v3847 = vadd.f32 %v3774, %v3846
        %v3848 = vpop.f32.mrf.mxu0
        %v3849 = vadd.f32 %v3776, %v3848
        %3850 = vmatmul.bf16.gmra.mxu0 %v2875
        %v3851 = vpop.f32.mrf.mxu0
        %v3852 = vadd.f32 %v3779, %v3851
        %v3853 = vpop.f32.mrf.mxu0
        %v3854 = vadd.f32 %v3781, %v3853
        %3855 = vmatmul.bf16.gmra.mxu0 %v2876
        %v3856 = vpop.f32.mrf.mxu0
        %v3857 = vadd.f32 %v3784, %v3856
        %v3858 = vpop.f32.mrf.mxu0
        %v3859 = vadd.f32 %v3786, %v3858
        %3860 = vmatmul.bf16.gmra.mxu0 %v2877
        %v3861 = vpop.f32.mrf.mxu0
        %v3862 = vadd.f32 %v3789, %v3861
        %v3863 = vpop.f32.mrf.mxu0
        %v3864 = vadd.f32 %v3791, %v3863
        %3865 = vmatmul.bf16.gmra.mxu0 %v2878
        %v3866 = vpop.f32.mrf.mxu0
        %v3867 = vadd.f32 %v3794, %v3866
        %v3868 = vpop.f32.mrf.mxu0
        %v3869 = vadd.f32 %v3796, %v3868
        %3870 = vmatmul.bf16.gmra.mxu0 %v2879
        %v3871 = vpop.f32.mrf.mxu0
        %v3872 = vadd.f32 %v3799, %v3871
        %v3873 = vpop.f32.mrf.mxu0
        %v3874 = vadd.f32 %v3801, %v3873
        %3875 = vmatmul.bf16.gmra.mxu0 %v2880
        %v3876 = vpop.f32.mrf.mxu0
        %v3877 = vadd.f32 %v3804, %v3876
        %v3878 = vpop.f32.mrf.mxu0
        %v3879 = vadd.f32 %v3806, %v3878
        %3880 = vmatmul.bf16.gmra.mxu0 %v2881
        %v3881 = vpop.f32.mrf.mxu0
        %v3882 = vadd.f32 %v3809, %v3881
        %v3883 = vpop.f32.mrf.mxu0
        %v3884 = vadd.f32 %v3811, %v3883
        %3885 = vmatmul.bf16.gmra.mxu0 %v2882
        %v3886 = vpop.f32.mrf.mxu0
        %v3887 = vadd.f32 %v3814, %v3886
        %v3888 = vpop.f32.mrf.mxu0
        %3889 = vdwg.mxu0
        %3890 = vmatpush.bf16.msra.mxu0 %v3623
        %3891 = vmatpush.bf16.msra.mxu0 %v3622
        %3892 = vmatpush.bf16.msra.mxu0 %v3621
        %3893 = vmatpush.bf16.msra.mxu0 %v3620
        %3894 = vmatpush.bf16.msra.mxu0 %v3619
        %3895 = vmatpush.bf16.msra.mxu0 %v3618
        %3896 = vmatpush.bf16.msra.mxu0 %v3617
        %3897 = vmatpush.bf16.msra.mxu0 %v3616
        %3898 = vmatmul.bf16.gmra.mxu0 %v2946
        %v3899 = vpop.f32.mrf.mxu0
        %v3900 = vadd.f32 %v3827, %v3899
        %v3901 = vpop.f32.mrf.mxu0
        %v3902 = vadd.f32 %v3829, %v3901
        %3903 = vmatmul.bf16.gmra.mxu0 %v2947
        %v3904 = vpop.f32.mrf.mxu0
        %v3905 = vadd.f32 %v3832, %v3904
        %v3906 = vpop.f32.mrf.mxu0
        %v3907 = vadd.f32 %v3834, %v3906
        %3908 = vmatmul.bf16.gmra.mxu0 %v2948
        %v3909 = vpop.f32.mrf.mxu0
        %v3910 = vadd.f32 %v3837, %v3909
        %v3911 = vpop.f32.mrf.mxu0
        %v3912 = vadd.f32 %v3839, %v3911
        %3913 = vmatmul.bf16.gmra.mxu0 %v2949
        %v3914 = vpop.f32.mrf.mxu0
        %v3915 = vadd.f32 %v3842, %v3914
        %v3916 = vpop.f32.mrf.mxu0
        %v3917 = vadd.f32 %v3844, %v3916
        %3918 = vmatmul.bf16.gmra.mxu0 %v2950
        %v3919 = vpop.f32.mrf.mxu0
        %v3920 = vadd.f32 %v3847, %v3919
        %v3921 = vpop.f32.mrf.mxu0
        %v3922 = vadd.f32 %v3849, %v3921
        %3923 = vmatmul.bf16.gmra.mxu0 %v2951
        %v3924 = vpop.f32.mrf.mxu0
        %v3925 = vadd.f32 %v3852, %v3924
        %v3926 = vpop.f32.mrf.mxu0
        %v3927 = vadd.f32 %v3854, %v3926
        %3928 = vmatmul.bf16.gmra.mxu0 %v2952
        %v3929 = vpop.f32.mrf.mxu0
        %v3930 = vadd.f32 %v3857, %v3929
        %v3931 = vpop.f32.mrf.mxu0
        %v3932 = vadd.f32 %v3859, %v3931
        %3933 = vmatmul.bf16.gmra.mxu0 %v2953
        %v3934 = vpop.f32.mrf.mxu0
        %v3935 = vadd.f32 %v3862, %v3934
        %v3936 = vpop.f32.mrf.mxu0
        %v3937 = vadd.f32 %v3864, %v3936
        %3938 = vmatmul.bf16.gmra.mxu0 %v2954
        %v3939 = vpop.f32.mrf.mxu0
        %v3940 = vadd.f32 %v3867, %v3939
        %v3941 = vpop.f32.mrf.mxu0
        %v3942 = vadd.f32 %v3869, %v3941
        %3943 = vmatmul.bf16.gmra.mxu0 %v2955
        %v3944 = vpop.f32.mrf.mxu0
        %v3945 = vadd.f32 %v3872, %v3944
        %v3946 = vpop.f32.mrf.mxu0
        %v3947 = vadd.f32 %v3874, %v3946
        %3948 = vmatmul.bf16.gmra.mxu0 %v2956
        %v3949 = vpop.f32.mrf.mxu0
        %v3950 = vadd.f32 %v3877, %v3949
        %v3951 = vpop.f32.mrf.mxu0
        %v3952 = vadd.f32 %v3879, %v3951
        %3953 = vmatmul.bf16.gmra.mxu0 %v2957
        %v3954 = vpop.f32.mrf.mxu0
        %v3955 = vadd.f32 %v3882, %v3954
        %v3956 = vpop.f32.mrf.mxu0
        %v3957 = vadd.f32 %v3884, %v3956
        %3958 = vmatmul.bf16.gmra.mxu0 %v2958
        %v3959 = vpop.f32.mrf.mxu0
        %v3960 = vadd.f32 %v3887, %v3959
        %v3961 = vpop.f32.mrf.mxu0
        %3962 = vdwg.mxu0
        %3963 = vmatpush.bf16.msra.mxu0 %v3631
        %3964 = vmatpush.bf16.msra.mxu0 %v3630
        %3965 = vmatpush.bf16.msra.mxu0 %v3629
        %3966 = vmatpush.bf16.msra.mxu0 %v3628
        %3967 = vmatpush.bf16.msra.mxu0 %v3627
        %3968 = vmatpush.bf16.msra.mxu0 %v3626
        %3969 = vmatpush.bf16.msra.mxu0 %v3625
        %3970 = vmatpush.bf16.msra.mxu0 %v3624
        %3971 = vmatmul.bf16.gmra.mxu0 %v3022
        %v3972 = vpop.f32.mrf.mxu0
        %v3973 = vadd.f32 %v3900, %v3972
        %v3974 = vpop.f32.mrf.mxu0
        %v3975 = vadd.f32 %v3902, %v3974
        %3976 = vmatmul.bf16.gmra.mxu0 %v3023
        %v3977 = vpop.f32.mrf.mxu0
        %v3978 = vadd.f32 %v3905, %v3977
        %v3979 = vpop.f32.mrf.mxu0
        %v3980 = vadd.f32 %v3907, %v3979
        %3981 = vmatmul.bf16.gmra.mxu0 %v3024
        %v3982 = vpop.f32.mrf.mxu0
        %v3983 = vadd.f32 %v3910, %v3982
        %v3984 = vpop.f32.mrf.mxu0
        %v3985 = vadd.f32 %v3912, %v3984
        %3986 = vmatmul.bf16.gmra.mxu0 %v3025
        %v3987 = vpop.f32.mrf.mxu0
        %v3988 = vadd.f32 %v3915, %v3987
        %v3989 = vpop.f32.mrf.mxu0
        %v3990 = vadd.f32 %v3917, %v3989
        %3991 = vmatmul.bf16.gmra.mxu0 %v3026
        %v3992 = vpop.f32.mrf.mxu0
        %v3993 = vadd.f32 %v3920, %v3992
        %v3994 = vpop.f32.mrf.mxu0
        %v3995 = vadd.f32 %v3922, %v3994
        %3996 = vmatmul.bf16.gmra.mxu0 %v3027
        %v3997 = vpop.f32.mrf.mxu0
        %v3998 = vadd.f32 %v3925, %v3997
        %v3999 = vpop.f32.mrf.mxu0
        %v4000 = vadd.f32 %v3927, %v3999
        %4001 = vmatmul.bf16.gmra.mxu0 %v3028
        %v4002 = vpop.f32.mrf.mxu0
        %v4003 = vadd.f32 %v3930, %v4002
        %v4004 = vpop.f32.mrf.mxu0
        %v4005 = vadd.f32 %v3932, %v4004
        %4006 = vmatmul.bf16.gmra.mxu0 %v3029
        %v4007 = vpop.f32.mrf.mxu0
        %v4008 = vadd.f32 %v3935, %v4007
        %v4009 = vpop.f32.mrf.mxu0
        %v4010 = vadd.f32 %v3937, %v4009
        %4011 = vmatmul.bf16.gmra.mxu0 %v3030
        %v4012 = vpop.f32.mrf.mxu0
        %v4013 = vadd.f32 %v3940, %v4012
        %v4014 = vpop.f32.mrf.mxu0
        %v4015 = vadd.f32 %v3942, %v4014
        %4016 = vmatmul.bf16.gmra.mxu0 %v3031
        %v4017 = vpop.f32.mrf.mxu0
        %v4018 = vadd.f32 %v3945, %v4017
        %v4019 = vpop.f32.mrf.mxu0
        %v4020 = vadd.f32 %v3947, %v4019
        %4021 = vmatmul.bf16.gmra.mxu0 %v3032
        %v4022 = vpop.f32.mrf.mxu0
        %v4023 = vadd.f32 %v3950, %v4022
        %v4024 = vpop.f32.mrf.mxu0
        %v4025 = vadd.f32 %v3952, %v4024
        %4026 = vmatmul.bf16.gmra.mxu0 %v3033
        %v4027 = vpop.f32.mrf.mxu0
        %v4028 = vadd.f32 %v3955, %v4027
        %v4029 = vpop.f32.mrf.mxu0
        %v4030 = vadd.f32 %v3957, %v4029
        %4031 = vmatmul.bf16.gmra.mxu0 %v3034
        %v4032 = vpop.f32.mrf.mxu0
        %v4033 = vadd.f32 %v3960, %v4032
        %v4034 = vpop.f32.mrf.mxu0
        %4035 = vdwg.mxu0
        %4036 = vmatpush.bf16.msra.mxu0 %v3639
        %4037 = vmatpush.bf16.msra.mxu0 %v3638
        %4038 = vmatpush.bf16.msra.mxu0 %v3637
        %4039 = vmatpush.bf16.msra.mxu0 %v3636
        %4040 = vmatpush.bf16.msra.mxu0 %v3635
        %4041 = vmatpush.bf16.msra.mxu0 %v3634
        %4042 = vmatpush.bf16.msra.mxu0 %v3633
        %4043 = vmatpush.bf16.msra.mxu0 %v3632
        %4044 = vmatmul.bf16.gmra.mxu0 %v2795
        %v4045 = vpop.f32.mrf.mxu0
        %v4046 = vadd.f32 %v3973, %v4045
        %v4047 = vpop.f32.mrf.mxu0
        %v4048 = vadd.f32 %v3975, %v4047
        %4049 = vmatmul.bf16.gmra.mxu0 %v2796
        %v4050 = vpop.f32.mrf.mxu0
        %v4051 = vadd.f32 %v3978, %v4050
        %v4052 = vpop.f32.mrf.mxu0
        %v4053 = vadd.f32 %v3980, %v4052
        %4054 = vmatmul.bf16.gmra.mxu0 %v2797
        %v4055 = vpop.f32.mrf.mxu0
        %v4056 = vadd.f32 %v3983, %v4055
        %v4057 = vpop.f32.mrf.mxu0
        %v4058 = vadd.f32 %v3985, %v4057
        %4059 = vmatmul.bf16.gmra.mxu0 %v2798
        %v4060 = vpop.f32.mrf.mxu0
        %v4061 = vadd.f32 %v3988, %v4060
        %v4062 = vpop.f32.mrf.mxu0
        %v4063 = vadd.f32 %v3990, %v4062
        %4064 = vmatmul.bf16.gmra.mxu0 %v2799
        %v4065 = vpop.f32.mrf.mxu0
        %v4066 = vadd.f32 %v3993, %v4065
        %v4067 = vpop.f32.mrf.mxu0
        %v4068 = vadd.f32 %v3995, %v4067
        %4069 = vmatmul.bf16.gmra.mxu0 %v2800
        %v4070 = vpop.f32.mrf.mxu0
        %v4071 = vadd.f32 %v3998, %v4070
        %v4072 = vpop.f32.mrf.mxu0
        %v4073 = vadd.f32 %v4000, %v4072
        %4074 = vmatmul.bf16.gmra.mxu0 %v2801
        %v4075 = vpop.f32.mrf.mxu0
        %v4076 = vadd.f32 %v4003, %v4075
        %v4077 = vpop.f32.mrf.mxu0
        %v4078 = vadd.f32 %v4005, %v4077
        %4079 = vmatmul.bf16.gmra.mxu0 %v2802
        %v4080 = vpop.f32.mrf.mxu0
        %v4081 = vadd.f32 %v4008, %v4080
        %v4082 = vpop.f32.mrf.mxu0
        %v4083 = vadd.f32 %v4010, %v4082
        %4084 = vmatmul.bf16.gmra.mxu0 %v2803
        %v4085 = vpop.f32.mrf.mxu0
        %v4086 = vadd.f32 %v4013, %v4085
        %v4087 = vpop.f32.mrf.mxu0
        %v4088 = vadd.f32 %v4015, %v4087
        %4089 = vmatmul.bf16.gmra.mxu0 %v2804
        %v4090 = vpop.f32.mrf.mxu0
        %v4091 = vadd.f32 %v4018, %v4090
        %v4092 = vpop.f32.mrf.mxu0
        %v4093 = vadd.f32 %v4020, %v4092
        %4094 = vmatmul.bf16.gmra.mxu0 %v2805
        %v4095 = vpop.f32.mrf.mxu0
        %v4096 = vadd.f32 %v4023, %v4095
        %v4097 = vpop.f32.mrf.mxu0
        %v4098 = vadd.f32 %v4025, %v4097
        %4099 = vmatmul.bf16.gmra.mxu0 %v3054
        %v4100 = vpop.f32.mrf.mxu0
        %v4101 = vadd.f32 %v4028, %v4100
        %v4102 = vpop.f32.mrf.mxu0
        %v4103 = vadd.f32 %v4030, %v4102
        %4104 = vmatmul.bf16.gmra.mxu0 %v3055
        %v4105 = vpop.f32.mrf.mxu0
        %v4106 = vadd.f32 %v4033, %v4105
        %v4107 = vpop.f32.mrf.mxu0
        %4108 = vdwg.mxu0
        %4109 = vmatpush.bf16.msra.mxu0 %v3647
        %4110 = vmatpush.bf16.msra.mxu0 %v3646
        %4111 = vmatpush.bf16.msra.mxu0 %v3645
        %4112 = vmatpush.bf16.msra.mxu0 %v3644
        %4113 = vmatpush.bf16.msra.mxu0 %v3643
        %4114 = vmatpush.bf16.msra.mxu0 %v3642
        %4115 = vmatpush.bf16.msra.mxu0 %v3641
        %4116 = vmatpush.bf16.msra.mxu0 %v3640
        %4117 = vmatmul.bf16.gmra.mxu0 %v2871
        %v4118 = vpop.f32.mrf.mxu0
        %v4119 = vadd.f32 %v4046, %v4118
        %v4120 = vpop.f32.mrf.mxu0
        %v4121 = vadd.f32 %v4048, %v4120
        %4122 = vmatmul.bf16.gmra.mxu0 %v2872
        %v4123 = vpop.f32.mrf.mxu0
        %v4124 = vadd.f32 %v4051, %v4123
        %v4125 = vpop.f32.mrf.mxu0
        %v4126 = vadd.f32 %v4053, %v4125
        %4127 = vmatmul.bf16.gmra.mxu0 %v2873
        %v4128 = vpop.f32.mrf.mxu0
        %v4129 = vadd.f32 %v4056, %v4128
        %v4130 = vpop.f32.mrf.mxu0
        %v4131 = vadd.f32 %v4058, %v4130
        %4132 = vmatmul.bf16.gmra.mxu0 %v2874
        %v4133 = vpop.f32.mrf.mxu0
        %v4134 = vadd.f32 %v4061, %v4133
        %v4135 = vpop.f32.mrf.mxu0
        %v4136 = vadd.f32 %v4063, %v4135
        %4137 = vmatmul.bf16.gmra.mxu0 %v2875
        %v4138 = vpop.f32.mrf.mxu0
        %v4139 = vadd.f32 %v4066, %v4138
        %v4140 = vpop.f32.mrf.mxu0
        %v4141 = vadd.f32 %v4068, %v4140
        %4142 = vmatmul.bf16.gmra.mxu0 %v2876
        %v4143 = vpop.f32.mrf.mxu0
        %v4144 = vadd.f32 %v4071, %v4143
        %v4145 = vpop.f32.mrf.mxu0
        %v4146 = vadd.f32 %v4073, %v4145
        %4147 = vmatmul.bf16.gmra.mxu0 %v2877
        %v4148 = vpop.f32.mrf.mxu0
        %v4149 = vadd.f32 %v4076, %v4148
        %v4150 = vpop.f32.mrf.mxu0
        %v4151 = vadd.f32 %v4078, %v4150
        %4152 = vmatmul.bf16.gmra.mxu0 %v2878
        %v4153 = vpop.f32.mrf.mxu0
        %v4154 = vadd.f32 %v4081, %v4153
        %v4155 = vpop.f32.mrf.mxu0
        %v4156 = vadd.f32 %v4083, %v4155
        %4157 = vmatmul.bf16.gmra.mxu0 %v2879
        %v4158 = vpop.f32.mrf.mxu0
        %v4159 = vadd.f32 %v4086, %v4158
        %v4160 = vpop.f32.mrf.mxu0
        %v4161 = vadd.f32 %v4088, %v4160
        %4162 = vmatmul.bf16.gmra.mxu0 %v2880
        %v4163 = vpop.f32.mrf.mxu0
        %v4164 = vadd.f32 %v4091, %v4163
        %v4165 = vpop.f32.mrf.mxu0
        %v4166 = vadd.f32 %v4093, %v4165
        %4167 = vmatmul.bf16.gmra.mxu0 %v2881
        %v4168 = vpop.f32.mrf.mxu0
        %v4169 = vadd.f32 %v4096, %v4168
        %v4170 = vpop.f32.mrf.mxu0
        %v4171 = vadd.f32 %v4098, %v4170
        %4172 = vmatmul.bf16.gmra.mxu0 %v3064
        %v4173 = vpop.f32.mrf.mxu0
        %v4174 = vadd.f32 %v4101, %v4173
        %v4175 = vpop.f32.mrf.mxu0
        %v4176 = vadd.f32 %v4103, %v4175
        %4177 = vmatmul.bf16.gmra.mxu0 %v3065
        %v4178 = vpop.f32.mrf.mxu0
        %v4179 = vadd.f32 %v4106, %v4178
        %v4180 = vpop.f32.mrf.mxu0
        %4181 = vdwg.mxu0
        %4182 = vmatpush.bf16.msra.mxu0 %v3655
        %4183 = vmatpush.bf16.msra.mxu0 %v3654
        %4184 = vmatpush.bf16.msra.mxu0 %v3653
        %4185 = vmatpush.bf16.msra.mxu0 %v3652
        %4186 = vmatpush.bf16.msra.mxu0 %v3651
        %4187 = vmatpush.bf16.msra.mxu0 %v3650
        %4188 = vmatpush.bf16.msra.mxu0 %v3649
        %4189 = vmatpush.bf16.msra.mxu0 %v3648
        %4190 = vmatmul.bf16.gmra.mxu0 %v3118
        %v4191 = vpop.f32.mrf.mxu0
        %v4192 = vadd.f32 %v4119, %v4191
        %v4193 = vpop.f32.mrf.mxu0
        %v4194 = vadd.f32 %v4121, %v4193
        %4195 = vmatmul.bf16.gmra.mxu0 %v3119
        %v4196 = vpop.f32.mrf.mxu0
        %v4197 = vadd.f32 %v4124, %v4196
        %v4198 = vpop.f32.mrf.mxu0
        %v4199 = vadd.f32 %v4126, %v4198
        %4200 = vmatmul.bf16.gmra.mxu0 %v3120
        %v4201 = vpop.f32.mrf.mxu0
        %v4202 = vadd.f32 %v4129, %v4201
        %v4203 = vpop.f32.mrf.mxu0
        %v4204 = vadd.f32 %v4131, %v4203
        %4205 = vmatmul.bf16.gmra.mxu0 %v3121
        %v4206 = vpop.f32.mrf.mxu0
        %v4207 = vadd.f32 %v4134, %v4206
        %v4208 = vpop.f32.mrf.mxu0
        %v4209 = vadd.f32 %v4136, %v4208
        %4210 = vmatmul.bf16.gmra.mxu0 %v3122
        %v4211 = vpop.f32.mrf.mxu0
        %v4212 = vadd.f32 %v4139, %v4211
        %v4213 = vpop.f32.mrf.mxu0
        %v4214 = vadd.f32 %v4141, %v4213
        %4215 = vmatmul.bf16.gmra.mxu0 %v3123
        %v4216 = vpop.f32.mrf.mxu0
        %v4217 = vadd.f32 %v4144, %v4216
        %v4218 = vpop.f32.mrf.mxu0
        %v4219 = vadd.f32 %v4146, %v4218
        %4220 = vmatmul.bf16.gmra.mxu0 %v3124
        %v4221 = vpop.f32.mrf.mxu0
        %v4222 = vadd.f32 %v4149, %v4221
        %v4223 = vpop.f32.mrf.mxu0
        %v4224 = vadd.f32 %v4151, %v4223
        %4225 = vmatmul.bf16.gmra.mxu0 %v3125
        %v4226 = vpop.f32.mrf.mxu0
        %v4227 = vadd.f32 %v4154, %v4226
        %v4228 = vpop.f32.mrf.mxu0
        %v4229 = vadd.f32 %v4156, %v4228
        %4230 = vmatmul.bf16.gmra.mxu0 %v3126
        %v4231 = vpop.f32.mrf.mxu0
        %v4232 = vadd.f32 %v4159, %v4231
        %v4233 = vpop.f32.mrf.mxu0
        %v4234 = vadd.f32 %v4161, %v4233
        %4235 = vmatmul.bf16.gmra.mxu0 %v3127
        %v4236 = vpop.f32.mrf.mxu0
        %v4237 = vadd.f32 %v4164, %v4236
        %v4238 = vpop.f32.mrf.mxu0
        %v4239 = vadd.f32 %v4166, %v4238
        %4240 = vmatmul.bf16.gmra.mxu0 %v3128
        %v4241 = vpop.f32.mrf.mxu0
        %v4242 = vadd.f32 %v4169, %v4241
        %v4243 = vpop.f32.mrf.mxu0
        %v4244 = vadd.f32 %v4171, %v4243
        %4245 = vmatmul.bf16.gmra.mxu0 %v3129
        %v4246 = vpop.f32.mrf.mxu0
        %v4247 = vadd.f32 %v4174, %v4246
        %v4248 = vpop.f32.mrf.mxu0
        %v4249 = vadd.f32 %v4176, %v4248
        %4250 = vmatmul.bf16.gmra.mxu0 %v3130
        %v4251 = vpop.f32.mrf.mxu0
        %v4252 = vadd.f32 %v4179, %v4251
        %v4253 = vpop.f32.mrf.mxu0
        %4254 = vdwg.mxu0
        %4255 = vmatpush.bf16.msra.mxu0 %v3663
        %4256 = vmatpush.bf16.msra.mxu0 %v3662
        %4257 = vmatpush.bf16.msra.mxu0 %v3661
        %4258 = vmatpush.bf16.msra.mxu0 %v3660
        %4259 = vmatpush.bf16.msra.mxu0 %v3659
        %4260 = vmatpush.bf16.msra.mxu0 %v3658
        %4261 = vmatpush.bf16.msra.mxu0 %v3657
        %4262 = vmatpush.bf16.msra.mxu0 %v3656
        %4263 = vmatmul.bf16.gmra.mxu0 %v3023
        %v4264 = vpop.f32.mrf.mxu0
        %v4265 = vadd.f32 %v4192, %v4264
        %v4266 = vpop.f32.mrf.mxu0
        %v4267 = vadd.f32 %v4194, %v4266
        %4268 = vmatmul.bf16.gmra.mxu0 %v3024
        %v4269 = vpop.f32.mrf.mxu0
        %v4270 = vadd.f32 %v4197, %v4269
        %v4271 = vpop.f32.mrf.mxu0
        %v4272 = vadd.f32 %v4199, %v4271
        %4273 = vmatmul.bf16.gmra.mxu0 %v3025
        %v4274 = vpop.f32.mrf.mxu0
        %v4275 = vadd.f32 %v4202, %v4274
        %v4276 = vpop.f32.mrf.mxu0
        %v4277 = vadd.f32 %v4204, %v4276
        %4278 = vmatmul.bf16.gmra.mxu0 %v3026
        %v4279 = vpop.f32.mrf.mxu0
        %v4280 = vadd.f32 %v4207, %v4279
        %v4281 = vpop.f32.mrf.mxu0
        %v4282 = vadd.f32 %v4209, %v4281
        %4283 = vmatmul.bf16.gmra.mxu0 %v3027
        %v4284 = vpop.f32.mrf.mxu0
        %v4285 = vadd.f32 %v4212, %v4284
        %v4286 = vpop.f32.mrf.mxu0
        %v4287 = vadd.f32 %v4214, %v4286
        %4288 = vmatmul.bf16.gmra.mxu0 %v3028
        %v4289 = vpop.f32.mrf.mxu0
        %v4290 = vadd.f32 %v4217, %v4289
        %v4291 = vpop.f32.mrf.mxu0
        %v4292 = vadd.f32 %v4219, %v4291
        %4293 = vmatmul.bf16.gmra.mxu0 %v3029
        %v4294 = vpop.f32.mrf.mxu0
        %v4295 = vadd.f32 %v4222, %v4294
        %v4296 = vpop.f32.mrf.mxu0
        %v4297 = vadd.f32 %v4224, %v4296
        %4298 = vmatmul.bf16.gmra.mxu0 %v3030
        %v4299 = vpop.f32.mrf.mxu0
        %v4300 = vadd.f32 %v4227, %v4299
        %v4301 = vpop.f32.mrf.mxu0
        %v4302 = vadd.f32 %v4229, %v4301
        %4303 = vmatmul.bf16.gmra.mxu0 %v3031
        %v4304 = vpop.f32.mrf.mxu0
        %v4305 = vadd.f32 %v4232, %v4304
        %v4306 = vpop.f32.mrf.mxu0
        %v4307 = vadd.f32 %v4234, %v4306
        %4308 = vmatmul.bf16.gmra.mxu0 %v3032
        %v4309 = vpop.f32.mrf.mxu0
        %v4310 = vadd.f32 %v4237, %v4309
        %v4311 = vpop.f32.mrf.mxu0
        %v4312 = vadd.f32 %v4239, %v4311
        %4313 = vmatmul.bf16.gmra.mxu0 %v3033
        %v4314 = vpop.f32.mrf.mxu0
        %v4315 = vadd.f32 %v4242, %v4314
        %v4316 = vpop.f32.mrf.mxu0
        %v4317 = vadd.f32 %v4244, %v4316
        %4318 = vmatmul.bf16.gmra.mxu0 %v3150
        %v4319 = vpop.f32.mrf.mxu0
        %v4320 = vadd.f32 %v4247, %v4319
        %v4321 = vpop.f32.mrf.mxu0
        %v4322 = vadd.f32 %v4249, %v4321
        %4323 = vmatmul.bf16.gmra.mxu0 %v3151
        %v4324 = vpop.f32.mrf.mxu0
        %v4325 = vadd.f32 %v4252, %v4324
        %v4326 = vpop.f32.mrf.mxu0
        %4327 = vdwg.mxu0
        %4328 = vmatpush.bf16.msra.mxu0 %v3671
        %4329 = vmatpush.bf16.msra.mxu0 %v3670
        %4330 = vmatpush.bf16.msra.mxu0 %v3669
        %4331 = vmatpush.bf16.msra.mxu0 %v3668
        %4332 = vmatpush.bf16.msra.mxu0 %v3667
        %4333 = vmatpush.bf16.msra.mxu0 %v3666
        %4334 = vmatpush.bf16.msra.mxu0 %v3665
        %4335 = vmatpush.bf16.msra.mxu0 %v3664
        %4336 = vmatmul.bf16.gmra.mxu0 %v2796
        %v4337 = vpop.f32.mrf.mxu0
        %v4338 = vadd.f32 %v4265, %v4337
        %v4339 = vpop.f32.mrf.mxu0
        %v4340 = vadd.f32 %v4267, %v4339
        %4341 = vmatmul.bf16.gmra.mxu0 %v2797
        %v4342 = vpop.f32.mrf.mxu0
        %v4343 = vadd.f32 %v4270, %v4342
        %v4344 = vpop.f32.mrf.mxu0
        %v4345 = vadd.f32 %v4272, %v4344
        %4346 = vmatmul.bf16.gmra.mxu0 %v2798
        %v4347 = vpop.f32.mrf.mxu0
        %v4348 = vadd.f32 %v4275, %v4347
        %v4349 = vpop.f32.mrf.mxu0
        %v4350 = vadd.f32 %v4277, %v4349
        %4351 = vmatmul.bf16.gmra.mxu0 %v2799
        %v4352 = vpop.f32.mrf.mxu0
        %v4353 = vadd.f32 %v4280, %v4352
        %v4354 = vpop.f32.mrf.mxu0
        %v4355 = vadd.f32 %v4282, %v4354
        %4356 = vmatmul.bf16.gmra.mxu0 %v2800
        %v4357 = vpop.f32.mrf.mxu0
        %v4358 = vadd.f32 %v4285, %v4357
        %v4359 = vpop.f32.mrf.mxu0
        %v4360 = vadd.f32 %v4287, %v4359
        %4361 = vmatmul.bf16.gmra.mxu0 %v2801
        %v4362 = vpop.f32.mrf.mxu0
        %v4363 = vadd.f32 %v4290, %v4362
        %v4364 = vpop.f32.mrf.mxu0
        %v4365 = vadd.f32 %v4292, %v4364
        %4366 = vmatmul.bf16.gmra.mxu0 %v2802
        %v4367 = vpop.f32.mrf.mxu0
        %v4368 = vadd.f32 %v4295, %v4367
        %v4369 = vpop.f32.mrf.mxu0
        %v4370 = vadd.f32 %v4297, %v4369
        %4371 = vmatmul.bf16.gmra.mxu0 %v2803
        %v4372 = vpop.f32.mrf.mxu0
        %v4373 = vadd.f32 %v4300, %v4372
        %v4374 = vpop.f32.mrf.mxu0
        %v4375 = vadd.f32 %v4302, %v4374
        %4376 = vmatmul.bf16.gmra.mxu0 %v2804
        %v4377 = vpop.f32.mrf.mxu0
        %v4378 = vadd.f32 %v4305, %v4377
        %v4379 = vpop.f32.mrf.mxu0
        %v4380 = vadd.f32 %v4307, %v4379
        %4381 = vmatmul.bf16.gmra.mxu0 %v2805
        %v4382 = vpop.f32.mrf.mxu0
        %v4383 = vadd.f32 %v4310, %v4382
        %v4384 = vpop.f32.mrf.mxu0
        %v4385 = vadd.f32 %v4312, %v4384
        %4386 = vmatmul.bf16.gmra.mxu0 %v3054
        %v4387 = vpop.f32.mrf.mxu0
        %v4388 = vadd.f32 %v4315, %v4387
        %v4389 = vpop.f32.mrf.mxu0
        %v4390 = vadd.f32 %v4317, %v4389
        %4391 = vmatmul.bf16.gmra.mxu0 %v3160
        %v4392 = vpop.f32.mrf.mxu0
        %v4393 = vadd.f32 %v4320, %v4392
        %v4394 = vpop.f32.mrf.mxu0
        %v4395 = vadd.f32 %v4322, %v4394
        %4396 = vmatmul.bf16.gmra.mxu0 %v3161
        %v4397 = vpop.f32.mrf.mxu0
        %v4398 = vadd.f32 %v4325, %v4397
        %v4399 = vpop.f32.mrf.mxu0
        %4400 = vdwg.mxu0
        %v4401 = vmax.f32 %v4338, 0.0
        %v4402 = vmax.f32 %v4340, 0.0
        %v4403 = vmax.f32 %v4343, 0.0
        %v4404 = vmax.f32 %v4345, 0.0
        %v4405 = vmax.f32 %v4348, 0.0
        %v4406 = vmax.f32 %v4350, 0.0
        %v4407 = vmax.f32 %v4353, 0.0
        %v4408 = vmax.f32 %v4355, 0.0
        %v4409 = vmax.f32 %v4358, 0.0
        %v4410 = vmax.f32 %v4360, 0.0
        %v4411 = vmax.f32 %v4363, 0.0
        %v4412 = vmax.f32 %v4365, 0.0
        %v4413 = vmax.f32 %v4368, 0.0
        %v4414 = vmax.f32 %v4370, 0.0
        %v4415 = vmax.f32 %v4373, 0.0
        %v4416 = vmax.f32 %v4375, 0.0
        %v4417 = vmax.f32 %v4378, 0.0
        %v4418 = vmax.f32 %v4380, 0.0
        %v4419 = vmax.f32 %v4383, 0.0
        %v4420 = vmax.f32 %v4385, 0.0
        %v4421 = vmax.f32 %v4388, 0.0
        %v4422 = vmax.f32 %v4390, 0.0
        %v4423 = vmax.f32 %v4393, 0.0
        %v4424 = vmax.f32 %v4395, 0.0
        %v4425 = vmax.f32 %v4398, 0.0
        %v4451 = vrot.slane %v4401, 1
        %v4452 = vrot.slane %v4402, 1
        %v4453 = vsel %vm1272, %v4451, %v4452
        %v4454 = vrot.slane %v4403, 1
        %v4455 = vsel %vm1272, %v4452, %v4454
        %v4456 = vrot.slane %v4404, 1
        %v4457 = vsel %vm1272, %v4454, %v4456
        %v4458 = vrot.slane %v4405, 1
        %v4459 = vsel %vm1272, %v4456, %v4458
        %v4460 = vrot.slane %v4406, 1
        %v4461 = vsel %vm1272, %v4458, %v4460
        %v4462 = vrot.slane %v4407, 1
        %v4463 = vsel %vm1272, %v4460, %v4462
        %v4464 = vrot.slane %v4408, 1
        %v4465 = vsel %vm1272, %v4462, %v4464
        %v4466 = vrot.slane %v4409, 1
        %v4467 = vsel %vm1272, %v4464, %v4466
        %v4468 = vrot.slane %v4410, 1
        %v4469 = vsel %vm1272, %v4466, %v4468
        %v4470 = vrot.slane %v4411, 1
        %v4471 = vsel %vm1272, %v4468, %v4470
        %v4472 = vrot.slane %v4412, 1
        %v4473 = vsel %vm1272, %v4470, %v4472
        %v4474 = vrot.slane %v4413, 1
        %v4475 = vsel %vm1272, %v4472, %v4474
        %v4476 = vrot.slane %v4414, 1
        %v4477 = vsel %vm1272, %v4474, %v4476
        %v4478 = vrot.slane %v4415, 1
        %v4479 = vsel %vm1272, %v4476, %v4478
        %v4480 = vrot.slane %v4416, 1
        %v4481 = vsel %vm1272, %v4478, %v4480
        %v4482 = vrot.slane %v4417, 1
        %v4483 = vsel %vm1272, %v4480, %v4482
        %v4484 = vrot.slane %v4418, 1
        %v4485 = vsel %vm1272, %v4482, %v4484
        %v4486 = vrot.slane %v4419, 1
        %v4487 = vsel %vm1272, %v4484, %v4486
        %v4488 = vrot.slane %v4420, 1
        %v4489 = vsel %vm1272, %v4486, %v4488
        %v4490 = vrot.slane %v4421, 1
        %v4491 = vsel %vm1272, %v4488, %v4490
        %v4492 = vrot.slane %v4422, 1
        %v4493 = vsel %vm1272, %v4490, %v4492
        %v4494 = vrot.slane %v4423, 1
        %v4495 = vsel %vm1272, %v4492, %v4494
        %v4496 = vrot.slane %v4424, 1
        %v4497 = vsel %vm1272, %v4494, %v4496
        %v4498 = vrot.slane %v4425, 1
        %v4499 = vsel %vm1272, %v4496, %v4498
        %v4524 = vmax.f32 %v4401, %v4453
        %v4525 = vmax.f32 %v4402, %v4455
        %v4526 = vmax.f32 %v4403, %v4457
        %v4527 = vmax.f32 %v4404, %v4459
        %v4528 = vmax.f32 %v4405, %v4461
        %v4529 = vmax.f32 %v4406, %v4463
        %v4530 = vmax.f32 %v4407, %v4465
        %v4531 = vmax.f32 %v4408, %v4467
        %v4532 = vmax.f32 %v4409, %v4469
        %v4533 = vmax.f32 %v4410, %v4471
        %v4534 = vmax.f32 %v4411, %v4473
        %v4535 = vmax.f32 %v4412, %v4475
        %v4536 = vmax.f32 %v4413, %v4477
        %v4537 = vmax.f32 %v4414, %v4479
        %v4538 = vmax.f32 %v4415, %v4481
        %v4539 = vmax.f32 %v4416, %v4483
        %v4540 = vmax.f32 %v4417, %v4485
        %v4541 = vmax.f32 %v4418, %v4487
        %v4542 = vmax.f32 %v4419, %v4489
        %v4543 = vmax.f32 %v4420, %v4491
        %v4544 = vmax.f32 %v4421, %v4493
        %v4545 = vmax.f32 %v4422, %v4495
        %v4546 = vmax.f32 %v4423, %v4497
        %v4547 = vmax.f32 %v4424, %v4499
        %vm4571 = vcmask 1040384
        %v4572 = vrot.slane %v4525, 7
        %v4573 = vrot.slane %v4526, 7
        %v4574 = vsel %vm4571, %v4572, %v4573
        %v4575 = vrot.slane %v4527, 7
        %v4576 = vsel %vm4571, %v4573, %v4575
        %v4577 = vrot.slane %v4528, 7
        %v4578 = vsel %vm4571, %v4575, %v4577
        %v4579 = vrot.slane %v4529, 7
        %v4580 = vsel %vm4571, %v4577, %v4579
        %v4581 = vrot.slane %v4530, 7
        %v4582 = vsel %vm4571, %v4579, %v4581
        %v4583 = vrot.slane %v4531, 7
        %v4584 = vsel %vm4571, %v4581, %v4583
        %v4585 = vrot.slane %v4532, 7
        %v4586 = vsel %vm4571, %v4583, %v4585
        %v4587 = vrot.slane %v4533, 7
        %v4588 = vsel %vm4571, %v4585, %v4587
        %v4589 = vrot.slane %v4534, 7
        %v4590 = vsel %vm4571, %v4587, %v4589
        %v4591 = vrot.slane %v4535, 7
        %v4592 = vsel %vm4571, %v4589, %v4591
        %v4593 = vrot.slane %v4536, 7
        %v4594 = vsel %vm4571, %v4591, %v4593
        %v4595 = vrot.slane %v4537, 7
        %v4596 = vsel %vm4571, %v4593, %v4595
        %v4597 = vrot.slane %v4538, 7
        %v4598 = vsel %vm4571, %v4595, %v4597
        %v4599 = vrot.slane %v4539, 7
        %v4600 = vsel %vm4571, %v4597, %v4599
        %v4601 = vrot.slane %v4540, 7
        %v4602 = vsel %vm4571, %v4599, %v4601
        %v4603 = vrot.slane %v4541, 7
        %v4604 = vsel %vm4571, %v4601, %v4603
        %v4605 = vrot.slane %v4542, 7
        %v4606 = vsel %vm4571, %v4603, %v4605
        %v4607 = vrot.slane %v4543, 7
        %v4608 = vsel %vm4571, %v4605, %v4607
        %v4609 = vrot.slane %v4544, 7
        %v4610 = vsel %vm4571, %v4607, %v4609
        %v4611 = vrot.slane %v4545, 7
        %v4612 = vsel %vm4571, %v4609, %v4611
        %v4613 = vrot.slane %v4546, 7
        %v4614 = vsel %vm4571, %v4611, %v4613
        %v4615 = vrot.slane %v4547, 7
        %v4616 = vsel %vm4571, %v4613, %v4615
        %v4639 = vmax.f32 %v4524, %v4574
        %v4640 = vmax.f32 %v4525, %v4576
        %v4641 = vmax.f32 %v4526, %v4578
        %v4642 = vmax.f32 %v4527, %v4580
        %v4643 = vmax.f32 %v4528, %v4582
        %v4644 = vmax.f32 %v4529, %v4584
        %v4645 = vmax.f32 %v4530, %v4586
        %v4646 = vmax.f32 %v4531, %v4588
        %v4647 = vmax.f32 %v4532, %v4590
        %v4648 = vmax.f32 %v4533, %v4592
        %v4649 = vmax.f32 %v4534, %v4594
        %v4650 = vmax.f32 %v4535, %v4596
        %v4651 = vmax.f32 %v4536, %v4598
        %v4652 = vmax.f32 %v4537, %v4600
        %v4653 = vmax.f32 %v4538, %v4602
        %v4654 = vmax.f32 %v4539, %v4604
        %v4655 = vmax.f32 %v4540, %v4606
        %v4656 = vmax.f32 %v4541, %v4608
        %v4657 = vmax.f32 %v4542, %v4610
        %v4658 = vmax.f32 %v4543, %v4612
        %v4659 = vmax.f32 %v4544, %v4614
        %v4660 = vmax.f32 %v4545, %v4616
        %4661 = vst [vmem:[#allocation4] sm:$0xff] %v4639
        %4662 = vst [vmem:[#allocation4 + $0x8] sm:$0xff] %v4640
        %4663 = vst [vmem:[#allocation4 + $0x10] sm:$0xff] %v4641
        %4664 = vst [vmem:[#allocation4 + $0x18] sm:$0xff] %v4642
        %4665 = vst [vmem:[#allocation4 + $0x20] sm:$0xff] %v4643
        %4666 = vst [vmem:[#allocation4 + $0x28] sm:$0xff] %v4644
        %4667 = vst [vmem:[#allocation4 + $0x30] sm:$0xff] %v4645
        %4668 = vst [vmem:[#allocation4 + $0x38] sm:$0xff] %v4646
        %4669 = vst [vmem:[#allocation4 + $0x40] sm:$0xff] %v4647
        %4670 = vst [vmem:[#allocation4 + $0x48] sm:$0xff] %v4648
        %4671 = vst [vmem:[#allocation4 + $0x50] sm:$0xff] %v4649
        %4672 = vst [vmem:[#allocation4 + $0x58] sm:$0xff] %v4650
        %4673 = vst [vmem:[#allocation4 + $0x60] sm:$0xff] %v4651
        %4674 = vst [vmem:[#allocation4 + $0x68] sm:$0xff] %v4652
        %4675 = vst [vmem:[#allocation4 + $0x70] sm:$0xff] %v4653
        %4676 = vst [vmem:[#allocation4 + $0x78] sm:$0xff] %v4654
        %4677 = vst [vmem:[#allocation4 + $0x80] sm:$0xff] %v4655
        %4678 = vst [vmem:[#allocation4 + $0x88] sm:$0xff] %v4656
        %4679 = vst [vmem:[#allocation4 + $0x90] sm:$0xff] %v4657
        %4680 = vst [vmem:[#allocation4 + $0x98] sm:$0xff] %v4658
        %4681 = vst [vmem:[#allocation4 + $0xa0] sm:$0xff] %v4659
        %4682 = vst [vmem:[#allocation4 + $0xa8] sm:$0xff] %v4660
        %v4683 = vld [vmem:[#allocation4] ss:$2 sm:$0x3f]
        %4684 = vst [vmem:[#allocation5] sm:$0x3f] %v4683
        %s4685 = scalar_lea.vmem [#allocation4], 30
        %v4686 = vld [vmem:[%s4685] ss:$2 sm:$0x3f]
        %4687 = vst [vmem:[#allocation5 + $0x6] sm:$0x3f] %v4686
        %s4688 = scalar_lea.vmem [#allocation4], 60
        %v4689 = vld [vmem:[%s4688] ss:$2 sm:$0x3f]
        %4690 = vst [vmem:[#allocation5 + $0xc] sm:$0x3f] %v4689
        %s4691 = scalar_lea.vmem [#allocation4], 90
        %v4692 = vld [vmem:[%s4691] ss:$2 sm:$0x3f]
        %4693 = vst [vmem:[#allocation5 + $0x12] sm:$0x3f] %v4692
        %s4694 = scalar_lea.vmem [#allocation4], 120
        %v4695 = vld [vmem:[%s4694] ss:$2 sm:$0x3f]
        %4696 = vst [vmem:[#allocation5 + $0x18] sm:$0x3f] %v4695
        %s4697 = scalar_lea.vmem [#allocation4], 150
        %v4698 = vld [vmem:[%s4697] ss:$2 sm:$0x3f]
        %4699 = vst [vmem:[#allocation5 + $0x1e] sm:$0x3f] %v4698
        %v4700 = vld [vmem:[#allocation5] sm:$0xff]
        %v4701 = vld [vmem:[#allocation5 + $0x8] sm:$0xff]
        %v4702 = vld [vmem:[#allocation5 + $0x10] sm:$0x3f]
        %v4703 = vpack.c.bf16 %v4700, %v4700
        %v4704 = vpack.c.bf16 %v4701, %v4701
        %v4705 = vpack.c.bf16 %v4702, %v4702
        %v4706 = vld [vmem:[#allocation5 + $0x1] sm:$0xff]
        %v4707 = vld [vmem:[#allocation5 + $0x9] sm:$0xff]
        %v4708 = vld [vmem:[#allocation5 + $0x11] sm:$0x3f]
        %v4709 = vpack.c.bf16 %v4706, %v4706
        %v4710 = vpack.c.bf16 %v4707, %v4707
        %v4711 = vpack.c.bf16 %v4708, %v4708
        %v4712 = vld [vmem:[#allocation5 + $0x2] sm:$0xff]
        %v4713 = vld [vmem:[#allocation5 + $0xa] sm:$0xff]
        %v4714 = vld [vmem:[#allocation5 + $0x12] sm:$0x3f]
        %v4715 = vpack.c.bf16 %v4712, %v4712
        %v4716 = vpack.c.bf16 %v4713, %v4713
        %v4717 = vpack.c.bf16 %v4714, %v4714
        %v4718 = vld [vmem:[#allocation5 + $0x6] sm:$0xff]
        %v4719 = vld [vmem:[#allocation5 + $0xe] sm:$0xff]
        %v4720 = vld [vmem:[#allocation5 + $0x16] sm:$0x3f]
        %v4721 = vpack.c.bf16 %v4718, %v4718
        %v4722 = vpack.c.bf16 %v4719, %v4719
        %v4723 = vpack.c.bf16 %v4720, %v4720
        %v4724 = vld [vmem:[#allocation5 + $0x7] sm:$0xff]
        %v4725 = vld [vmem:[#allocation5 + $0xf] sm:$0xff]
        %v4726 = vld [vmem:[#allocation5 + $0x17] sm:$0x3f]
        %v4727 = vpack.c.bf16 %v4724, %v4724
        %v4728 = vpack.c.bf16 %v4725, %v4725
        %v4729 = vpack.c.bf16 %v4726, %v4726
        %v4730 = vld [vmem:[#allocation5 + $0x10] sm:$0xff]
        %v4731 = vld [vmem:[#allocation5 + $0x18] sm:$0x3f]
        %v4732 = vpack.c.bf16 %v4730, %v4730
        %v4733 = vpack.c.bf16 %v4731, %v4731
        %v4734 = vld [vmem:[#allocation5 + $0xc] sm:$0xff]
        %v4735 = vld [vmem:[#allocation5 + $0x14] sm:$0xff]
        %v4736 = vld [vmem:[#allocation5 + $0x1c] sm:$0x3f]
        %v4737 = vpack.c.bf16 %v4734, %v4734
        %v4738 = vpack.c.bf16 %v4735, %v4735
        %v4739 = vpack.c.bf16 %v4736, %v4736
        %v4740 = vld [vmem:[#allocation5 + $0xd] sm:$0xff]
        %v4741 = vld [vmem:[#allocation5 + $0x15] sm:$0xff]
        %v4742 = vld [vmem:[#allocation5 + $0x1d] sm:$0x3f]
        %v4743 = vpack.c.bf16 %v4740, %v4740
        %v4744 = vpack.c.bf16 %v4741, %v4741
        %v4745 = vpack.c.bf16 %v4742, %v4742
        %v4746 = vld [vmem:[#allocation5 + $0x16] sm:$0xff]
        %v4747 = vld [vmem:[#allocation5 + $0x1e] sm:$0x3f]
        %v4748 = vpack.c.bf16 %v4746, %v4746
        %v4749 = vpack.c.bf16 %v4747, %v4747
        %v4753 = vunpack.c.l.b16 %v4703
        %v4754 = vunpack.c.l.b16 %v4704
        %v4755 = vunpack.c.l.b16 %v4705
        %v4756 = vpack.c.b16 %v4754, %v4753
        %v4757 = vpack.c.b16 %v4755, %v4755
        %v4763 = vunpack.c.l.b16 %v4709
        %v4764 = vunpack.c.l.b16 %v4710
        %v4765 = vunpack.c.l.b16 %v4711
        %v4766 = vpack.c.b16 %v4764, %v4763
        %v4767 = vpack.c.b16 %v4765, %v4765
        %v4773 = vunpack.c.l.b16 %v4715
        %v4774 = vunpack.c.l.b16 %v4716
        %v4775 = vunpack.c.l.b16 %v4717
        %v4776 = vpack.c.b16 %v4774, %v4773
        %v4777 = vpack.c.b16 %v4775, %v4775
        %v4783 = vunpack.c.l.b16 %v4721
        %v4784 = vunpack.c.l.b16 %v4722
        %v4785 = vunpack.c.l.b16 %v4723
        %v4786 = vpack.c.b16 %v4784, %v4783
        %v4787 = vpack.c.b16 %v4785, %v4785
        %v4793 = vunpack.c.l.b16 %v4727
        %v4794 = vunpack.c.l.b16 %v4728
        %v4795 = vunpack.c.l.b16 %v4729
        %v4796 = vpack.c.b16 %v4794, %v4793
        %v4797 = vpack.c.b16 %v4795, %v4795
        %v4802 = vunpack.c.l.b16 %v4732
        %v4803 = vunpack.c.l.b16 %v4733
        %v4804 = vpack.c.b16 %v4802, %v4754
        %v4805 = vpack.c.b16 %v4803, %v4803
        %v4811 = vunpack.c.l.b16 %v4737
        %v4812 = vunpack.c.l.b16 %v4738
        %v4813 = vunpack.c.l.b16 %v4739
        %v4814 = vpack.c.b16 %v4812, %v4811
        %v4815 = vpack.c.b16 %v4813, %v4813
        %v4821 = vunpack.c.l.b16 %v4743
        %v4822 = vunpack.c.l.b16 %v4744
        %v4823 = vunpack.c.l.b16 %v4745
        %v4824 = vpack.c.b16 %v4822, %v4821
        %v4825 = vpack.c.b16 %v4823, %v4823
        %v4830 = vunpack.c.l.b16 %v4748
        %v4831 = vunpack.c.l.b16 %v4749
        %v4832 = vpack.c.b16 %v4830, %v4784
        %v4833 = vpack.c.b16 %v4831, %v4831
        %v4836 = vld [vmem:[%s5] sm:$0xf]
        %v4837 = vld [vmem:[%s5 + $0x4] sm:$0xf]
        %v4838 = vld [vmem:[%s5 + $0x8] sm:$0xf]
        %v4839 = vld [vmem:[%s5 + $0xc] sm:$0xf]
        %v4840 = vld [vmem:[%s5 + $0x10] sm:$0xf]
        %v4841 = vld [vmem:[%s5 + $0x14] sm:$0xf]
        %v4842 = vld [vmem:[%s5 + $0x18] sm:$0xf]
        %v4843 = vld [vmem:[%s5 + $0x1c] sm:$0xf]
        %v4844 = vld [vmem:[%s5 + $0x20] sm:$0xf]
        %v4845 = vld [vmem:[%s5 + $0x24] sm:$0xf]
        %v4846 = vld [vmem:[%s5 + $0x28] sm:$0xf]
        %v4847 = vld [vmem:[%s5 + $0x2c] sm:$0xf]
        %v4848 = vld [vmem:[%s5 + $0x30] sm:$0xf]
        %v4849 = vld [vmem:[%s5 + $0x34] sm:$0xf]
        %v4850 = vld [vmem:[%s5 + $0x38] sm:$0xf]
        %v4851 = vld [vmem:[%s5 + $0x3c] sm:$0xf]
        %v4852 = vld [vmem:[%s5 + $0x40] sm:$0xf]
        %v4853 = vld [vmem:[%s5 + $0x44] sm:$0xf]
        %v4854 = vld [vmem:[%s5 + $0x48] sm:$0xf]
        %v4855 = vld [vmem:[%s5 + $0x4c] sm:$0xf]
        %v4856 = vld [vmem:[%s5 + $0x50] sm:$0xf]
        %v4857 = vld [vmem:[%s5 + $0x54] sm:$0xf]
        %v4858 = vld [vmem:[%s5 + $0x58] sm:$0xf]
        %v4859 = vld [vmem:[%s5 + $0x5c] sm:$0xf]
        %v4860 = vld [vmem:[%s5 + $0x60] sm:$0xf]
        %v4861 = vld [vmem:[%s5 + $0x64] sm:$0xf]
        %v4862 = vld [vmem:[%s5 + $0x68] sm:$0xf]
        %v4863 = vld [vmem:[%s5 + $0x6c] sm:$0xf]
        %v4864 = vld [vmem:[%s5 + $0x70] sm:$0xf]
        %v4865 = vld [vmem:[%s5 + $0x74] sm:$0xf]
        %v4866 = vld [vmem:[%s5 + $0x78] sm:$0xf]
        %v4867 = vld [vmem:[%s5 + $0x7c] sm:$0xf]
        %v4868 = vld [vmem:[%s5 + $0x80] sm:$0xf]
        %v4869 = vld [vmem:[%s5 + $0x84] sm:$0xf]
        %v4870 = vld [vmem:[%s5 + $0x88] sm:$0xf]
        %v4871 = vld [vmem:[%s5 + $0x8c] sm:$0xf]
        %v4872 = vld [vmem:[%s5 + $0x90] sm:$0xf]
        %v4873 = vld [vmem:[%s5 + $0x94] sm:$0xf]
        %v4874 = vld [vmem:[%s5 + $0x98] sm:$0xf]
        %v4875 = vld [vmem:[%s5 + $0x9c] sm:$0xf]
        %v4876 = vld [vmem:[%s5 + $0xa0] sm:$0xf]
        %v4877 = vld [vmem:[%s5 + $0xa4] sm:$0xf]
        %v4878 = vld [vmem:[%s5 + $0xa8] sm:$0xf]
        %v4879 = vld [vmem:[%s5 + $0xac] sm:$0xf]
        %v4880 = vld [vmem:[%s5 + $0xb0] sm:$0xf]
        %v4881 = vld [vmem:[%s5 + $0xb4] sm:$0xf]
        %v4882 = vld [vmem:[%s5 + $0xb8] sm:$0xf]
        %v4883 = vld [vmem:[%s5 + $0xbc] sm:$0xf]
        %v4884 = vld [vmem:[%s5 + $0xc0] sm:$0xf]
        %v4885 = vld [vmem:[%s5 + $0xc4] sm:$0xf]
        %v4886 = vld [vmem:[%s5 + $0xc8] sm:$0xf]
        %v4887 = vld [vmem:[%s5 + $0xcc] sm:$0xf]
        %v4888 = vld [vmem:[%s5 + $0xd0] sm:$0xf]
        %v4889 = vld [vmem:[%s5 + $0xd4] sm:$0xf]
        %v4890 = vld [vmem:[%s5 + $0xd8] sm:$0xf]
        %v4891 = vld [vmem:[%s5 + $0xdc] sm:$0xf]
        %v4892 = vld [vmem:[%s5 + $0xe0] sm:$0xf]
        %v4893 = vld [vmem:[%s5 + $0xe4] sm:$0xf]
        %v4894 = vld [vmem:[%s5 + $0xe8] sm:$0xf]
        %v4895 = vld [vmem:[%s5 + $0xec] sm:$0xf]
        %v4896 = vld [vmem:[%s5 + $0xf0] sm:$0xf]
        %v4897 = vld [vmem:[%s5 + $0xf4] sm:$0xf]
        %v4898 = vld [vmem:[%s5 + $0xf8] sm:$0xf]
        %v4899 = vld [vmem:[%s5 + $0xfc] sm:$0xf]
        %v4900 = vld [vmem:[%s5 + $0x100] sm:$0xf]
        %v4901 = vld [vmem:[%s5 + $0x104] sm:$0xf]
        %v4902 = vld [vmem:[%s5 + $0x108] sm:$0xf]
        %v4903 = vld [vmem:[%s5 + $0x10c] sm:$0xf]
        %v4904 = vld [vmem:[%s5 + $0x110] sm:$0xf]
        %v4905 = vld [vmem:[%s5 + $0x114] sm:$0xf]
        %v4906 = vld [vmem:[%s5 + $0x118] sm:$0xf]
        %v4907 = vld [vmem:[%s5 + $0x11c] sm:$0xf]
        %v4908 = vld [vmem:[%s5 + $0x120] sm:$0xf]
        %v4909 = vld [vmem:[%s5 + $0x124] sm:$0xf]
        %v4910 = vld [vmem:[%s5 + $0x128] sm:$0xf]
        %v4911 = vld [vmem:[%s5 + $0x12c] sm:$0xf]
        %v4912 = vld [vmem:[%s5 + $0x130] sm:$0xf]
        %v4913 = vld [vmem:[%s5 + $0x134] sm:$0xf]
        %v4914 = vld [vmem:[%s5 + $0x138] sm:$0xf]
        %v4915 = vld [vmem:[%s5 + $0x13c] sm:$0xf]
        %v4916 = vld [vmem:[%s5 + $0x140] sm:$0xf]
        %v4917 = vld [vmem:[%s5 + $0x144] sm:$0xf]
        %v4918 = vld [vmem:[%s5 + $0x148] sm:$0xf]
        %v4919 = vld [vmem:[%s5 + $0x14c] sm:$0xf]
        %v4920 = vld [vmem:[%s5 + $0x150] sm:$0xf]
        %v4921 = vld [vmem:[%s5 + $0x154] sm:$0xf]
        %v4922 = vld [vmem:[%s5 + $0x158] sm:$0xf]
        %v4923 = vld [vmem:[%s5 + $0x15c] sm:$0xf]
        %v4924 = vld [vmem:[%s5 + $0x160] sm:$0xf]
        %v4925 = vld [vmem:[%s5 + $0x164] sm:$0xf]
        %v4926 = vld [vmem:[%s5 + $0x168] sm:$0xf]
        %v4927 = vld [vmem:[%s5 + $0x16c] sm:$0xf]
        %v4928 = vld [vmem:[%s5 + $0x170] sm:$0xf]
        %v4929 = vld [vmem:[%s5 + $0x174] sm:$0xf]
        %v4930 = vld [vmem:[%s5 + $0x178] sm:$0xf]
        %v4931 = vld [vmem:[%s5 + $0x17c] sm:$0xf]
        %v4932 = vld [vmem:[%s5 + $0x180] sm:$0xf]
        %v4933 = vld [vmem:[%s5 + $0x184] sm:$0xf]
        %v4934 = vld [vmem:[%s5 + $0x188] sm:$0xf]
        %v4935 = vld [vmem:[%s5 + $0x18c] sm:$0xf]
        %v4936 = vld [vmem:[%s5 + $0x190] sm:$0xf]
        %v4937 = vld [vmem:[%s5 + $0x194] sm:$0xf]
        %v4938 = vld [vmem:[%s5 + $0x198] sm:$0xf]
        %v4939 = vld [vmem:[%s5 + $0x19c] sm:$0xf]
        %v4940 = vld [vmem:[%s5 + $0x1a0] sm:$0xf]
        %v4941 = vld [vmem:[%s5 + $0x1a4] sm:$0xf]
        %v4942 = vld [vmem:[%s5 + $0x1a8] sm:$0xf]
        %v4943 = vld [vmem:[%s5 + $0x1ac] sm:$0xf]
        %v4944 = vld [vmem:[%s5 + $0x1b0] sm:$0xf]
        %v4945 = vld [vmem:[%s5 + $0x1b4] sm:$0xf]
        %v4946 = vld [vmem:[%s5 + $0x1b8] sm:$0xf]
        %v4947 = vld [vmem:[%s5 + $0x1bc] sm:$0xf]
        %v4948 = vld [vmem:[%s5 + $0x1c0] sm:$0xf]
        %v4949 = vld [vmem:[%s5 + $0x1c4] sm:$0xf]
        %v4950 = vld [vmem:[%s5 + $0x1c8] sm:$0xf]
        %v4951 = vld [vmem:[%s5 + $0x1cc] sm:$0xf]
        %v4952 = vld [vmem:[%s5 + $0x1d0] sm:$0xf]
        %v4953 = vld [vmem:[%s5 + $0x1d4] sm:$0xf]
        %v4954 = vld [vmem:[%s5 + $0x1d8] sm:$0xf]
        %v4955 = vld [vmem:[%s5 + $0x1dc] sm:$0xf]
        %v4956 = vld [vmem:[%s5 + $0x1e0] sm:$0xf]
        %v4957 = vld [vmem:[%s5 + $0x1e4] sm:$0xf]
        %v4958 = vld [vmem:[%s5 + $0x1e8] sm:$0xf]
        %v4959 = vld [vmem:[%s5 + $0x1ec] sm:$0xf]
        %v4960 = vld [vmem:[%s5 + $0x1f0] sm:$0xf]
        %v4961 = vld [vmem:[%s5 + $0x1f4] sm:$0xf]
        %v4962 = vld [vmem:[%s5 + $0x1f8] sm:$0xf]
        %v4963 = vld [vmem:[%s5 + $0x1fc] sm:$0xf]
        %v4964 = vld [vmem:[%s5 + $0x200] sm:$0xf]
        %v4965 = vld [vmem:[%s5 + $0x204] sm:$0xf]
        %v4966 = vld [vmem:[%s5 + $0x208] sm:$0xf]
        %v4967 = vld [vmem:[%s5 + $0x20c] sm:$0xf]
        %v4968 = vld [vmem:[%s5 + $0x210] sm:$0xf]
        %v4969 = vld [vmem:[%s5 + $0x214] sm:$0xf]
        %v4970 = vld [vmem:[%s5 + $0x218] sm:$0xf]
        %v4971 = vld [vmem:[%s5 + $0x21c] sm:$0xf]
        %v4972 = vld [vmem:[%s5 + $0x220] sm:$0xf]
        %v4973 = vld [vmem:[%s5 + $0x224] sm:$0xf]
        %v4974 = vld [vmem:[%s5 + $0x228] sm:$0xf]
        %v4975 = vld [vmem:[%s5 + $0x22c] sm:$0xf]
        %v4976 = vld [vmem:[%s5 + $0x230] sm:$0xf]
        %v4977 = vld [vmem:[%s5 + $0x234] sm:$0xf]
        %v4978 = vld [vmem:[%s5 + $0x238] sm:$0xf]
        %v4979 = vld [vmem:[%s5 + $0x23c] sm:$0xf]
        %v4980 = vld [vmem:[%s6] sm:$0x1]
        %v4982 = vperm.slane %v4980, 0
        %v5128 = vunpack.c.l.b16 %v4836
        %v5129 = vunpack.c.l.b16 %v4837
        %v5130 = vunpack.c.l.b16 %v4838
        %v5131 = vunpack.c.l.b16 %v4839
        %v5132 = vunpack.c.l.b16 %v4840
        %v5133 = vunpack.c.l.b16 %v4841
        %v5134 = vunpack.c.l.b16 %v4842
        %v5135 = vunpack.c.l.b16 %v4843
        %v5136 = vunpack.c.l.b16 %v4844
        %v5137 = vunpack.c.l.b16 %v4845
        %v5138 = vunpack.c.l.b16 %v4846
        %v5139 = vunpack.c.l.b16 %v4847
        %v5140 = vunpack.c.l.b16 %v4848
        %v5141 = vunpack.c.l.b16 %v4849
        %v5142 = vunpack.c.l.b16 %v4850
        %v5143 = vunpack.c.l.b16 %v4851
        %v5144 = vunpack.c.l.b16 %v4852
        %v5145 = vunpack.c.l.b16 %v4853
        %v5146 = vunpack.c.l.b16 %v4854
        %v5147 = vunpack.c.l.b16 %v4855
        %v5148 = vunpack.c.l.b16 %v4856
        %v5149 = vunpack.c.l.b16 %v4857
        %v5150 = vunpack.c.l.b16 %v4858
        %v5151 = vunpack.c.l.b16 %v4859
        %v5152 = vunpack.c.l.b16 %v4860
        %v5153 = vunpack.c.l.b16 %v4861
        %v5154 = vunpack.c.l.b16 %v4862
        %v5155 = vunpack.c.l.b16 %v4863
        %v5156 = vunpack.c.l.b16 %v4864
        %v5157 = vunpack.c.l.b16 %v4865
        %v5158 = vunpack.c.l.b16 %v4866
        %v5159 = vunpack.c.l.b16 %v4867
        %v5160 = vunpack.c.l.b16 %v4868
        %v5161 = vunpack.c.l.b16 %v4869
        %v5162 = vunpack.c.l.b16 %v4870
        %v5163 = vunpack.c.l.b16 %v4871
        %v5164 = vunpack.c.l.b16 %v4872
        %v5165 = vunpack.c.l.b16 %v4873
        %v5166 = vunpack.c.l.b16 %v4874
        %v5167 = vunpack.c.l.b16 %v4875
        %v5168 = vunpack.c.l.b16 %v4876
        %v5169 = vunpack.c.l.b16 %v4877
        %v5170 = vunpack.c.l.b16 %v4878
        %v5171 = vunpack.c.l.b16 %v4879
        %v5172 = vunpack.c.l.b16 %v4880
        %v5173 = vunpack.c.l.b16 %v4881
        %v5174 = vunpack.c.l.b16 %v4882
        %v5175 = vunpack.c.l.b16 %v4883
        %v5176 = vunpack.c.l.b16 %v4884
        %v5177 = vunpack.c.l.b16 %v4885
        %v5178 = vunpack.c.l.b16 %v4886
        %v5179 = vunpack.c.l.b16 %v4887
        %v5180 = vunpack.c.l.b16 %v4888
        %v5181 = vunpack.c.l.b16 %v4889
        %v5182 = vunpack.c.l.b16 %v4890
        %v5183 = vunpack.c.l.b16 %v4891
        %v5184 = vunpack.c.l.b16 %v4892
        %v5185 = vunpack.c.l.b16 %v4893
        %v5186 = vunpack.c.l.b16 %v4894
        %v5187 = vunpack.c.l.b16 %v4895
        %v5188 = vunpack.c.l.b16 %v4896
        %v5189 = vunpack.c.l.b16 %v4897
        %v5190 = vunpack.c.l.b16 %v4898
        %v5191 = vunpack.c.l.b16 %v4899
        %v5192 = vunpack.c.l.b16 %v4900
        %v5193 = vunpack.c.l.b16 %v4901
        %v5194 = vunpack.c.l.b16 %v4902
        %v5195 = vunpack.c.l.b16 %v4903
        %v5196 = vunpack.c.l.b16 %v4904
        %v5197 = vunpack.c.l.b16 %v4905
        %v5198 = vunpack.c.l.b16 %v4906
        %v5199 = vunpack.c.l.b16 %v4907
        %v5200 = vunpack.c.l.b16 %v4908
        %v5201 = vunpack.c.l.b16 %v4909
        %v5202 = vunpack.c.l.b16 %v4910
        %v5203 = vunpack.c.l.b16 %v4911
        %v5204 = vunpack.c.l.b16 %v4912
        %v5205 = vunpack.c.l.b16 %v4913
        %v5206 = vunpack.c.l.b16 %v4914
        %v5207 = vunpack.c.l.b16 %v4915
        %v5208 = vunpack.c.l.b16 %v4916
        %v5209 = vunpack.c.l.b16 %v4917
        %v5210 = vunpack.c.l.b16 %v4918
        %v5211 = vunpack.c.l.b16 %v4919
        %v5212 = vunpack.c.l.b16 %v4920
        %v5213 = vunpack.c.l.b16 %v4921
        %v5214 = vunpack.c.l.b16 %v4922
        %v5215 = vunpack.c.l.b16 %v4923
        %v5216 = vunpack.c.l.b16 %v4924
        %v5217 = vunpack.c.l.b16 %v4925
        %v5218 = vunpack.c.l.b16 %v4926
        %v5219 = vunpack.c.l.b16 %v4927
        %v5220 = vunpack.c.l.b16 %v4928
        %v5221 = vunpack.c.l.b16 %v4929
        %v5222 = vunpack.c.l.b16 %v4930
        %v5223 = vunpack.c.l.b16 %v4931
        %v5224 = vunpack.c.l.b16 %v4932
        %v5225 = vunpack.c.l.b16 %v4933
        %v5226 = vunpack.c.l.b16 %v4934
        %v5227 = vunpack.c.l.b16 %v4935
        %v5228 = vunpack.c.l.b16 %v4936
        %v5229 = vunpack.c.l.b16 %v4937
        %v5230 = vunpack.c.l.b16 %v4938
        %v5231 = vunpack.c.l.b16 %v4939
        %v5232 = vunpack.c.l.b16 %v4940
        %v5233 = vunpack.c.l.b16 %v4941
        %v5234 = vunpack.c.l.b16 %v4942
        %v5235 = vunpack.c.l.b16 %v4943
        %v5236 = vunpack.c.l.b16 %v4944
        %v5237 = vunpack.c.l.b16 %v4945
        %v5238 = vunpack.c.l.b16 %v4946
        %v5239 = vunpack.c.l.b16 %v4947
        %v5240 = vunpack.c.l.b16 %v4948
        %v5241 = vunpack.c.l.b16 %v4949
        %v5242 = vunpack.c.l.b16 %v4950
        %v5243 = vunpack.c.l.b16 %v4951
        %v5244 = vunpack.c.l.b16 %v4952
        %v5245 = vunpack.c.l.b16 %v4953
        %v5246 = vunpack.c.l.b16 %v4954
        %v5247 = vunpack.c.l.b16 %v4955
        %v5248 = vunpack.c.l.b16 %v4956
        %v5249 = vunpack.c.l.b16 %v4957
        %v5250 = vunpack.c.l.b16 %v4958
        %v5251 = vunpack.c.l.b16 %v4959
        %v5252 = vunpack.c.l.b16 %v4960
        %v5253 = vunpack.c.l.b16 %v4961
        %v5254 = vunpack.c.l.b16 %v4962
        %v5255 = vunpack.c.l.b16 %v4963
        %v5256 = vunpack.c.l.b16 %v4964
        %v5257 = vunpack.c.l.b16 %v4965
        %v5258 = vunpack.c.l.b16 %v4966
        %v5259 = vunpack.c.l.b16 %v4967
        %v5260 = vunpack.c.l.b16 %v4968
        %v5261 = vunpack.c.l.b16 %v4969
        %v5262 = vunpack.c.l.b16 %v4970
        %v5263 = vunpack.c.l.b16 %v4971
        %v5264 = vunpack.c.l.b16 %v4972
        %v5265 = vunpack.c.l.b16 %v4973
        %v5266 = vunpack.c.l.b16 %v4974
        %v5267 = vunpack.c.l.b16 %v4975
        %v5268 = vunpack.c.l.b16 %v4976
        %v5269 = vunpack.c.l.b16 %v4977
        %v5270 = vunpack.c.l.b16 %v4978
        %v5271 = vunpack.c.l.b16 %v4979
        %v5272 = vpack.c.b16 %v5129, %v5128
        %v5273 = vpack.c.b16 %v5131, %v5130
        %v5274 = vpack.c.b16 %v5133, %v5132
        %v5275 = vpack.c.b16 %v5135, %v5134
        %v5276 = vpack.c.b16 %v5137, %v5136
        %v5277 = vpack.c.b16 %v5139, %v5138
        %v5278 = vpack.c.b16 %v5141, %v5140
        %v5279 = vpack.c.b16 %v5143, %v5142
        %v5280 = vpack.c.b16 %v5145, %v5144
        %v5281 = vpack.c.b16 %v5147, %v5146
        %v5282 = vpack.c.b16 %v5149, %v5148
        %v5283 = vpack.c.b16 %v5151, %v5150
        %v5284 = vpack.c.b16 %v5153, %v5152
        %v5285 = vpack.c.b16 %v5155, %v5154
        %v5286 = vpack.c.b16 %v5157, %v5156
        %v5287 = vpack.c.b16 %v5159, %v5158
        %v5288 = vpack.c.b16 %v5161, %v5160
        %v5289 = vpack.c.b16 %v5163, %v5162
        %v5290 = vpack.c.b16 %v5165, %v5164
        %v5291 = vpack.c.b16 %v5167, %v5166
        %v5292 = vpack.c.b16 %v5169, %v5168
        %v5293 = vpack.c.b16 %v5171, %v5170
        %v5294 = vpack.c.b16 %v5173, %v5172
        %v5295 = vpack.c.b16 %v5175, %v5174
        %v5296 = vpack.c.b16 %v5177, %v5176
        %v5297 = vpack.c.b16 %v5179, %v5178
        %v5298 = vpack.c.b16 %v5181, %v5180
        %v5299 = vpack.c.b16 %v5183, %v5182
        %v5300 = vpack.c.b16 %v5185, %v5184
        %v5301 = vpack.c.b16 %v5187, %v5186
        %v5302 = vpack.c.b16 %v5189, %v5188
        %v5303 = vpack.c.b16 %v5191, %v5190
        %v5304 = vpack.c.b16 %v5193, %v5192
        %v5305 = vpack.c.b16 %v5195, %v5194
        %v5306 = vpack.c.b16 %v5197, %v5196
        %v5307 = vpack.c.b16 %v5199, %v5198
        %v5308 = vpack.c.b16 %v5201, %v5200
        %v5309 = vpack.c.b16 %v5203, %v5202
        %v5310 = vpack.c.b16 %v5205, %v5204
        %v5311 = vpack.c.b16 %v5207, %v5206
        %v5312 = vpack.c.b16 %v5209, %v5208
        %v5313 = vpack.c.b16 %v5211, %v5210
        %v5314 = vpack.c.b16 %v5213, %v5212
        %v5315 = vpack.c.b16 %v5215, %v5214
        %v5316 = vpack.c.b16 %v5217, %v5216
        %v5317 = vpack.c.b16 %v5219, %v5218
        %v5318 = vpack.c.b16 %v5221, %v5220
        %v5319 = vpack.c.b16 %v5223, %v5222
        %v5320 = vpack.c.b16 %v5225, %v5224
        %v5321 = vpack.c.b16 %v5227, %v5226
        %v5322 = vpack.c.b16 %v5229, %v5228
        %v5323 = vpack.c.b16 %v5231, %v5230
        %v5324 = vpack.c.b16 %v5233, %v5232
        %v5325 = vpack.c.b16 %v5235, %v5234
        %v5326 = vpack.c.b16 %v5237, %v5236
        %v5327 = vpack.c.b16 %v5239, %v5238
        %v5328 = vpack.c.b16 %v5241, %v5240
        %v5329 = vpack.c.b16 %v5243, %v5242
        %v5330 = vpack.c.b16 %v5245, %v5244
        %v5331 = vpack.c.b16 %v5247, %v5246
        %v5332 = vpack.c.b16 %v5249, %v5248
        %v5333 = vpack.c.b16 %v5251, %v5250
        %v5334 = vpack.c.b16 %v5253, %v5252
        %v5335 = vpack.c.b16 %v5255, %v5254
        %v5336 = vpack.c.b16 %v5257, %v5256
        %v5337 = vpack.c.b16 %v5259, %v5258
        %v5338 = vpack.c.b16 %v5261, %v5260
        %v5339 = vpack.c.b16 %v5263, %v5262
        %v5340 = vpack.c.b16 %v5265, %v5264
        %v5341 = vpack.c.b16 %v5267, %v5266
        %v5342 = vpack.c.b16 %v5269, %v5268
        %v5343 = vpack.c.b16 %v5271, %v5270
        %5416 = vmatpush.bf16.msra.mxu0 %v5279
        %5417 = vmatpush.bf16.msra.mxu0 %v5278
        %5418 = vmatpush.bf16.msra.mxu0 %v5277
        %5419 = vmatpush.bf16.msra.mxu0 %v5276
        %5420 = vmatpush.bf16.msra.mxu0 %v5275
        %5421 = vmatpush.bf16.msra.mxu0 %v5274
        %5422 = vmatpush.bf16.msra.mxu0 %v5273
        %5423 = vmatpush.bf16.msra.mxu0 %v5272
        %5424 = vmatmul.bf16.gmra.mxu0 %v4756
        %v5425 = vpop.f32.mrf.mxu0
        %v5426 = vadd.f32 %v4982, %v5425
        %v5427 = vpop.f32.mrf.mxu0
        %v5428 = vadd.f32 %v4982, %v5427
        %5429 = vmatmul.bf16.gmra.mxu0 %v4757
        %v5430 = vpop.f32.mrf.mxu0
        %v5431 = vadd.f32 %v4982, %v5430
        %v5432 = vpop.f32.mrf.mxu0
        %5433 = vdwg.mxu0
        %5434 = vmatpush.bf16.msra.mxu0 %v5287
        %5435 = vmatpush.bf16.msra.mxu0 %v5286
        %5436 = vmatpush.bf16.msra.mxu0 %v5285
        %5437 = vmatpush.bf16.msra.mxu0 %v5284
        %5438 = vmatpush.bf16.msra.mxu0 %v5283
        %5439 = vmatpush.bf16.msra.mxu0 %v5282
        %5440 = vmatpush.bf16.msra.mxu0 %v5281
        %5441 = vmatpush.bf16.msra.mxu0 %v5280
        %5442 = vmatmul.bf16.gmra.mxu0 %v4766
        %v5443 = vpop.f32.mrf.mxu0
        %v5444 = vadd.f32 %v5426, %v5443
        %v5445 = vpop.f32.mrf.mxu0
        %v5446 = vadd.f32 %v5428, %v5445
        %5447 = vmatmul.bf16.gmra.mxu0 %v4767
        %v5448 = vpop.f32.mrf.mxu0
        %v5449 = vadd.f32 %v5431, %v5448
        %v5450 = vpop.f32.mrf.mxu0
        %5451 = vdwg.mxu0
        %5452 = vmatpush.bf16.msra.mxu0 %v5295
        %5453 = vmatpush.bf16.msra.mxu0 %v5294
        %5454 = vmatpush.bf16.msra.mxu0 %v5293
        %5455 = vmatpush.bf16.msra.mxu0 %v5292
        %5456 = vmatpush.bf16.msra.mxu0 %v5291
        %5457 = vmatpush.bf16.msra.mxu0 %v5290
        %5458 = vmatpush.bf16.msra.mxu0 %v5289
        %5459 = vmatpush.bf16.msra.mxu0 %v5288
        %5460 = vmatmul.bf16.gmra.mxu0 %v4776
        %v5461 = vpop.f32.mrf.mxu0
        %v5462 = vadd.f32 %v5444, %v5461
        %v5463 = vpop.f32.mrf.mxu0
        %v5464 = vadd.f32 %v5446, %v5463
        %5465 = vmatmul.bf16.gmra.mxu0 %v4777
        %v5466 = vpop.f32.mrf.mxu0
        %v5467 = vadd.f32 %v5449, %v5466
        %v5468 = vpop.f32.mrf.mxu0
        %5469 = vdwg.mxu0
        %5470 = vmatpush.bf16.msra.mxu0 %v5303
        %5471 = vmatpush.bf16.msra.mxu0 %v5302
        %5472 = vmatpush.bf16.msra.mxu0 %v5301
        %5473 = vmatpush.bf16.msra.mxu0 %v5300
        %5474 = vmatpush.bf16.msra.mxu0 %v5299
        %5475 = vmatpush.bf16.msra.mxu0 %v5298
        %5476 = vmatpush.bf16.msra.mxu0 %v5297
        %5477 = vmatpush.bf16.msra.mxu0 %v5296
        %5478 = vmatmul.bf16.gmra.mxu0 %v4786
        %v5479 = vpop.f32.mrf.mxu0
        %v5480 = vadd.f32 %v5462, %v5479
        %v5481 = vpop.f32.mrf.mxu0
        %v5482 = vadd.f32 %v5464, %v5481
        %5483 = vmatmul.bf16.gmra.mxu0 %v4787
        %v5484 = vpop.f32.mrf.mxu0
        %v5485 = vadd.f32 %v5467, %v5484
        %v5486 = vpop.f32.mrf.mxu0
        %5487 = vdwg.mxu0
        %5488 = vmatpush.bf16.msra.mxu0 %v5311
        %5489 = vmatpush.bf16.msra.mxu0 %v5310
        %5490 = vmatpush.bf16.msra.mxu0 %v5309
        %5491 = vmatpush.bf16.msra.mxu0 %v5308
        %5492 = vmatpush.bf16.msra.mxu0 %v5307
        %5493 = vmatpush.bf16.msra.mxu0 %v5306
        %5494 = vmatpush.bf16.msra.mxu0 %v5305
        %5495 = vmatpush.bf16.msra.mxu0 %v5304
        %5496 = vmatmul.bf16.gmra.mxu0 %v4796
        %v5497 = vpop.f32.mrf.mxu0
        %v5498 = vadd.f32 %v5480, %v5497
        %v5499 = vpop.f32.mrf.mxu0
        %v5500 = vadd.f32 %v5482, %v5499
        %5501 = vmatmul.bf16.gmra.mxu0 %v4797
        %v5502 = vpop.f32.mrf.mxu0
        %v5503 = vadd.f32 %v5485, %v5502
        %v5504 = vpop.f32.mrf.mxu0
        %5505 = vdwg.mxu0
        %5506 = vmatpush.bf16.msra.mxu0 %v5319
        %5507 = vmatpush.bf16.msra.mxu0 %v5318
        %5508 = vmatpush.bf16.msra.mxu0 %v5317
        %5509 = vmatpush.bf16.msra.mxu0 %v5316
        %5510 = vmatpush.bf16.msra.mxu0 %v5315
        %5511 = vmatpush.bf16.msra.mxu0 %v5314
        %5512 = vmatpush.bf16.msra.mxu0 %v5313
        %5513 = vmatpush.bf16.msra.mxu0 %v5312
        %5514 = vmatmul.bf16.gmra.mxu0 %v4804
        %v5515 = vpop.f32.mrf.mxu0
        %v5516 = vadd.f32 %v5498, %v5515
        %v5517 = vpop.f32.mrf.mxu0
        %v5518 = vadd.f32 %v5500, %v5517
        %5519 = vmatmul.bf16.gmra.mxu0 %v4805
        %v5520 = vpop.f32.mrf.mxu0
        %v5521 = vadd.f32 %v5503, %v5520
        %v5522 = vpop.f32.mrf.mxu0
        %5523 = vdwg.mxu0
        %5524 = vmatpush.bf16.msra.mxu0 %v5327
        %5525 = vmatpush.bf16.msra.mxu0 %v5326
        %5526 = vmatpush.bf16.msra.mxu0 %v5325
        %5527 = vmatpush.bf16.msra.mxu0 %v5324
        %5528 = vmatpush.bf16.msra.mxu0 %v5323
        %5529 = vmatpush.bf16.msra.mxu0 %v5322
        %5530 = vmatpush.bf16.msra.mxu0 %v5321
        %5531 = vmatpush.bf16.msra.mxu0 %v5320
        %5532 = vmatmul.bf16.gmra.mxu0 %v4814
        %v5533 = vpop.f32.mrf.mxu0
        %v5534 = vadd.f32 %v5516, %v5533
        %v5535 = vpop.f32.mrf.mxu0
        %v5536 = vadd.f32 %v5518, %v5535
        %5537 = vmatmul.bf16.gmra.mxu0 %v4815
        %v5538 = vpop.f32.mrf.mxu0
        %v5539 = vadd.f32 %v5521, %v5538
        %v5540 = vpop.f32.mrf.mxu0
        %5541 = vdwg.mxu0
        %5542 = vmatpush.bf16.msra.mxu0 %v5335
        %5543 = vmatpush.bf16.msra.mxu0 %v5334
        %5544 = vmatpush.bf16.msra.mxu0 %v5333
        %5545 = vmatpush.bf16.msra.mxu0 %v5332
        %5546 = vmatpush.bf16.msra.mxu0 %v5331
        %5547 = vmatpush.bf16.msra.mxu0 %v5330
        %5548 = vmatpush.bf16.msra.mxu0 %v5329
        %5549 = vmatpush.bf16.msra.mxu0 %v5328
        %5550 = vmatmul.bf16.gmra.mxu0 %v4824
        %v5551 = vpop.f32.mrf.mxu0
        %v5552 = vadd.f32 %v5534, %v5551
        %v5553 = vpop.f32.mrf.mxu0
        %v5554 = vadd.f32 %v5536, %v5553
        %5555 = vmatmul.bf16.gmra.mxu0 %v4825
        %v5556 = vpop.f32.mrf.mxu0
        %v5557 = vadd.f32 %v5539, %v5556
        %v5558 = vpop.f32.mrf.mxu0
        %5559 = vdwg.mxu0
        %5560 = vmatpush.bf16.msra.mxu0 %v5343
        %5561 = vmatpush.bf16.msra.mxu0 %v5342
        %5562 = vmatpush.bf16.msra.mxu0 %v5341
        %5563 = vmatpush.bf16.msra.mxu0 %v5340
        %5564 = vmatpush.bf16.msra.mxu0 %v5339
        %5565 = vmatpush.bf16.msra.mxu0 %v5338
        %5566 = vmatpush.bf16.msra.mxu0 %v5337
        %5567 = vmatpush.bf16.msra.mxu0 %v5336
        %5568 = vmatmul.bf16.gmra.mxu0 %v4832
        %v5569 = vpop.f32.mrf.mxu0
        %v5570 = vadd.f32 %v5552, %v5569
        %v5571 = vpop.f32.mrf.mxu0
        %v5572 = vadd.f32 %v5554, %v5571
        %5573 = vmatmul.bf16.gmra.mxu0 %v4833
        %v5574 = vpop.f32.mrf.mxu0
        %v5575 = vadd.f32 %v5557, %v5574
        %v5576 = vpop.f32.mrf.mxu0
        %5577 = vdwg.mxu0
        %v5578 = vmax.f32 %v5570, 0.0
        %v5579 = vmax.f32 %v5572, 0.0
        %v5580 = vmax.f32 %v5575, 0.0
        %v5582 = vrot.slane %v5578, 1
        %5583 = vrot.lane.b32.xlu0 %v5582, 64
        %v5584 = vpop.permute.xlu0 %5583
        %v5586 = vrot.slane %v5578, 2
        %v5588 = vrot.slane %v5578, 3
        %5589 = vrot.lane.b32.xlu0 %v5588, 64
        %v5590 = vpop.permute.xlu0 %5589
        %v5592 = vrot.slane %v5578, 6
        %v5594 = vrot.slane %v5578, 7
        %5595 = vrot.lane.b32.xlu0 %v5594, 64
        %v5596 = vpop.permute.xlu0 %5595
        %v5599 = vrot.slane %v5579, 1
        %5600 = vrot.lane.b32.xlu0 %v5599, 64
        %v5601 = vpop.permute.xlu0 %5600
        %v5603 = vrot.slane %v5579, 4
        %v5605 = vrot.slane %v5579, 5
        %5606 = vrot.lane.b32.xlu0 %v5605, 64
        %v5607 = vpop.permute.xlu0 %5606
        %v5609 = vrot.slane %v5579, 6
        %v5611 = vrot.slane %v5579, 7
        %5612 = vrot.lane.b32.xlu0 %v5611, 64
        %v5613 = vpop.permute.xlu0 %5612
        %v5616 = vrot.slane %v5580, 2
        %v5618 = vrot.slane %v5580, 3
        %5619 = vrot.lane.b32.xlu0 %v5618, 64
        %v5620 = vpop.permute.xlu0 %5619
        %v5622 = vrot.slane %v5580, 4
        %v5624 = vrot.slane %v5580, 5
        %5625 = vrot.lane.b32.xlu0 %v5624, 64
        %v5626 = vpop.permute.xlu0 %5625
        %vm5628 = vcmask 523264
        %v5629 = vsel %vm5628, %v5578, %v5584
        %v5630 = vsel %vm5628, %v5586, %v5590
        %v5631 = vsel %vm5628, %v5592, %v5596
        %v5632 = vsel %vm5628, %v5579, %v5601
        %v5633 = vsel %vm5628, %v5603, %v5607
        %v5634 = vsel %vm5628, %v5609, %v5613
        %v5635 = vsel %vm5628, %v5616, %v5620
        %v5636 = vsel %vm5628, %v5622, %v5626
        %v5637 = vld [vmem:[%s7] sm:$0xff]
        %v5638 = vld [vmem:[%s7 + $0x8] sm:$0xff]
        %v5639 = vld [vmem:[%s7 + $0x10] sm:$0xff]
        %v5640 = vld [vmem:[%s7 + $0x18] sm:$0xff]
        %v5641 = vld [vmem:[%s7 + $0x20] sm:$0xff]
        %v5642 = vld [vmem:[%s7 + $0x28] sm:$0xff]
        %v5643 = vld [vmem:[%s7 + $0x30] sm:$0xff]
        %v5644 = vld [vmem:[%s7 + $0x38] sm:$0xff]
        %v5645 = vld [vmem:[%s7 + $0x40] sm:$0xff]
        %v5646 = vld [vmem:[%s7 + $0x48] sm:$0xff]
        %v5647 = vld [vmem:[%s7 + $0x50] sm:$0xff]
        %v5648 = vld [vmem:[%s7 + $0x58] sm:$0xff]
        %v5649 = vld [vmem:[%s7 + $0x60] sm:$0xff]
        %v5650 = vld [vmem:[%s7 + $0x68] sm:$0xff]
        %v5651 = vld [vmem:[%s7 + $0x70] sm:$0xff]
        %v5652 = vld [vmem:[%s7 + $0x78] sm:$0xff]
        %v5653 = vld [vmem:[%s7 + $0x80] sm:$0xff]
        %v5654 = vld [vmem:[%s7 + $0x88] sm:$0xff]
        %v5655 = vld [vmem:[%s7 + $0x90] sm:$0xff]
        %v5656 = vld [vmem:[%s7 + $0x98] sm:$0xff]
        %v5657 = vld [vmem:[%s7 + $0xa0] sm:$0xff]
        %v5658 = vld [vmem:[%s7 + $0xa8] sm:$0xff]
        %v5659 = vld [vmem:[%s7 + $0xb0] sm:$0xff]
        %v5660 = vld [vmem:[%s7 + $0xb8] sm:$0xff]
        %v5661 = vld [vmem:[%s7 + $0xc0] sm:$0xff]
        %v5662 = vld [vmem:[%s7 + $0xc8] sm:$0xff]
        %v5663 = vld [vmem:[%s7 + $0xd0] sm:$0xff]
        %v5664 = vld [vmem:[%s7 + $0xd8] sm:$0xff]
        %v5665 = vld [vmem:[%s7 + $0xe0] sm:$0xff]
        %v5666 = vld [vmem:[%s7 + $0xe8] sm:$0xff]
        %v5667 = vld [vmem:[%s7 + $0xf0] sm:$0xff]
        %v5668 = vld [vmem:[%s7 + $0xf8] sm:$0xff]
        %v5669 = vld [vmem:[%s7 + $0x100] sm:$0xff]
        %v5670 = vld [vmem:[%s7 + $0x108] sm:$0xff]
        %v5671 = vld [vmem:[%s7 + $0x110] sm:$0xff]
        %v5672 = vld [vmem:[%s7 + $0x118] sm:$0xff]
        %v5673 = vld [vmem:[%s7 + $0x120] sm:$0xff]
        %v5674 = vld [vmem:[%s7 + $0x128] sm:$0xff]
        %v5675 = vld [vmem:[%s7 + $0x130] sm:$0xff]
        %v5676 = vld [vmem:[%s7 + $0x138] sm:$0xff]
        %v5677 = vld [vmem:[%s7 + $0x140] sm:$0xff]
        %v5678 = vld [vmem:[%s7 + $0x148] sm:$0xff]
        %v5679 = vld [vmem:[%s7 + $0x150] sm:$0xff]
        %v5680 = vld [vmem:[%s7 + $0x158] sm:$0xff]
        %v5681 = vld [vmem:[%s7 + $0x160] sm:$0xff]
        %v5682 = vld [vmem:[%s7 + $0x168] sm:$0xff]
        %v5683 = vld [vmem:[%s7 + $0x170] sm:$0xff]
        %v5684 = vld [vmem:[%s7 + $0x178] sm:$0xff]
        %v5685 = vld [vmem:[%s7 + $0x180] sm:$0xff]
        %v5686 = vld [vmem:[%s7 + $0x188] sm:$0xff]
        %v5687 = vld [vmem:[%s7 + $0x190] sm:$0xff]
        %v5688 = vld [vmem:[%s7 + $0x198] sm:$0xff]
        %v5689 = vld [vmem:[%s7 + $0x1a0] sm:$0xff]
        %v5690 = vld [vmem:[%s7 + $0x1a8] sm:$0xff]
        %v5691 = vld [vmem:[%s7 + $0x1b0] sm:$0xff]
        %v5692 = vld [vmem:[%s7 + $0x1b8] sm:$0xff]
        %v5693 = vld [vmem:[%s7 + $0x1c0] sm:$0xff]
        %v5694 = vld [vmem:[%s7 + $0x1c8] sm:$0xff]
        %v5695 = vld [vmem:[%s7 + $0x1d0] sm:$0xff]
        %v5696 = vld [vmem:[%s7 + $0x1d8] sm:$0xff]
        %v5697 = vld [vmem:[%s7 + $0x1e0] sm:$0xff]
        %v5698 = vld [vmem:[%s7 + $0x1e8] sm:$0xff]
        %v5699 = vld [vmem:[%s7 + $0x1f0] sm:$0xff]
        %v5700 = vld [vmem:[%s7 + $0x1f8] sm:$0xff]
        %v5701 = vld [vmem:[%s7 + $0x200] sm:$0xff]
        %v5702 = vld [vmem:[%s7 + $0x208] sm:$0xff]
        %v5703 = vld [vmem:[%s7 + $0x210] sm:$0xff]
        %v5704 = vld [vmem:[%s7 + $0x218] sm:$0xff]
        %v5705 = vld [vmem:[%s7 + $0x220] sm:$0xff]
        %v5706 = vld [vmem:[%s7 + $0x228] sm:$0xff]
        %v5707 = vld [vmem:[%s7 + $0x230] sm:$0xff]
        %v5708 = vld [vmem:[%s7 + $0x238] sm:$0xff]
        %v5709 = vld [vmem:[%s7 + $0x240] sm:$0xff]
        %v5710 = vld [vmem:[%s7 + $0x248] sm:$0xff]
        %v5711 = vld [vmem:[%s7 + $0x250] sm:$0xff]
        %v5712 = vld [vmem:[%s7 + $0x258] sm:$0xff]
        %v5713 = vld [vmem:[%s7 + $0x260] sm:$0xff]
        %v5714 = vld [vmem:[%s7 + $0x268] sm:$0xff]
        %v5715 = vld [vmem:[%s7 + $0x270] sm:$0xff]
        %v5716 = vld [vmem:[%s7 + $0x278] sm:$0xff]
        %v5717 = vld [vmem:[%s7 + $0x280] sm:$0xff]
        %v5718 = vld [vmem:[%s7 + $0x288] sm:$0xff]
        %v5719 = vld [vmem:[%s7 + $0x290] sm:$0xff]
        %v5720 = vld [vmem:[%s7 + $0x298] sm:$0xff]
        %v5721 = vld [vmem:[%s7 + $0x2a0] sm:$0xff]
        %v5722 = vld [vmem:[%s7 + $0x2a8] sm:$0xff]
        %v5723 = vld [vmem:[%s7 + $0x2b0] sm:$0xff]
        %v5724 = vld [vmem:[%s7 + $0x2b8] sm:$0xff]
        %v5725 = vld [vmem:[%s7 + $0x2c0] sm:$0xff]
        %v5726 = vld [vmem:[%s7 + $0x2c8] sm:$0xff]
        %v5727 = vld [vmem:[%s7 + $0x2d0] sm:$0xff]
        %v5728 = vld [vmem:[%s7 + $0x2d8] sm:$0xff]
        %v5729 = vld [vmem:[%s7 + $0x2e0] sm:$0xff]
        %v5730 = vld [vmem:[%s7 + $0x2e8] sm:$0xff]
        %v5731 = vld [vmem:[%s7 + $0x2f0] sm:$0xff]
        %v5732 = vld [vmem:[%s7 + $0x2f8] sm:$0xff]
        %v5733 = vld [vmem:[%s7 + $0x300] sm:$0xff]
        %v5734 = vld [vmem:[%s7 + $0x308] sm:$0xff]
        %v5735 = vld [vmem:[%s7 + $0x310] sm:$0xff]
        %v5736 = vld [vmem:[%s7 + $0x318] sm:$0xff]
        %v5737 = vld [vmem:[%s7 + $0x320] sm:$0xff]
        %v5738 = vld [vmem:[%s7 + $0x328] sm:$0xff]
        %v5739 = vld [vmem:[%s7 + $0x330] sm:$0xff]
        %v5740 = vld [vmem:[%s7 + $0x338] sm:$0xff]
        %v5741 = vld [vmem:[%s7 + $0x340] sm:$0xff]
        %v5742 = vld [vmem:[%s7 + $0x348] sm:$0xff]
        %v5743 = vld [vmem:[%s7 + $0x350] sm:$0xff]
        %v5744 = vld [vmem:[%s7 + $0x358] sm:$0xff]
        %v5745 = vld [vmem:[%s7 + $0x360] sm:$0xff]
        %v5746 = vld [vmem:[%s7 + $0x368] sm:$0xff]
        %v5747 = vld [vmem:[%s7 + $0x370] sm:$0xff]
        %v5748 = vld [vmem:[%s7 + $0x378] sm:$0xff]
        %v5749 = vld [vmem:[%s7 + $0x380] sm:$0xff]
        %v5750 = vld [vmem:[%s7 + $0x388] sm:$0xff]
        %v5751 = vld [vmem:[%s7 + $0x390] sm:$0xff]
        %v5752 = vld [vmem:[%s7 + $0x398] sm:$0xff]
        %v5753 = vld [vmem:[%s7 + $0x3a0] sm:$0xff]
        %v5754 = vld [vmem:[%s7 + $0x3a8] sm:$0xff]
        %v5755 = vld [vmem:[%s7 + $0x3b0] sm:$0xff]
        %v5756 = vld [vmem:[%s7 + $0x3b8] sm:$0xff]
        %v5757 = vld [vmem:[%s7 + $0x3c0] sm:$0xff]
        %v5758 = vld [vmem:[%s7 + $0x3c8] sm:$0xff]
        %v5759 = vld [vmem:[%s7 + $0x3d0] sm:$0xff]
        %v5760 = vld [vmem:[%s7 + $0x3d8] sm:$0xff]
        %v5761 = vld [vmem:[%s7 + $0x3e0] sm:$0xff]
        %v5762 = vld [vmem:[%s7 + $0x3e8] sm:$0xff]
        %v5763 = vld [vmem:[%s7 + $0x3f0] sm:$0xff]
        %v5764 = vld [vmem:[%s7 + $0x3f8] sm:$0xff]
        %v5765 = vld [vmem:[%s8] sm:$0x1]
        %5766 = vmatpush.msra.mxu0 %v5652
        %5767 = vmatpush.msra.mxu0 %v5651
        %5768 = vmatpush.msra.mxu0 %v5650
        %5769 = vmatpush.msra.mxu0 %v5649
        %5770 = vmatpush.msra.mxu0 %v5648
        %5771 = vmatpush.msra.mxu0 %v5647
        %5772 = vmatpush.msra.mxu0 %v5646
        %5773 = vmatpush.msra.mxu0 %v5645
        %5774 = vmatpush.msra.mxu0 %v5644
        %5775 = vmatpush.msra.mxu0 %v5643
        %5776 = vmatpush.msra.mxu0 %v5642
        %5777 = vmatpush.msra.mxu0 %v5641
        %5778 = vmatpush.msra.mxu0 %v5640
        %5779 = vmatpush.msra.mxu0 %v5639
        %5780 = vmatpush.msra.mxu0 %v5638
        %5781 = vmatpush.msra.mxu0 %v5637
        %5782 = vmatmul.f32.gmra.mxu0 %v5629
        %v5783 = vpop.f32.mrf.mxu0
        %v5784 = vadd.f32 %v5765, %v5783
        %5785 = vdwg.mxu0
        %5786 = vmatpush.msra.mxu0 %v5668
        %5787 = vmatpush.msra.mxu0 %v5667
        %5788 = vmatpush.msra.mxu0 %v5666
        %5789 = vmatpush.msra.mxu0 %v5665
        %5790 = vmatpush.msra.mxu0 %v5664
        %5791 = vmatpush.msra.mxu0 %v5663
        %5792 = vmatpush.msra.mxu0 %v5662
        %5793 = vmatpush.msra.mxu0 %v5661
        %5794 = vmatpush.msra.mxu0 %v5660
        %5795 = vmatpush.msra.mxu0 %v5659
        %5796 = vmatpush.msra.mxu0 %v5658
        %5797 = vmatpush.msra.mxu0 %v5657
        %5798 = vmatpush.msra.mxu0 %v5656
        %5799 = vmatpush.msra.mxu0 %v5655
        %5800 = vmatpush.msra.mxu0 %v5654
        %5801 = vmatpush.msra.mxu0 %v5653
        %5802 = vmatmul.f32.gmra.mxu0 %v5630
        %v5803 = vpop.f32.mrf.mxu0
        %v5804 = vadd.f32 %v5784, %v5803
        %5805 = vdwg.mxu0
        %5806 = vmatpush.msra.mxu0 %v5684
        %5807 = vmatpush.msra.mxu0 %v5683
        %5808 = vmatpush.msra.mxu0 %v5682
        %5809 = vmatpush.msra.mxu0 %v5681
        %5810 = vmatpush.msra.mxu0 %v5680
        %5811 = vmatpush.msra.mxu0 %v5679
        %5812 = vmatpush.msra.mxu0 %v5678
        %5813 = vmatpush.msra.mxu0 %v5677
        %5814 = vmatpush.msra.mxu0 %v5676
        %5815 = vmatpush.msra.mxu0 %v5675
        %5816 = vmatpush.msra.mxu0 %v5674
        %5817 = vmatpush.msra.mxu0 %v5673
        %5818 = vmatpush.msra.mxu0 %v5672
        %5819 = vmatpush.msra.mxu0 %v5671
        %5820 = vmatpush.msra.mxu0 %v5670
        %5821 = vmatpush.msra.mxu0 %v5669
        %5822 = vmatmul.f32.gmra.mxu0 %v5631
        %v5823 = vpop.f32.mrf.mxu0
        %v5824 = vadd.f32 %v5804, %v5823
        %5825 = vdwg.mxu0
        %5826 = vmatpush.msra.mxu0 %v5700
        %5827 = vmatpush.msra.mxu0 %v5699
        %5828 = vmatpush.msra.mxu0 %v5698
        %5829 = vmatpush.msra.mxu0 %v5697
        %5830 = vmatpush.msra.mxu0 %v5696
        %5831 = vmatpush.msra.mxu0 %v5695
        %5832 = vmatpush.msra.mxu0 %v5694
        %5833 = vmatpush.msra.mxu0 %v5693
        %5834 = vmatpush.msra.mxu0 %v5692
        %5835 = vmatpush.msra.mxu0 %v5691
        %5836 = vmatpush.msra.mxu0 %v5690
        %5837 = vmatpush.msra.mxu0 %v5689
        %5838 = vmatpush.msra.mxu0 %v5688
        %5839 = vmatpush.msra.mxu0 %v5687
        %5840 = vmatpush.msra.mxu0 %v5686
        %5841 = vmatpush.msra.mxu0 %v5685
        %5842 = vmatmul.f32.gmra.mxu0 %v5632
        %v5843 = vpop.f32.mrf.mxu0
        %v5844 = vadd.f32 %v5824, %v5843
        %5845 = vdwg.mxu0
        %5846 = vmatpush.msra.mxu0 %v5716
        %5847 = vmatpush.msra.mxu0 %v5715
        %5848 = vmatpush.msra.mxu0 %v5714
        %5849 = vmatpush.msra.mxu0 %v5713
        %5850 = vmatpush.msra.mxu0 %v5712
        %5851 = vmatpush.msra.mxu0 %v5711
        %5852 = vmatpush.msra.mxu0 %v5710
        %5853 = vmatpush.msra.mxu0 %v5709
        %5854 = vmatpush.msra.mxu0 %v5708
        %5855 = vmatpush.msra.mxu0 %v5707
        %5856 = vmatpush.msra.mxu0 %v5706
        %5857 = vmatpush.msra.mxu0 %v5705
        %5858 = vmatpush.msra.mxu0 %v5704
        %5859 = vmatpush.msra.mxu0 %v5703
        %5860 = vmatpush.msra.mxu0 %v5702
        %5861 = vmatpush.msra.mxu0 %v5701
        %5862 = vmatmul.f32.gmra.mxu0 %v5633
        %v5863 = vpop.f32.mrf.mxu0
        %v5864 = vadd.f32 %v5844, %v5863
        %5865 = vdwg.mxu0
        %5866 = vmatpush.msra.mxu0 %v5732
        %5867 = vmatpush.msra.mxu0 %v5731
        %5868 = vmatpush.msra.mxu0 %v5730
        %5869 = vmatpush.msra.mxu0 %v5729
        %5870 = vmatpush.msra.mxu0 %v5728
        %5871 = vmatpush.msra.mxu0 %v5727
        %5872 = vmatpush.msra.mxu0 %v5726
        %5873 = vmatpush.msra.mxu0 %v5725
        %5874 = vmatpush.msra.mxu0 %v5724
        %5875 = vmatpush.msra.mxu0 %v5723
        %5876 = vmatpush.msra.mxu0 %v5722
        %5877 = vmatpush.msra.mxu0 %v5721
        %5878 = vmatpush.msra.mxu0 %v5720
        %5879 = vmatpush.msra.mxu0 %v5719
        %5880 = vmatpush.msra.mxu0 %v5718
        %5881 = vmatpush.msra.mxu0 %v5717
        %5882 = vmatmul.f32.gmra.mxu0 %v5634
        %v5883 = vpop.f32.mrf.mxu0
        %v5884 = vadd.f32 %v5864, %v5883
        %5885 = vdwg.mxu0
        %5886 = vmatpush.msra.mxu0 %v5748
        %5887 = vmatpush.msra.mxu0 %v5747
        %5888 = vmatpush.msra.mxu0 %v5746
        %5889 = vmatpush.msra.mxu0 %v5745
        %5890 = vmatpush.msra.mxu0 %v5744
        %5891 = vmatpush.msra.mxu0 %v5743
        %5892 = vmatpush.msra.mxu0 %v5742
        %5893 = vmatpush.msra.mxu0 %v5741
        %5894 = vmatpush.msra.mxu0 %v5740
        %5895 = vmatpush.msra.mxu0 %v5739
        %5896 = vmatpush.msra.mxu0 %v5738
        %5897 = vmatpush.msra.mxu0 %v5737
        %5898 = vmatpush.msra.mxu0 %v5736
        %5899 = vmatpush.msra.mxu0 %v5735
        %5900 = vmatpush.msra.mxu0 %v5734
        %5901 = vmatpush.msra.mxu0 %v5733
        %5902 = vmatmul.f32.gmra.mxu0 %v5635
        %v5903 = vpop.f32.mrf.mxu0
        %v5904 = vadd.f32 %v5884, %v5903
        %5905 = vdwg.mxu0
        %5906 = vmatpush.msra.mxu0 %v5764
        %5907 = vmatpush.msra.mxu0 %v5763
        %5908 = vmatpush.msra.mxu0 %v5762
        %5909 = vmatpush.msra.mxu0 %v5761
        %5910 = vmatpush.msra.mxu0 %v5760
        %5911 = vmatpush.msra.mxu0 %v5759
        %5912 = vmatpush.msra.mxu0 %v5758
        %5913 = vmatpush.msra.mxu0 %v5757
        %5914 = vmatpush.msra.mxu0 %v5756
        %5915 = vmatpush.msra.mxu0 %v5755
        %5916 = vmatpush.msra.mxu0 %v5754
        %5917 = vmatpush.msra.mxu0 %v5753
        %5918 = vmatpush.msra.mxu0 %v5752
        %5919 = vmatpush.msra.mxu0 %v5751
        %5920 = vmatpush.msra.mxu0 %v5750
        %5921 = vmatpush.msra.mxu0 %v5749
        %5922 = vmatmul.f32.gmra.mxu0 %v5636
        %v5923 = vpop.f32.mrf.mxu0
        %v5924 = vadd.f32 %v5904, %v5923
        %5925 = vdwg.mxu0
        %v5926 = vmax.f32 %v5924, 0.0
        %v5927 = vld [vmem:[%s9] sm:$0xff]
        %v5928 = vld [vmem:[%s9 + $0x8] sm:$0xff]
        %v5929 = vld [vmem:[%s9 + $0x10] sm:$0xff]
        %v5930 = vld [vmem:[%s9 + $0x18] sm:$0xff]
        %v5931 = vld [vmem:[%s9 + $0x20] sm:$0xff]
        %v5932 = vld [vmem:[%s9 + $0x28] sm:$0xff]
        %v5933 = vld [vmem:[%s9 + $0x30] sm:$0xff]
        %v5934 = vld [vmem:[%s9 + $0x38] sm:$0xff]
        %v5935 = vld [vmem:[%s10] sm:$0x1]
        %v5937 = vsel %vm5628, %v5926, 0
        %5939 = vmatpush.msra.mxu0 0.0
        %5940 = vmatpush.msra.mxu0 0.0
        %5941 = vmatpush.msra.mxu0 0.0
        %5942 = vmatpush.msra.mxu0 0.0
        %5943 = vmatpush.msra.mxu0 0.0
        %5944 = vmatpush.msra.mxu0 0.0
        %5945 = vmatpush.msra.mxu0 0.0
        %5946 = vmatpush.msra.mxu0 0.0
        %5947 = vmatpush.msra.mxu0 %v5934
        %5948 = vmatpush.msra.mxu0 %v5933
        %5949 = vmatpush.msra.mxu0 %v5932
        %5950 = vmatpush.msra.mxu0 %v5931
        %5951 = vmatpush.msra.mxu0 %v5930
        %5952 = vmatpush.msra.mxu0 %v5929
        %5953 = vmatpush.msra.mxu0 %v5928
        %5954 = vmatpush.msra.mxu0 %v5927
        %5955 = vmatmul.f32.gmra.mxu0 %v5937
        %v5956 = vpop.f32.mrf.mxu0
        %v5957 = vadd.f32 %v5935, %v5956
        %5958 = vdwg.mxu0
        %vm5959 = vcmask 73728
        %5960 = vst.msk [vmem:[%s378] sm:$0x1] %vm5959, %v5957
        %s5961 = sand.u32 %s269, 1
        %s5962 = scalar_lea.sflag [#allocation7], %s5961
        %s5963 = sand.u32 %s269, 1
        %s5964 = scalar_lea.vmem [#allocation6], %s5963
        // Predicated region
        $region65: #{tfconvnet_forward.1} parent=63 // pred_check
          %p5965 = pneg %p279
        $region66: #{tfconvnet_forward.1} parent=63 // pred_check_branch
          %5967 = sbr.rel (%p5965) target = $region68
        $region67: #{tfconvnet_forward.1} parent=63 // pred_region
          %5969 = vsyncadd %s5962, 0
          %s5970 = scalar_lea.hbm %s11, %s25
          %s5972 = sshll.u32 %s5964, 4
          %s5973 = int_to_ptr.vmem [resolvable:$true] %s5972
          %s5974 = sshll.u32 %s5970, 4
          %s5975 = int_to_ptr.hbm [resolvable:$true] %s5974
          %5977 = dma.vmem_to_hbm [thread:$0]  %s5973, 16, %s5975, %s5962
        $region68: #{tfconvnet_forward.1} parent=63 // pred_fallthru
          _
      $region64: #{tfconvnet_forward.1} parent=5 // pred_fallthru
        _
      %p5978 = scmp.le.s32.totalorder 2, %s20
      // Predicated region
      $region69: #{tfconvnet_forward.1} parent=5 // pred_check
        %p5979 = pneg %p5978
      $region70: #{tfconvnet_forward.1} parent=5 // pred_check_branch
        %5981 = sbr.rel (%p5979) target = $region72
      $region71: #{tfconvnet_forward.1} parent=5 // pred_region
        %s5982 = ssub.s32 %s20, 2
        // Predicated region
        $region73: #{tfconvnet_forward.1} parent=71 // pred_check
          %p5983 = pneg %p285
        $region74: #{tfconvnet_forward.1} parent=71 // pred_check_branch
          %5985 = sbr.rel (%p5983) target = $region76
        $region75: #{tfconvnet_forward.1} parent=71 // pred_region
          %s5986 = sand.u32 %s270, 1
          %s5987 = scalar_lea.sflag [#allocation7], %s5986
          %s5988 = sand.u32 %s270, 1
          %s5989 = scalar_lea.vmem [#allocation6], %s5988
          %5991 = dma.done %s5987, 16
        $region76: #{tfconvnet_forward.1} parent=71 // pred_fallthru
          _
      $region72: #{tfconvnet_forward.1} parent=5 // pred_fallthru
        _
    $region6: #{tfconvnet_forward.1} parent=1 // loop_footer
      %s24 = sadd.s32 1, %s20
    $region7: #{tfconvnet_forward.1} parent=1 // loop_footer_branch
      %19 = sbr.rel target = $region3
    $region8: #{tfconvnet_forward.1} parent=1 // loop_exit
      _
    %5992 = vsyncpa [#allocation7], 1
    %s5993 = scalar_lea.sflag [#allocation7], 1
    %5994 = vsyncpa %s5993, 1

</llo_original>
